<compile_context>
chip_gen: v6e
topology: v6e:2x2x1
jax: 0.10.0
libtpu: 0.0.40
codegen_flags: <defaults>
</compile_context>

<pallas_src>
import functools

import jax
import jax.numpy as jnp
from jax import lax
from jax.experimental import pallas as pl
from jax.experimental.pallas import tpu as pltpu


def _upconv_kernel(xm_ref, xh_ref, w_ref, b_ref, o_ref):
    """One (batch, row-tile) step of fused nearest-2x upsample + 3x3 conv.

    xm_ref: (1, TH, W+2, C)      zero-padded original-res rows [t*TH, t*TH+TH)
    xh_ref: (1, 2,  W+2, C)      2-row halo: padded rows [t*TH+TH, t*TH+TH+2)
    w_ref : (2, 2, 2, 2, C, C)   folded weights [e, f, a, b, Cin, Cout]
    b_ref : (1, C)               bias
    o_ref : (1, TH, 2, W, 2*C)   o[0, i, e, j, f*C + c] = y[2*(t*TH+i)+e, 2*j+f, c]
    """
    th = o_ref.shape[1]
    W = o_ref.shape[3]
    C = o_ref.shape[4] // 2

    # Original-resolution window (main rows + 2 halo rows): (TH+2, W+2, C).
    win = jnp.concatenate([xm_ref[0], xh_ref[0]], axis=0)

    # The 9 shifted views shared by the 4 phases, built once.  These live at the
    # ORIGINAL resolution (4x smaller than the upsampled image of the naive path).
    patch = [[win[r:r + th, c:c + W, :].reshape(th * W, C) for c in range(3)]
             for r in range(3)]

    bias = b_ref[...].astype(jnp.float32)                       # (1, C)

    for e in range(2):
        for f in range(2):
            acc = jnp.zeros((th * W, C), jnp.float32)
            for a in range(2):
                for b in range(2):
                    acc = acc + jnp.dot(
                        patch[e + a][f + b], w_ref[e, f, a, b, :, :],
                        preferred_element_type=jnp.float32)
            acc = acc + bias
            o_ref[0, :, e, :, f * C:(f + 1) * C] = (
                acc.reshape(th, W, C).astype(o_ref.dtype))


def _fold_weights(w_oihw):
    """(Cout, Cin, 3, 3) torch weight -> (2, 2, 2, 2, Cin, Cout) phase-folded weight.

    Phase (e, f) of the fused op is a 2x2 conv on the original image:
      y[2i+e, 2j+f] = sum_{a,b in {0,1}} Wfold[e,f,a,b]^T @ Xpad[i+e+a, j+f+b]
    where Wfold[e,f,a,b] sums the original 3x3 taps that land on that input pixel.
    """
    w = jnp.transpose(w_oihw, (2, 3, 1, 0)).astype(jnp.float32)   # (kh, kw, Ci, Co)

    def taps(phase, t):
        # original offsets k (0..2) contributing to 2x2 tap t of output phase `phase`
        return [k for k in range(3) if (phase + k - 1) // 2 == phase + t - 1]

    folded = []
    for e in range(2):
        f_blocks = []
        for f in range(2):
            a_blocks = []
            for a in range(2):
                b_blocks = []
                for b in range(2):
                    s = jnp.zeros(w.shape[2:], jnp.float32)       # (Ci, Co)
                    for dh in taps(e, a):
                        for dw in taps(f, b):
                            s = s + w[dh, dw]
                    b_blocks.append(s)
                a_blocks.append(jnp.stack(b_blocks, 0))
            f_blocks.append(jnp.stack(a_blocks, 0))
        folded.append(jnp.stack(f_blocks, 0))
    return jnp.stack(folded, 0)                                   # (2,2,2,2,Ci,Co)


def _pad2(s, l, itemsize=4):
    return (-(-s // 8) * 8) * (-(-l // 128) * 128) * itemsize


def _tiled_bytes(shape):
    *lead, s, l = shape
    n = 1
    for d in lead:
        n *= d
    return n * _pad2(s, l)


def _vmem_estimate(th, W, C):
    """Rough padded VMEM footprint (bytes) of one grid step incl. double buffers."""
    in_main = 2 * _tiled_bytes((th, W + 2, C))
    in_halo = 2 * _tiled_bytes((2, W + 2, C))
    wts = 2 * _tiled_bytes((2, 2, 2, 2, C, C))
    out = 2 * _tiled_bytes((th, 2, W, 2 * C))
    scratch = _tiled_bytes((th + 2, W + 2, C)) + 10 * _tiled_bytes((th * W, C))
    return in_main + in_halo + wts + out + scratch


def _pick_tile_rows(H, W, C, budget=20 << 20):
    """Largest even row tile dividing H whose footprint stays v7x-safe (<~20 MiB)."""
    best = 2
    for th in range(2, H + 1, 2):
        if H % th == 0 and _vmem_estimate(th, W, C) <= budget:
            best = th
    return best


def upsample_forward_nhwc(x_nhwc, w_oihw, bias, *, tile_rows=None):
    """Fused nearest-2x upsample + Conv2d(C, C, 3, padding=1).  NHWC in, NHWC out."""
    N, H, W, C = x_nhwc.shape
    assert H % 2 == 0, "even spatial height required"
    assert w_oihw.shape == (C, C, 3, 3) and bias.shape == (C,)

    th = _pick_tile_rows(H, W, C) if tile_rows is None else int(tile_rows)
    assert th % 2 == 0 and H % th == 0, "tile_rows must be even and divide H"

    # Only the SMALL original image is padded in HBM (no 4x upsampled intermediate).
    x_pad = jnp.pad(x_nhwc, ((0, 0), (1, 1), (1, 1), (0, 0)))     # (N, H+2, W+2, C)
    w_fold = _fold_weights(w_oihw)                                # (2,2,2,2,C,C)
    b2 = bias.reshape(1, C)

    vmem_limit = int(min(max(2 * _vmem_estimate(th, W, C), 32 << 20), 48 << 20))

    out5 = pl.pallas_call(
        _upconv_kernel,
        out_shape=jax.ShapeDtypeStruct((N, H, 2, W, 2 * C), x_nhwc.dtype),
        grid=(N, H // th),
        in_specs=[
            # main row tile of the padded original-resolution input
            pl.BlockSpec((1, th, W + 2, C), lambda n, t: (n, t, 0, 0)),
            # 2-row halo just below the tile: padded rows [(t+1)*th, (t+1)*th + 2)
            pl.BlockSpec((1, 2, W + 2, C),
                         lambda n, t: (n, (t + 1) * (th // 2), 0, 0)),
            # folded weights + bias stay resident (constant index_map)
            pl.BlockSpec((2, 2, 2, 2, C, C), lambda n, t: (0, 0, 0, 0, 0, 0)),
            pl.BlockSpec((1, C), lambda n, t: (0, 0)),
        ],
        out_specs=pl.BlockSpec((1, th, 2, W, 2 * C),
                               lambda n, t: (n, t, 0, 0, 0)),
        compiler_params=pltpu.CompilerParams(
            dimension_semantics=("parallel", "parallel"),
            vmem_limit_bytes=vmem_limit,
        ),
    )(x_pad, x_pad, w_fold, b2)

    # (N, H, 2, W, 2C) -> (N, 2H, 2W, C) is a pure row-major reshape (free).
    return out5.reshape(N, 2 * H, 2 * W, C)


@functools.partial(jax.jit, static_argnames=("tile_rows",))
def upsample_forward(x_nchw, w_oihw, bias, tile_rows=None):
    """PyTorch-parity entry point: NCHW in, NCHW out (transposes only at the edges;
    the NHWC entry point above avoids the output transpose entirely)."""
    out_nhwc = upsample_forward_nhwc(
        jnp.transpose(x_nchw, (0, 2, 3, 1)), w_oihw, bias, tile_rows=tile_rows)
    return jnp.transpose(out_nhwc, (0, 3, 1, 2))


def _reference_forward(x_nchw, w_oihw, bias):
    """Pure-JAX reference: nearest x2 upsample + lax conv (matches torch)."""
    x_up = jnp.repeat(jnp.repeat(x_nchw, 2, axis=2), 2, axis=3)
    out = lax.conv_general_dilated(
        x_up, w_oihw, window_strides=(1, 1), padding=((1, 1), (1, 1)),
        dimension_numbers=("NCHW", "OIHW", "NCHW"),
    )
    return out + bias.reshape(1, -1, 1, 1)


if __name__ == "__main__":
    # Small deterministic example: N=2, dim=4, spatial 16x16 (NCHW like PyTorch).
    N, DIM, H, W = 2, 4, 16, 16

    key = jax.random.PRNGKey(0)
    kx, kw, kb = jax.random.split(key, 3)

    x = jax.random.normal(kx, (N, DIM, H, W), dtype=jnp.float32)

    fan_in = DIM * 3 * 3
    bound = 1.0 / (fan_in ** 0.5)
    w = jax.random.uniform(kw, (DIM, DIM, 3, 3), jnp.float32, -bound, bound)
    b = jax.random.uniform(kb, (DIM,), jnp.float32, -bound, bound)

    ref = _reference_forward(x, w, b)

    # Multi-row-tile path: exercises the halo BlockSpec + grid=(N, 2).
    out = jax.block_until_ready(upsample_forward(x, w, b, tile_rows=8))
    assert out.shape == (N, DIM, 2 * H, 2 * W)
    assert jnp.allclose(out, ref, atol=1e-4, rtol=1e-4)

    # Auto-picked tile (whole-height tile at this tiny size).
    out2 = jax.block_until_ready(upsample_forward(x, w, b))
    assert jnp.allclose(out2, ref, atol=1e-4, rtol=1e-4)

    print("KERNEL_OK")
</pallas_src>

<mosaic_0001>
module attributes {stable_mosaic.version = 11 : i64} {
  func.func @_upconv_kernel(%arg0: i32, %arg1: i32, %arg2: memref<1x8x18x4xf32, #tpu.memory_space<vmem>>, %arg3: memref<1x2x18x4xf32, #tpu.memory_space<vmem>>, %arg4: memref<2x2x2x2x4x4xf32, #tpu.memory_space<vmem>>, %arg5: memref<1x4xf32, #tpu.memory_space<vmem>>, %arg6: memref<1x8x2x16x8xf32, #tpu.memory_space<vmem>>) attributes {dimension_semantics = [#tpu.dimension_semantics<parallel>, #tpu.dimension_semantics<parallel>], iteration_bounds = array<i64: 2, 2>, scalar_prefetch = 0 : i64, scratch_operands = 0 : i64, tpu.core_type = #tpu.core_type<tc>, window_params = [{transform_indices = @transform_0, window_bounds = array<i64: 1, 8, 18, 4>}, {transform_indices = @transform_1, window_bounds = array<i64: 1, 2, 18, 4>}, {pipeline_mode = #tpu.pipeline_mode<synchronous>, transform_indices = @transform_2, window_bounds = array<i64: 2, 2, 2, 2, 4, 4>}, {pipeline_mode = #tpu.pipeline_mode<synchronous>, transform_indices = @transform_3, window_bounds = array<i64: 1, 4>}, {transform_indices = @transform_4, window_bounds = array<i64: 1, 8, 2, 16, 8>}]} {
    %c0 = arith.constant 0 : index
    %c0_0 = arith.constant 0 : index
    %c0_1 = arith.constant 0 : index
    %c0_2 = arith.constant 0 : index
    %0 = vector.load %arg2[%c0, %c0_0, %c0_1, %c0_2] : memref<1x8x18x4xf32, #tpu.memory_space<vmem>>, vector<1x8x18x4xf32>
    %1 = vector.shape_cast %0 : vector<1x8x18x4xf32> to vector<8x18x4xf32>
    %c0_3 = arith.constant 0 : index
    %c0_4 = arith.constant 0 : index
    %c0_5 = arith.constant 0 : index
    %c0_6 = arith.constant 0 : index
    %2 = vector.load %arg3[%c0_3, %c0_4, %c0_5, %c0_6] : memref<1x2x18x4xf32, #tpu.memory_space<vmem>>, vector<1x2x18x4xf32>
    %3 = vector.shape_cast %2 : vector<1x2x18x4xf32> to vector<2x18x4xf32>
    %4 = tpu.concatenate %1, %3 in 0 : vector<8x18x4xf32>, vector<2x18x4xf32> -> vector<10x18x4xf32>
    %5 = vector.extract_strided_slice %4 {offsets = [0, 0, 0], sizes = [8, 16, 4], strides = [1, 1, 1]} : vector<10x18x4xf32> to vector<8x16x4xf32>
    %6 = vector.shape_cast %5 : vector<8x16x4xf32> to vector<128x4xf32>
    %7 = vector.extract_strided_slice %4 {offsets = [0, 1, 0], sizes = [8, 16, 4], strides = [1, 1, 1]} : vector<10x18x4xf32> to vector<8x16x4xf32>
    %8 = vector.shape_cast %7 : vector<8x16x4xf32> to vector<128x4xf32>
    %9 = vector.extract_strided_slice %4 {offsets = [0, 2, 0], sizes = [8, 16, 4], strides = [1, 1, 1]} : vector<10x18x4xf32> to vector<8x16x4xf32>
    %10 = vector.shape_cast %9 : vector<8x16x4xf32> to vector<128x4xf32>
    %11 = vector.extract_strided_slice %4 {offsets = [1, 0, 0], sizes = [8, 16, 4], strides = [1, 1, 1]} : vector<10x18x4xf32> to vector<8x16x4xf32>
    %12 = vector.shape_cast %11 : vector<8x16x4xf32> to vector<128x4xf32>
    %13 = vector.extract_strided_slice %4 {offsets = [1, 1, 0], sizes = [8, 16, 4], strides = [1, 1, 1]} : vector<10x18x4xf32> to vector<8x16x4xf32>
    %14 = vector.shape_cast %13 : vector<8x16x4xf32> to vector<128x4xf32>
    %15 = vector.extract_strided_slice %4 {offsets = [1, 2, 0], sizes = [8, 16, 4], strides = [1, 1, 1]} : vector<10x18x4xf32> to vector<8x16x4xf32>
    %16 = vector.shape_cast %15 : vector<8x16x4xf32> to vector<128x4xf32>
    %17 = vector.extract_strided_slice %4 {offsets = [2, 0, 0], sizes = [8, 16, 4], strides = [1, 1, 1]} : vector<10x18x4xf32> to vector<8x16x4xf32>
    %18 = vector.shape_cast %17 : vector<8x16x4xf32> to vector<128x4xf32>
    %19 = vector.extract_strided_slice %4 {offsets = [2, 1, 0], sizes = [8, 16, 4], strides = [1, 1, 1]} : vector<10x18x4xf32> to vector<8x16x4xf32>
    %20 = vector.shape_cast %19 : vector<8x16x4xf32> to vector<128x4xf32>
    %21 = vector.extract_strided_slice %4 {offsets = [2, 2, 0], sizes = [8, 16, 4], strides = [1, 1, 1]} : vector<10x18x4xf32> to vector<8x16x4xf32>
    %22 = vector.shape_cast %21 : vector<8x16x4xf32> to vector<128x4xf32>
    %c0_7 = arith.constant 0 : index
    %c0_8 = arith.constant 0 : index
    %23 = vector.load %arg5[%c0_7, %c0_8] : memref<1x4xf32, #tpu.memory_space<vmem>>, vector<1x4xf32>
    %cst = arith.constant 0.000000e+00 : f32
    %24 = vector.broadcast %cst : f32 to vector<128x4xf32>
    %c0_9 = arith.constant 0 : index
    %c0_10 = arith.constant 0 : index
    %c0_11 = arith.constant 0 : index
    %c0_12 = arith.constant 0 : index
    %c0_13 = arith.constant 0 : index
    %c0_14 = arith.constant 0 : index
    %25 = vector.load %arg4[%c0_9, %c0_10, %c0_11, %c0_12, %c0_13, %c0_14] : memref<2x2x2x2x4x4xf32, #tpu.memory_space<vmem>>, vector<1x1x1x1x4x4xf32>
    %26 = vector.shape_cast %25 : vector<1x1x1x1x4x4xf32> to vector<4x4xf32>
    %cst_15 = arith.constant dense<0.000000e+00> : vector<128x4xf32>
    %27 = tpu.matmul %6, %26, %cst_15 {dimension_numbers = #tpu.dot_dimension_numbers<[1], [0], [0], [1], [0, 0, 1, 1], [], []>} : vector<128x4xf32>, vector<4x4xf32>, vector<128x4xf32> -> vector<128x4xf32>
    %28 = arith.addf %24, %27 : vector<128x4xf32>
    %c0_16 = arith.constant 0 : index
    %c0_17 = arith.constant 0 : index
    %c0_18 = arith.constant 0 : index
    %c1 = arith.constant 1 : index
    %c0_19 = arith.constant 0 : index
    %c0_20 = arith.constant 0 : index
    %29 = vector.load %arg4[%c0_16, %c0_17, %c0_18, %c1, %c0_19, %c0_20] : memref<2x2x2x2x4x4xf32, #tpu.memory_space<vmem>>, vector<1x1x1x1x4x4xf32>
    %30 = vector.shape_cast %29 : vector<1x1x1x1x4x4xf32> to vector<4x4xf32>
    %cst_21 = arith.constant dense<0.000000e+00> : vector<128x4xf32>
    %31 = tpu.matmul %8, %30, %cst_21 {dimension_numbers = #tpu.dot_dimension_numbers<[1], [0], [0], [1], [0, 0, 1, 1], [], []>} : vector<128x4xf32>, vector<4x4xf32>, vector<128x4xf32> -> vector<128x4xf32>
    %32 = arith.addf %28, %31 : vector<128x4xf32>
    %c0_22 = arith.constant 0 : index
    %c0_23 = arith.constant 0 : index
    %c1_24 = arith.constant 1 : index
    %c0_25 = arith.constant 0 : index
    %c0_26 = arith.constant 0 : index
    %c0_27 = arith.constant 0 : index
    %33 = vector.load %arg4[%c0_22, %c0_23, %c1_24, %c0_25, %c0_26, %c0_27] : memref<2x2x2x2x4x4xf32, #tpu.memory_space<vmem>>, vector<1x1x1x1x4x4xf32>
    %34 = vector.shape_cast %33 : vector<1x1x1x1x4x4xf32> to vector<4x4xf32>
    %cst_28 = arith.constant dense<0.000000e+00> : vector<128x4xf32>
    %35 = tpu.matmul %12, %34, %cst_28 {dimension_numbers = #tpu.dot_dimension_numbers<[1], [0], [0], [1], [0, 0, 1, 1], [], []>} : vector<128x4xf32>, vector<4x4xf32>, vector<128x4xf32> -> vector<128x4xf32>
    %36 = arith.addf %32, %35 : vector<128x4xf32>
    %c0_29 = arith.constant 0 : index
    %c0_30 = arith.constant 0 : index
    %c1_31 = arith.constant 1 : index
    %c1_32 = arith.constant 1 : index
    %c0_33 = arith.constant 0 : index
    %c0_34 = arith.constant 0 : index
    %37 = vector.load %arg4[%c0_29, %c0_30, %c1_31, %c1_32, %c0_33, %c0_34] : memref<2x2x2x2x4x4xf32, #tpu.memory_space<vmem>>, vector<1x1x1x1x4x4xf32>
    %38 = vector.shape_cast %37 : vector<1x1x1x1x4x4xf32> to vector<4x4xf32>
    %cst_35 = arith.constant dense<0.000000e+00> : vector<128x4xf32>
    %39 = tpu.matmul %14, %38, %cst_35 {dimension_numbers = #tpu.dot_dimension_numbers<[1], [0], [0], [1], [0, 0, 1, 1], [], []>} : vector<128x4xf32>, vector<4x4xf32>, vector<128x4xf32> -> vector<128x4xf32>
    %40 = arith.addf %36, %39 : vector<128x4xf32>
    %41 = vector.broadcast %23 : vector<1x4xf32> to vector<128x4xf32>
    %42 = arith.addf %40, %41 : vector<128x4xf32>
    %43 = vector.shape_cast %42 : vector<128x4xf32> to vector<8x16x4xf32>
    %c0_36 = arith.constant 0 : index
    %c0_37 = arith.constant 0 : index
    %c0_38 = arith.constant 0 : index
    %c0_39 = arith.constant 0 : index
    %c0_40 = arith.constant 0 : index
    %44 = vector.load %arg6[%c0_36, %c0_37, %c0_38, %c0_39, %c0_40] : memref<1x8x2x16x8xf32, #tpu.memory_space<vmem>>, vector<1x8x1x16x4xf32>
    %45 = vector.shape_cast %44 : vector<1x8x1x16x4xf32> to vector<8x16x4xf32>
    %46 = vector.shape_cast %43 : vector<8x16x4xf32> to vector<1x8x1x16x4xf32>
    tpu.vector_store %arg6[%c0_36, %c0_37, %c0_38, %c0_39, %c0_40], %46 {strides = array<i32>} : memref<1x8x2x16x8xf32, #tpu.memory_space<vmem>>, vector<1x8x1x16x4xf32>,
    %cst_41 = arith.constant 0.000000e+00 : f32
    %47 = vector.broadcast %cst_41 : f32 to vector<128x4xf32>
    %c0_42 = arith.constant 0 : index
    %c1_43 = arith.constant 1 : index
    %c0_44 = arith.constant 0 : index
    %c0_45 = arith.constant 0 : index
    %c0_46 = arith.constant 0 : index
    %c0_47 = arith.constant 0 : index
    %48 = vector.load %arg4[%c0_42, %c1_43, %c0_44, %c0_45, %c0_46, %c0_47] : memref<2x2x2x2x4x4xf32, #tpu.memory_space<vmem>>, vector<1x1x1x1x4x4xf32>
    %49 = vector.shape_cast %48 : vector<1x1x1x1x4x4xf32> to vector<4x4xf32>
    %cst_48 = arith.constant dense<0.000000e+00> : vector<128x4xf32>
    %50 = tpu.matmul %8, %49, %cst_48 {dimension_numbers = #tpu.dot_dimension_numbers<[1], [0], [0], [1], [0, 0, 1, 1], [], []>} : vector<128x4xf32>, vector<4x4xf32>, vector<128x4xf32> -> vector<128x4xf32>
    %51 = arith.addf %47, %50 : vector<128x4xf32>
    %c0_49 = arith.constant 0 : index
    %c1_50 = arith.constant 1 : index
    %c0_51 = arith.constant 0 : index
    %c1_52 = arith.constant 1 : index
    %c0_53 = arith.constant 0 : index
    %c0_54 = arith.constant 0 : index
    %52 = vector.load %arg4[%c0_49, %c1_50, %c0_51, %c1_52, %c0_53, %c0_54] : memref<2x2x2x2x4x4xf32, #tpu.memory_space<vmem>>, vector<1x1x1x1x4x4xf32>
    %53 = vector.shape_cast %52 : vector<1x1x1x1x4x4xf32> to vector<4x4xf32>
    %cst_55 = arith.constant dense<0.000000e+00> : vector<128x4xf32>
    %54 = tpu.matmul %10, %53, %cst_55 {dimension_numbers = #tpu.dot_dimension_numbers<[1], [0], [0], [1], [0, 0, 1, 1], [], []>} : vector<128x4xf32>, vector<4x4xf32>, vector<128x4xf32> -> vector<128x4xf32>
    %55 = arith.addf %51, %54 : vector<128x4xf32>
    %c0_56 = arith.constant 0 : index
    %c1_57 = arith.constant 1 : index
    %c1_58 = arith.constant 1 : index
    %c0_59 = arith.constant 0 : index
    %c0_60 = arith.constant 0 : index
    %c0_61 = arith.constant 0 : index
    %56 = vector.load %arg4[%c0_56, %c1_57, %c1_58, %c0_59, %c0_60, %c0_61] : memref<2x2x2x2x4x4xf32, #tpu.memory_space<vmem>>, vector<1x1x1x1x4x4xf32>
    %57 = vector.shape_cast %56 : vector<1x1x1x1x4x4xf32> to vector<4x4xf32>
    %cst_62 = arith.constant dense<0.000000e+00> : vector<128x4xf32>
    %58 = tpu.matmul %14, %57, %cst_62 {dimension_numbers = #tpu.dot_dimension_numbers<[1], [0], [0], [1], [0, 0, 1, 1], [], []>} : vector<128x4xf32>, vector<4x4xf32>, vector<128x4xf32> -> vector<128x4xf32>
    %59 = arith.addf %55, %58 : vector<128x4xf32>
    %c0_63 = arith.constant 0 : index
    %c1_64 = arith.constant 1 : index
    %c1_65 = arith.constant 1 : index
    %c1_66 = arith.constant 1 : index
    %c0_67 = arith.constant 0 : index
    %c0_68 = arith.constant 0 : index
    %60 = vector.load %arg4[%c0_63, %c1_64, %c1_65, %c1_66, %c0_67, %c0_68] : memref<2x2x2x2x4x4xf32, #tpu.memory_space<vmem>>, vector<1x1x1x1x4x4xf32>
    %61 = vector.shape_cast %60 : vector<1x1x1x1x4x4xf32> to vector<4x4xf32>
    %cst_69 = arith.constant dense<0.000000e+00> : vector<128x4xf32>
    %62 = tpu.matmul %16, %61, %cst_69 {dimension_numbers = #tpu.dot_dimension_numbers<[1], [0], [0], [1], [0, 0, 1, 1], [], []>} : vector<128x4xf32>, vector<4x4xf32>, vector<128x4xf32> -> vector<128x4xf32>
    %63 = arith.addf %59, %62 : vector<128x4xf32>
    %64 = vector.broadcast %23 : vector<1x4xf32> to vector<128x4xf32>
    %65 = arith.addf %63, %64 : vector<128x4xf32>
    %66 = vector.shape_cast %65 : vector<128x4xf32> to vector<8x16x4xf32>
    %c0_70 = arith.constant 0 : index
    %c0_71 = arith.constant 0 : index
    %c0_72 = arith.constant 0 : index
    %c0_73 = arith.constant 0 : index
    %c4 = arith.constant 4 : index
    %67 = vector.load %arg6[%c0_70, %c0_71, %c0_72, %c0_73, %c4] : memref<1x8x2x16x8xf32, #tpu.memory_space<vmem>>, vector<1x8x1x16x4xf32>
    %68 = vector.shape_cast %67 : vector<1x8x1x16x4xf32> to vector<8x16x4xf32>
    %69 = vector.shape_cast %66 : vector<8x16x4xf32> to vector<1x8x1x16x4xf32>
    tpu.vector_store %arg6[%c0_70, %c0_71, %c0_72, %c0_73, %c4], %69 {strides = array<i32>} : memref<1x8x2x16x8xf32, #tpu.memory_space<vmem>>, vector<1x8x1x16x4xf32>,
    %cst_74 = arith.constant 0.000000e+00 : f32
    %70 = vector.broadcast %cst_74 : f32 to vector<128x4xf32>
    %c1_75 = arith.constant 1 : index
    %c0_76 = arith.constant 0 : index
    %c0_77 = arith.constant 0 : index
    %c0_78 = arith.constant 0 : index
    %c0_79 = arith.constant 0 : index
    %c0_80 = arith.constant 0 : index
    %71 = vector.load %arg4[%c1_75, %c0_76, %c0_77, %c0_78, %c0_79, %c0_80] : memref<2x2x2x2x4x4xf32, #tpu.memory_space<vmem>>, vector<1x1x1x1x4x4xf32>
    %72 = vector.shape_cast %71 : vector<1x1x1x1x4x4xf32> to vector<4x4xf32>
    %cst_81 = arith.constant dense<0.000000e+00> : vector<128x4xf32>
    %73 = tpu.matmul %12, %72, %cst_81 {dimension_numbers = #tpu.dot_dimension_numbers<[1], [0], [0], [1], [0, 0, 1, 1], [], []>} : vector<128x4xf32>, vector<4x4xf32>, vector<128x4xf32> -> vector<128x4xf32>
    %74 = arith.addf %70, %73 : vector<128x4xf32>
    %c1_82 = arith.constant 1 : index
    %c0_83 = arith.constant 0 : index
    %c0_84 = arith.constant 0 : index
    %c1_85 = arith.constant 1 : index
    %c0_86 = arith.constant 0 : index
    %c0_87 = arith.constant 0 : index
    %75 = vector.load %arg4[%c1_82, %c0_83, %c0_84, %c1_85, %c0_86, %c0_87] : memref<2x2x2x2x4x4xf32, #tpu.memory_space<vmem>>, vector<1x1x1x1x4x4xf32>
    %76 = vector.shape_cast %75 : vector<1x1x1x1x4x4xf32> to vector<4x4xf32>
    %cst_88 = arith.constant dense<0.000000e+00> : vector<128x4xf32>
    %77 = tpu.matmul %14, %76, %cst_88 {dimension_numbers = #tpu.dot_dimension_numbers<[1], [0], [0], [1], [0, 0, 1, 1], [], []>} : vector<128x4xf32>, vector<4x4xf32>, vector<128x4xf32> -> vector<128x4xf32>
    %78 = arith.addf %74, %77 : vector<128x4xf32>
    %c1_89 = arith.constant 1 : index
    %c0_90 = arith.constant 0 : index
    %c1_91 = arith.constant 1 : index
    %c0_92 = arith.constant 0 : index
    %c0_93 = arith.constant 0 : index
    %c0_94 = arith.constant 0 : index
    %79 = vector.load %arg4[%c1_89, %c0_90, %c1_91, %c0_92, %c0_93, %c0_94] : memref<2x2x2x2x4x4xf32, #tpu.memory_space<vmem>>, vector<1x1x1x1x4x4xf32>
    %80 = vector.shape_cast %79 : vector<1x1x1x1x4x4xf32> to vector<4x4xf32>
    %cst_95 = arith.constant dense<0.000000e+00> : vector<128x4xf32>
    %81 = tpu.matmul %18, %80, %cst_95 {dimension_numbers = #tpu.dot_dimension_numbers<[1], [0], [0], [1], [0, 0, 1, 1], [], []>} : vector<128x4xf32>, vector<4x4xf32>, vector<128x4xf32> -> vector<128x4xf32>
    %82 = arith.addf %78, %81 : vector<128x4xf32>
    %c1_96 = arith.constant 1 : index
    %c0_97 = arith.constant 0 : index
    %c1_98 = arith.constant 1 : index
    %c1_99 = arith.constant 1 : index
    %c0_100 = arith.constant 0 : index
    %c0_101 = arith.constant 0 : index
    %83 = vector.load %arg4[%c1_96, %c0_97, %c1_98, %c1_99, %c0_100, %c0_101] : memref<2x2x2x2x4x4xf32, #tpu.memory_space<vmem>>, vector<1x1x1x1x4x4xf32>
    %84 = vector.shape_cast %83 : vector<1x1x1x1x4x4xf32> to vector<4x4xf32>
    %cst_102 = arith.constant dense<0.000000e+00> : vector<128x4xf32>
    %85 = tpu.matmul %20, %84, %cst_102 {dimension_numbers = #tpu.dot_dimension_numbers<[1], [0], [0], [1], [0, 0, 1, 1], [], []>} : vector<128x4xf32>, vector<4x4xf32>, vector<128x4xf32> -> vector<128x4xf32>
    %86 = arith.addf %82, %85 : vector<128x4xf32>
    %87 = vector.broadcast %23 : vector<1x4xf32> to vector<128x4xf32>
    %88 = arith.addf %86, %87 : vector<128x4xf32>
    %89 = vector.shape_cast %88 : vector<128x4xf32> to vector<8x16x4xf32>
    %c0_103 = arith.constant 0 : index
    %c0_104 = arith.constant 0 : index
    %c1_105 = arith.constant 1 : index
    %c0_106 = arith.constant 0 : index
    %c0_107 = arith.constant 0 : index
    %90 = vector.load %arg6[%c0_103, %c0_104, %c1_105, %c0_106, %c0_107] : memref<1x8x2x16x8xf32, #tpu.memory_space<vmem>>, vector<1x8x1x16x4xf32>
    %91 = vector.shape_cast %90 : vector<1x8x1x16x4xf32> to vector<8x16x4xf32>
    %92 = vector.shape_cast %89 : vector<8x16x4xf32> to vector<1x8x1x16x4xf32>
    tpu.vector_store %arg6[%c0_103, %c0_104, %c1_105, %c0_106, %c0_107], %92 {strides = array<i32>} : memref<1x8x2x16x8xf32, #tpu.memory_space<vmem>>, vector<1x8x1x16x4xf32>,
    %cst_108 = arith.constant 0.000000e+00 : f32
    %93 = vector.broadcast %cst_108 : f32 to vector<128x4xf32>
    %c1_109 = arith.constant 1 : index
    %c1_110 = arith.constant 1 : index
    %c0_111 = arith.constant 0 : index
    %c0_112 = arith.constant 0 : index
    %c0_113 = arith.constant 0 : index
    %c0_114 = arith.constant 0 : index
    %94 = vector.load %arg4[%c1_109, %c1_110, %c0_111, %c0_112, %c0_113, %c0_114] : memref<2x2x2x2x4x4xf32, #tpu.memory_space<vmem>>, vector<1x1x1x1x4x4xf32>
    %95 = vector.shape_cast %94 : vector<1x1x1x1x4x4xf32> to vector<4x4xf32>
    %cst_115 = arith.constant dense<0.000000e+00> : vector<128x4xf32>
    %96 = tpu.matmul %14, %95, %cst_115 {dimension_numbers = #tpu.dot_dimension_numbers<[1], [0], [0], [1], [0, 0, 1, 1], [], []>} : vector<128x4xf32>, vector<4x4xf32>, vector<128x4xf32> -> vector<128x4xf32>
    %97 = arith.addf %93, %96 : vector<128x4xf32>
    %c1_116 = arith.constant 1 : index
    %c1_117 = arith.constant 1 : index
    %c0_118 = arith.constant 0 : index
    %c1_119 = arith.constant 1 : index
    %c0_120 = arith.constant 0 : index
    %c0_121 = arith.constant 0 : index
    %98 = vector.load %arg4[%c1_116, %c1_117, %c0_118, %c1_119, %c0_120, %c0_121] : memref<2x2x2x2x4x4xf32, #tpu.memory_space<vmem>>, vector<1x1x1x1x4x4xf32>
    %99 = vector.shape_cast %98 : vector<1x1x1x1x4x4xf32> to vector<4x4xf32>
    %cst_122 = arith.constant dense<0.000000e+00> : vector<128x4xf32>
    %100 = tpu.matmul %16, %99, %cst_122 {dimension_numbers = #tpu.dot_dimension_numbers<[1], [0], [0], [1], [0, 0, 1, 1], [], []>} : vector<128x4xf32>, vector<4x4xf32>, vector<128x4xf32> -> vector<128x4xf32>
    %101 = arith.addf %97, %100 : vector<128x4xf32>
    %c1_123 = arith.constant 1 : index
    %c1_124 = arith.constant 1 : index
    %c1_125 = arith.constant 1 : index
    %c0_126 = arith.constant 0 : index
    %c0_127 = arith.constant 0 : index
    %c0_128 = arith.constant 0 : index
    %102 = vector.load %arg4[%c1_123, %c1_124, %c1_125, %c0_126, %c0_127, %c0_128] : memref<2x2x2x2x4x4xf32, #tpu.memory_space<vmem>>, vector<1x1x1x1x4x4xf32>
    %103 = vector.shape_cast %102 : vector<1x1x1x1x4x4xf32> to vector<4x4xf32>
    %cst_129 = arith.constant dense<0.000000e+00> : vector<128x4xf32>
    %104 = tpu.matmul %20, %103, %cst_129 {dimension_numbers = #tpu.dot_dimension_numbers<[1], [0], [0], [1], [0, 0, 1, 1], [], []>} : vector<128x4xf32>, vector<4x4xf32>, vector<128x4xf32> -> vector<128x4xf32>
    %105 = arith.addf %101, %104 : vector<128x4xf32>
    %c1_130 = arith.constant 1 : index
    %c1_131 = arith.constant 1 : index
    %c1_132 = arith.constant 1 : index
    %c1_133 = arith.constant 1 : index
    %c0_134 = arith.constant 0 : index
    %c0_135 = arith.constant 0 : index
    %106 = vector.load %arg4[%c1_130, %c1_131, %c1_132, %c1_133, %c0_134, %c0_135] : memref<2x2x2x2x4x4xf32, #tpu.memory_space<vmem>>, vector<1x1x1x1x4x4xf32>
    %107 = vector.shape_cast %106 : vector<1x1x1x1x4x4xf32> to vector<4x4xf32>
    %cst_136 = arith.constant dense<0.000000e+00> : vector<128x4xf32>
    %108 = tpu.matmul %22, %107, %cst_136 {dimension_numbers = #tpu.dot_dimension_numbers<[1], [0], [0], [1], [0, 0, 1, 1], [], []>} : vector<128x4xf32>, vector<4x4xf32>, vector<128x4xf32> -> vector<128x4xf32>
    %109 = arith.addf %105, %108 : vector<128x4xf32>
    %110 = vector.broadcast %23 : vector<1x4xf32> to vector<128x4xf32>
    %111 = arith.addf %109, %110 : vector<128x4xf32>
    %112 = vector.shape_cast %111 : vector<128x4xf32> to vector<8x16x4xf32>
    %c0_137 = arith.constant 0 : index
    %c0_138 = arith.constant 0 : index
    %c1_139 = arith.constant 1 : index
    %c0_140 = arith.constant 0 : index
    %c4_141 = arith.constant 4 : index
    %113 = vector.load %arg6[%c0_137, %c0_138, %c1_139, %c0_140, %c4_141] : memref<1x8x2x16x8xf32, #tpu.memory_space<vmem>>, vector<1x8x1x16x4xf32>
    %114 = vector.shape_cast %113 : vector<1x8x1x16x4xf32> to vector<8x16x4xf32>
    %115 = vector.shape_cast %112 : vector<8x16x4xf32> to vector<1x8x1x16x4xf32>
    tpu.vector_store %arg6[%c0_137, %c0_138, %c1_139, %c0_140, %c4_141], %115 {strides = array<i32>} : memref<1x8x2x16x8xf32, #tpu.memory_space<vmem>>, vector<1x8x1x16x4xf32>,
    return
  }
  func.func @transform_0(%arg0: i32, %arg1: i32) -> (i32, i32, i32, i32) {
    %c0_i32 = arith.constant 0 : i32
    %c0_i32_0 = arith.constant 0 : i32
    %c0_i32_1 = arith.constant 0 : i32
    return %arg0, %arg1, %c0_i32, %c0_i32_0 : i32, i32, i32, i32
  }
  func.func @transform_1(%arg0: i32, %arg1: i32) -> (i32, i32, i32, i32) {
    %c1_i32 = arith.constant 1 : i32
    %0 = arith.addi %arg1, %c1_i32 : i32
    %c4_i32 = arith.constant 4 : i32
    %1 = arith.muli %0, %c4_i32 : i32
    %c0_i32 = arith.constant 0 : i32
    %c0_i32_0 = arith.constant 0 : i32
    %c0_i32_1 = arith.constant 0 : i32
    return %arg0, %1, %c0_i32, %c0_i32_0 : i32, i32, i32, i32
  }
  func.func @transform_2(%arg0: i32, %arg1: i32) -> (i32, i32, i32, i32, i32, i32) {
    %c0_i32 = arith.constant 0 : i32
    %c0_i32_0 = arith.constant 0 : i32
    %c0_i32_1 = arith.constant 0 : i32
    %c0_i32_2 = arith.constant 0 : i32
    %c0_i32_3 = arith.constant 0 : i32
    %c0_i32_4 = arith.constant 0 : i32
    %c0_i32_5 = arith.constant 0 : i32
    return %c0_i32, %c0_i32_0, %c0_i32_1, %c0_i32_2, %c0_i32_3, %c0_i32_4 : i32, i32, i32, i32, i32, i32
  }
  func.func @transform_3(%arg0: i32, %arg1: i32) -> (i32, i32) {
    %c0_i32 = arith.constant 0 : i32
    %c0_i32_0 = arith.constant 0 : i32
    %c0_i32_1 = arith.constant 0 : i32
    return %c0_i32, %c0_i32_0 : i32, i32
  }
  func.func @transform_4(%arg0: i32, %arg1: i32) -> (i32, i32, i32, i32, i32) {
    %c0_i32 = arith.constant 0 : i32
    %c0_i32_0 = arith.constant 0 : i32
    %c0_i32_1 = arith.constant 0 : i32
    %c0_i32_2 = arith.constant 0 : i32
    return %arg0, %arg1, %c0_i32, %c0_i32_0, %c0_i32_1 : i32, i32, i32, i32, i32
  }
}

</mosaic_0001>

<llo_original>
// kernel: upsample_forward.1
$region0: #{upsample_forward.1}
  #allocation0 [shape = 'u32[]', space=smem, size = 0x4, offset = 0x4, fixed_abs, tag = 'smem constant byte address 0x4 - core index']
  #allocation1 [shape = 'u32[144,128]{1,0:T(1,128)}', space=vmem, size = 0x12000, scoped, tag = 'internal scratch']
  %s0 = inlined_call_operand.vmem [shape: f32[2,18,18,4], index: 0, kind: input, shape index: {}, may-alias: {0,1}]
  %s1 = inlined_call_operand.vmem [shape: f32[2,18,18,4], index: 1, kind: input, shape index: {}, may-alias: {0,1}]
  %s2 = inlined_call_operand.vmem [shape: f32[2,2,2,2,4,4], index: 2, kind: input, shape index: {}]
  %s3 = inlined_call_operand.vmem [shape: f32[1,4], index: 3, kind: input, shape index: {}]
  %s4 = inlined_call_operand.vmem [shape: f32[2,16,2,16,8], index: 4, kind: output, shape index: {}]
  %s5 = sld [smem:[#allocation0]]
  $region49: #{upsample_forward.1} parent=0
    _
  %s7 = ssub.s32 1, %s5
  %s8 = scalar_select 0, %s7, %s5
  loop: start=0, step=1, limit=6
  $region2: #{upsample_forward.1} parent=0 // loop_pre_header
    _
  $region3: #{upsample_forward.1} parent=0 // loop_header
    %s10 = sphi 0, %s14
    %p11 = scmp.ge.s32.totalorder %s10, 6
    %s17 = sphi 0, %s29
    %s18 = sphi 0, %s25
    %s19 = sphi 0, %s17
    %s20 = sphi 0, %s18
    %s21 = sphi 0, %s19
    %s22 = sphi 0, %s20
    %s34 = sphi 0, %s36
    %s37 = sphi 0, %s34
    %s38 = sphi 0, %s37
    %s54 = sphi 0, %s38
    %s66 = sphi 0, %s68
    %s69 = sphi 0, %s66
    %s70 = sphi 0, %s69
    %s86 = sphi 0, %s70
    %s90 = sphi 0, %s90
    %s92 = sphi 0, %s90
    %s93 = sphi 0, %s92
    %s107 = sphi 0, %s93
    %s111 = sphi 0, %s111
    %s113 = sphi 0, %s111
    %s114 = sphi 0, %s113
    %s128 = sphi 0, %s114
    %s136 = sphi 0, %s138
    %s139 = sphi 0, %s136
    %s140 = sphi 0, %s139
    %s156 = sphi 0, %s140
  $region4: #{upsample_forward.1} parent=0 // loop_header_branch
    %13 = sbr.rel (%p11) target = $region8
  $region5: #{upsample_forward.1} parent=0 // loop_body
    %s15 = ssub.s32 %s10, 1
    %s16 = ssub.s32 %s10, 2
    %s23 = sadd.s32 1, %s18
    %p24 = scmp.ge.s32.totalorder %s23, 2
    %s25 = scalar_select %p24, 0, %s23
    %s26 = sadd.s32 1, %s17
    %s27 = scalar_select %p24, %s26, %s17
    %p28 = scmp.ge.s32.totalorder %s27, 2
    %s29 = scalar_select %p28, 0, %s27
    %s30 = ssub.s32 %s17, %s29
    %s31 = ssub.s32 %s18, %s25
    %s32 = sor.u32 %s30, %s31
    %p33 = scmp.eq.s32.totalorder %s32, 0
    %s35 = sadd.s32 %s34, 1
    %s36 = scalar_select %p33, %s34, %s35
    %p39 = pneg %p33
    %p40 = scmp.eq.s32.totalorder %s10, 3
    %p41 = por %p39, %p40
    %p42 = scmp.ne.s32.totalorder %s34, %s37
    %p43 = scmp.eq.s32.totalorder %s10, 0
    %p44 = por %p42, %p43
    %p45 = scmp.ne.s32.totalorder %s34, %s37
    %p46 = scmp.eq.s32.totalorder %s15, 3
    %p47 = por %p45, %p46
    %p48 = scmp.ne.s32.totalorder %s37, %s38
    %p49 = scmp.eq.s32.totalorder %s15, 0
    %p50 = por %p48, %p49
    %p51 = scmp.ne.s32.totalorder %s37, %s38
    %p52 = scmp.eq.s32.totalorder %s16, 3
    %p53 = por %p51, %p52
    %p55 = scmp.ne.s32.totalorder %s38, %s54
    %p56 = scmp.eq.s32.totalorder %s16, 0
    %p57 = por %p55, %p56
    %s58 = sadd.s32 %s18, 1
    %s59 = smul.u32 %s58, 4
    %s60 = sadd.s32 %s25, 1
    %s61 = smul.u32 %s60, 4
    %s62 = ssub.s32 %s17, %s29
    %s63 = ssub.s32 %s59, %s61
    %s64 = sor.u32 %s62, %s63
    %p65 = scmp.eq.s32.totalorder %s64, 0
    %s67 = sadd.s32 %s66, 1
    %s68 = scalar_select %p65, %s66, %s67
    %p71 = pneg %p65
    %p72 = scmp.eq.s32.totalorder %s10, 3
    %p73 = por %p71, %p72
    %p74 = scmp.ne.s32.totalorder %s66, %s69
    %p75 = scmp.eq.s32.totalorder %s10, 0
    %p76 = por %p74, %p75
    %p77 = scmp.ne.s32.totalorder %s66, %s69
    %p78 = scmp.eq.s32.totalorder %s15, 3
    %p79 = por %p77, %p78
    %p80 = scmp.ne.s32.totalorder %s69, %s70
    %p81 = scmp.eq.s32.totalorder %s15, 0
    %p82 = por %p80, %p81
    %p83 = scmp.ne.s32.totalorder %s69, %s70
    %p84 = scmp.eq.s32.totalorder %s16, 3
    %p85 = por %p83, %p84
    %p87 = scmp.ne.s32.totalorder %s70, %s86
    %p88 = scmp.eq.s32.totalorder %s16, 0
    %p89 = por %p87, %p88
    %s91 = sadd.s32 %s90, 1
    %p94 = scmp.eq.s32.totalorder %s10, 3
    %p95 = scmp.ne.s32.totalorder %s90, %s92
    %p96 = scmp.eq.s32.totalorder %s10, 0
    %p97 = por %p95, %p96
    %p98 = scmp.ne.s32.totalorder %s90, %s92
    %p99 = scmp.eq.s32.totalorder %s15, 3
    %p100 = por %p98, %p99
    %p101 = scmp.ne.s32.totalorder %s92, %s93
    %p102 = scmp.eq.s32.totalorder %s15, 0
    %p103 = por %p101, %p102
    %p104 = scmp.ne.s32.totalorder %s92, %s93
    %p105 = scmp.eq.s32.totalorder %s16, 3
    %p106 = por %p104, %p105
    %p108 = scmp.ne.s32.totalorder %s93, %s107
    %p109 = scmp.eq.s32.totalorder %s16, 0
    %p110 = por %p108, %p109
    %s112 = sadd.s32 %s111, 1
    %p115 = scmp.eq.s32.totalorder %s10, 3
    %p116 = scmp.ne.s32.totalorder %s111, %s113
    %p117 = scmp.eq.s32.totalorder %s10, 0
    %p118 = por %p116, %p117
    %p119 = scmp.ne.s32.totalorder %s111, %s113
    %p120 = scmp.eq.s32.totalorder %s15, 3
    %p121 = por %p119, %p120
    %p122 = scmp.ne.s32.totalorder %s113, %s114
    %p123 = scmp.eq.s32.totalorder %s15, 0
    %p124 = por %p122, %p123
    %p125 = scmp.ne.s32.totalorder %s113, %s114
    %p126 = scmp.eq.s32.totalorder %s16, 3
    %p127 = por %p125, %p126
    %p129 = scmp.ne.s32.totalorder %s114, %s128
    %p130 = scmp.eq.s32.totalorder %s16, 0
    %p131 = por %p129, %p130
    %s132 = ssub.s32 %s17, %s29
    %s133 = ssub.s32 %s18, %s25
    %s134 = sor.u32 %s132, %s133
    %p135 = scmp.eq.s32.totalorder %s134, 0
    %s137 = sadd.s32 %s136, 1
    %s138 = scalar_select %p135, %s136, %s137
    %p141 = pneg %p135
    %p142 = scmp.eq.s32.totalorder %s10, 3
    %p143 = por %p141, %p142
    %p144 = scmp.ne.s32.totalorder %s136, %s139
    %p145 = scmp.eq.s32.totalorder %s10, 0
    %p146 = por %p144, %p145
    %p147 = scmp.ne.s32.totalorder %s136, %s139
    %p148 = scmp.eq.s32.totalorder %s15, 3
    %p149 = por %p147, %p148
    %p150 = scmp.ne.s32.totalorder %s139, %s140
    %p151 = scmp.eq.s32.totalorder %s15, 0
    %p152 = por %p150, %p151
    %p153 = scmp.ne.s32.totalorder %s139, %s140
    %p154 = scmp.eq.s32.totalorder %s16, 3
    %p155 = por %p153, %p154
    %p157 = scmp.ne.s32.totalorder %s140, %s156
    %p158 = scmp.eq.s32.totalorder %s16, 0
    %p159 = por %p157, %p158
    %p160 = scmp.le.s32.totalorder 1, %s10
    %p161 = scmp.lt.s32.totalorder %s10, 5
    %p162 = pnand %p160, %p161
    %p163 = pneg %p162
    // Predicated region
    $region9: #{upsample_forward.1} parent=5 // pred_check
      _
    $region10: #{upsample_forward.1} parent=5 // pred_check_branch
      %165 = sbr.rel (%p162) target = $region12
    $region11: #{upsample_forward.1} parent=5 // pred_region
      %s166 = ssub.s32 %s10, 1
      // Predicated region
      $region13: #{upsample_forward.1} parent=11 // pred_check
        %p167 = pneg %p103
      $region14: #{upsample_forward.1} parent=11 // pred_check_branch
        %169 = sbr.rel (%p167) target = $region16
      $region15: #{upsample_forward.1} parent=11 // pred_region
        _
      $region16: #{upsample_forward.1} parent=11 // pred_fallthru
        _
      // Predicated region
      $region17: #{upsample_forward.1} parent=11 // pred_check
        %p170 = pneg %p124
      $region18: #{upsample_forward.1} parent=11 // pred_check_branch
        %172 = sbr.rel (%p170) target = $region20
      $region19: #{upsample_forward.1} parent=11 // pred_region
        _
      $region20: #{upsample_forward.1} parent=11 // pred_fallthru
        _
    $region12: #{upsample_forward.1} parent=5 // pred_fallthru
      _
    %p173 = scmp.lt.s32.totalorder %s10, 4
    // Predicated region
    $region21: #{upsample_forward.1} parent=5 // pred_check
      %p174 = pneg %p173
    $region22: #{upsample_forward.1} parent=5 // pred_check_branch
      %176 = sbr.rel (%p174) target = $region24
    $region23: #{upsample_forward.1} parent=5 // pred_region
      // Predicated region
      $region25: #{upsample_forward.1} parent=23 // pred_check
        %p177 = pneg %p44
      $region26: #{upsample_forward.1} parent=23 // pred_check_branch
        %179 = sbr.rel (%p177) target = $region28
      $region27: #{upsample_forward.1} parent=23 // pred_region
        %s180 = smul.u32 8, %s18
        %s181 = ssub.s32 18, %s180
        %p182 = scmp.lt.s32.totalorder %s181, 8
        %s183 = scalar_select %p182, %s181, 8
        %s184 = smul.u32 128, %s183
        %s185 = smul.u32 %s184, 3
        %p186 = scmp.lt.s32.totalorder %s17, 1
        %s187 = scalar_select %p186, %s17, 1
        %p188 = scmp.lt.s32.totalorder %s180, 17
        %s189 = scalar_select %p188, %s180, 17
        %s190 = smul.addr %s189, 3
        %s191 = smul.addr %s187, 54
        %s192 = sadd.s32 %s190, %s191
        %s193 = smul.addr %s192, 8
        %s194 = scalar_lea.vmem %s0, %s193
        %s195 = smul.u32 8, %s18
        %s196 = ssub.s32 18, %s195
        %p197 = scmp.lt.s32.totalorder %s196, 8
        %s198 = scalar_select %p197, %s196, 8
        %s199 = smul.u32 128, %s198
        %s200 = smul.u32 %s199, 3
      $region28: #{upsample_forward.1} parent=23 // pred_fallthru
        _
      // Predicated region
      $region29: #{upsample_forward.1} parent=23 // pred_check
        %p201 = pneg %p76
      $region30: #{upsample_forward.1} parent=23 // pred_check_branch
        %203 = sbr.rel (%p201) target = $region32
      $region31: #{upsample_forward.1} parent=23 // pred_region
        %s204 = sadd.s32 %s18, 1
        %s205 = smul.u32 %s204, 4
        %s206 = smul.u32 2, %s205
        %p207 = scmp.lt.s32.totalorder %s17, 1
        %s208 = scalar_select %p207, %s17, 1
        %p209 = scmp.lt.s32.totalorder %s206, 17
        %s210 = scalar_select %p209, %s206, 17
        %s211 = smul.addr %s210, 3
        %s212 = smul.addr %s208, 54
        %s213 = sadd.s32 %s211, %s212
        %s214 = smul.addr %s213, 8
        %s215 = scalar_lea.vmem %s1, %s214
        %s216 = sadd.s32 %s18, 1
        %s217 = smul.u32 %s216, 4
        %s218 = smul.u32 2, %s217
      $region32: #{upsample_forward.1} parent=23 // pred_fallthru
        _
    $region24: #{upsample_forward.1} parent=5 // pred_fallthru
      _
    %p219 = scmp.le.s32.totalorder 1, %s10
    %p220 = scmp.lt.s32.totalorder %s10, 5
    %p221 = pnand %p219, %p220
    %p222 = pneg %p221
    // Predicated region
    $region33: #{upsample_forward.1} parent=5 // pred_check
      _
    $region34: #{upsample_forward.1} parent=5 // pred_check_branch
      %224 = sbr.rel (%p221) target = $region36
    $region35: #{upsample_forward.1} parent=5 // pred_region
      %s225 = ssub.s32 %s10, 1
      %s226 = smul.u32 8, %s20
      %s227 = ssub.s32 18, %s226
      %p228 = scmp.lt.s32.totalorder %s227, 8
      %s229 = scalar_select %p228, %s227, 8
      %s230 = smul.u32 128, %s229
      %s231 = smul.u32 %s230, 3
      %p232 = scmp.lt.s32.totalorder %s19, 1
      %s233 = scalar_select %p232, %s19, 1
      %p234 = scmp.lt.s32.totalorder %s226, 17
      %s235 = scalar_select %p234, %s226, 17
      %s236 = smul.addr %s235, 3
      %s237 = smul.addr %s233, 54
      %s238 = sadd.s32 %s236, %s237
      %s239 = smul.addr %s238, 8
      %s240 = scalar_lea.vmem %s0, %s239
      %p241 = pneg %p50
      %p242 = pneg %p47
      %s243 = sadd.s32 %s20, 1
      %s244 = smul.u32 %s243, 4
      %s245 = smul.u32 2, %s244
      %p246 = scmp.lt.s32.totalorder %s19, 1
      %s247 = scalar_select %p246, %s19, 1
      %p248 = scmp.lt.s32.totalorder %s245, 17
      %s249 = scalar_select %p248, %s245, 17
      %s250 = smul.addr %s249, 3
      %s251 = smul.addr %s247, 54
      %s252 = sadd.s32 %s250, %s251
      %s253 = smul.addr %s252, 8
      %s254 = scalar_lea.vmem %s1, %s253
      %p255 = pneg %p82
      %p256 = pneg %p79
      %p257 = pneg %p103
      %p258 = pneg %p100
      %p259 = pneg %p124
      %p260 = pneg %p121
      %p261 = pneg %p152
      %p262 = pneg %p149
      %s263 = smul.u32 8, %s20
      %p264 = scmp.lt.s32.totalorder %s19, 1
      %s265 = scalar_select %p264, %s19, 1
      %p266 = scmp.lt.s32.totalorder %s263, 15
      %s267 = scalar_select %p266, %s263, 15
      %s268 = smul.addr %s267, 4
      %s269 = smul.addr %s265, 64
      %s270 = sadd.s32 %s268, %s269
      %s271 = smul.addr %s270, 8
      %s272 = scalar_lea.vmem %s4, %s271
      %s273 = smul.u32 8, %s20
      %s274 = ssub.s32 18, %s273
      %p275 = scmp.lt.s32.totalorder %s274, 8
      %s276 = scalar_select %p275, %s274, 8
      %s277 = smul.u32 128, %s276
      %s278 = smul.u32 %s277, 3
      %p279 = scmp.lt.s32.totalorder %s19, 1
      %s280 = scalar_select %p279, %s19, 1
      %p281 = scmp.lt.s32.totalorder %s273, 17
      %s282 = scalar_select %p281, %s273, 17
      %s283 = smul.addr %s282, 3
      %s284 = smul.addr %s280, 54
      %s285 = sadd.s32 %s283, %s284
      %s286 = smul.addr %s285, 8
      %s287 = scalar_lea.vmem %s0, %s286
      %s288 = smul.u32 8, %s20
      %s289 = ssub.s32 18, %s288
      %p290 = scmp.lt.s32.totalorder %s289, 8
      %s291 = scalar_select %p290, %s289, 8
      %s292 = smul.u32 128, %s291
      %s293 = smul.u32 %s292, 3
      %s294 = sadd.s32 %s20, 1
      %s295 = smul.u32 %s294, 4
      %s296 = smul.u32 2, %s295
      %p297 = scmp.lt.s32.totalorder %s19, 1
      %s298 = scalar_select %p297, %s19, 1
      %p299 = scmp.lt.s32.totalorder %s296, 17
      %s300 = scalar_select %p299, %s296, 17
      %s301 = smul.addr %s300, 3
      %s302 = smul.addr %s298, 54
      %s303 = sadd.s32 %s301, %s302
      %s304 = smul.addr %s303, 8
      %s305 = scalar_lea.vmem %s1, %s304
      %s306 = sadd.s32 %s20, 1
      %s307 = smul.u32 %s306, 4
      %s308 = smul.u32 2, %s307
      %s309 = smul.u32 8, %s20
      %p310 = scmp.lt.s32.totalorder %s19, 1
      %s311 = scalar_select %p310, %s19, 1
      %p312 = scmp.lt.s32.totalorder %s309, 15
      %s313 = scalar_select %p312, %s309, 15
      %s314 = smul.addr %s313, 4
      %s315 = smul.addr %s311, 64
      %s316 = sadd.s32 %s314, %s315
      %s317 = smul.addr %s316, 8
      %s318 = scalar_lea.vmem %s4, %s317
      %s319 = smul.u32 8, %s20
      %v320 = vld [vmem:[%s287] sm:$0xff]
      %v321 = vld [vmem:[%s287 + $0x8] sm:$0xff]
      %v322 = vld [vmem:[%s287 + $0x10] sm:$0x3]
      %v323 = vld [vmem:[%s287 + $0x18] sm:$0xff]
      %v324 = vld [vmem:[%s287 + $0x20] sm:$0xff]
      %v325 = vld [vmem:[%s287 + $0x28] sm:$0x3]
      %v326 = vld [vmem:[%s287 + $0x30] sm:$0xff]
      %v327 = vld [vmem:[%s287 + $0x38] sm:$0xff]
      %v328 = vld [vmem:[%s287 + $0x40] sm:$0x3]
      %v329 = vld [vmem:[%s287 + $0x48] sm:$0xff]
      %v330 = vld [vmem:[%s287 + $0x50] sm:$0xff]
      %v331 = vld [vmem:[%s287 + $0x58] sm:$0x3]
      %v332 = vld [vmem:[%s287 + $0x60] sm:$0xff]
      %v333 = vld [vmem:[%s287 + $0x68] sm:$0xff]
      %v334 = vld [vmem:[%s287 + $0x70] sm:$0x3]
      %v335 = vld [vmem:[%s287 + $0x78] sm:$0xff]
      %v336 = vld [vmem:[%s287 + $0x80] sm:$0xff]
      %v337 = vld [vmem:[%s287 + $0x88] sm:$0x3]
      %v338 = vld [vmem:[%s287 + $0x90] sm:$0xff]
      %v339 = vld [vmem:[%s287 + $0x98] sm:$0xff]
      %v340 = vld [vmem:[%s287 + $0xa0] sm:$0x3]
      %v341 = vld [vmem:[%s287 + $0xa8] sm:$0xff]
      %v342 = vld [vmem:[%s287 + $0xb0] sm:$0xff]
      %v343 = vld [vmem:[%s287 + $0xb8] sm:$0x3]
      %v344 = vld [vmem:[%s305] sm:$0xff]
      %v345 = vld [vmem:[%s305 + $0x8] sm:$0xff]
      %v346 = vld [vmem:[%s305 + $0x10] sm:$0x3]
      %v347 = vld [vmem:[%s305 + $0x18] sm:$0xff]
      %v348 = vld [vmem:[%s305 + $0x20] sm:$0xff]
      %v349 = vld [vmem:[%s305 + $0x28] sm:$0x3]
      %vm374 = vcmask 1046528
      %v375 = vrot.slane %v320, 1
      %v376 = vrot.slane %v321, 1
      %v377 = vsel %vm374, %v375, %v376
      %v378 = vrot.slane %v322, 1
      %v379 = vsel %vm374, %v376, %v378
      %v380 = vrot.slane %v323, 1
      %v381 = vrot.slane %v324, 1
      %v382 = vsel %vm374, %v380, %v381
      %v383 = vrot.slane %v325, 1
      %v384 = vsel %vm374, %v381, %v383
      %v385 = vrot.slane %v326, 1
      %v386 = vrot.slane %v327, 1
      %v387 = vsel %vm374, %v385, %v386
      %v388 = vrot.slane %v328, 1
      %v389 = vsel %vm374, %v386, %v388
      %v390 = vrot.slane %v329, 1
      %v391 = vrot.slane %v330, 1
      %v392 = vsel %vm374, %v390, %v391
      %v393 = vrot.slane %v331, 1
      %v394 = vsel %vm374, %v391, %v393
      %v395 = vrot.slane %v332, 1
      %v396 = vrot.slane %v333, 1
      %v397 = vsel %vm374, %v395, %v396
      %v398 = vrot.slane %v334, 1
      %v399 = vsel %vm374, %v396, %v398
      %v400 = vrot.slane %v335, 1
      %v401 = vrot.slane %v336, 1
      %v402 = vsel %vm374, %v400, %v401
      %v403 = vrot.slane %v337, 1
      %v404 = vsel %vm374, %v401, %v403
      %v405 = vrot.slane %v338, 1
      %v406 = vrot.slane %v339, 1
      %v407 = vsel %vm374, %v405, %v406
      %v408 = vrot.slane %v340, 1
      %v409 = vsel %vm374, %v406, %v408
      %v410 = vrot.slane %v341, 1
      %v411 = vrot.slane %v342, 1
      %v412 = vsel %vm374, %v410, %v411
      %v413 = vrot.slane %v343, 1
      %v414 = vsel %vm374, %v411, %v413
      %vm415 = vcmask 1045504
      %v416 = vrot.slane %v320, 2
      %v417 = vrot.slane %v321, 2
      %v418 = vsel %vm415, %v416, %v417
      %v419 = vrot.slane %v322, 2
      %v420 = vsel %vm415, %v417, %v419
      %v421 = vrot.slane %v323, 2
      %v422 = vrot.slane %v324, 2
      %v423 = vsel %vm415, %v421, %v422
      %v424 = vrot.slane %v325, 2
      %v425 = vsel %vm415, %v422, %v424
      %v426 = vrot.slane %v326, 2
      %v427 = vrot.slane %v327, 2
      %v428 = vsel %vm415, %v426, %v427
      %v429 = vrot.slane %v328, 2
      %v430 = vsel %vm415, %v427, %v429
      %v431 = vrot.slane %v329, 2
      %v432 = vrot.slane %v330, 2
      %v433 = vsel %vm415, %v431, %v432
      %v434 = vrot.slane %v331, 2
      %v435 = vsel %vm415, %v432, %v434
      %v436 = vrot.slane %v332, 2
      %v437 = vrot.slane %v333, 2
      %v438 = vsel %vm415, %v436, %v437
      %v439 = vrot.slane %v334, 2
      %v440 = vsel %vm415, %v437, %v439
      %v441 = vrot.slane %v335, 2
      %v442 = vrot.slane %v336, 2
      %v443 = vsel %vm415, %v441, %v442
      %v444 = vrot.slane %v337, 2
      %v445 = vsel %vm415, %v442, %v444
      %v446 = vrot.slane %v338, 2
      %v447 = vrot.slane %v339, 2
      %v448 = vsel %vm415, %v446, %v447
      %v449 = vrot.slane %v340, 2
      %v450 = vsel %vm415, %v447, %v449
      %v451 = vrot.slane %v341, 2
      %v452 = vrot.slane %v342, 2
      %v453 = vsel %vm415, %v451, %v452
      %v454 = vrot.slane %v343, 2
      %v455 = vsel %vm415, %v452, %v454
      %v459 = vrot.slane %v344, 1
      %v460 = vrot.slane %v345, 1
      %v461 = vsel %vm374, %v459, %v460
      %v462 = vrot.slane %v346, 1
      %v463 = vsel %vm374, %v460, %v462
      %v464 = vrot.slane %v344, 2
      %v465 = vrot.slane %v345, 2
      %v466 = vsel %vm415, %v464, %v465
      %v467 = vrot.slane %v346, 2
      %v468 = vsel %vm415, %v465, %v467
      %v472 = vrot.slane %v347, 1
      %v473 = vrot.slane %v348, 1
      %v474 = vsel %vm374, %v472, %v473
      %v475 = vrot.slane %v349, 1
      %v476 = vsel %vm374, %v473, %v475
      %v477 = vrot.slane %v347, 2
      %v478 = vrot.slane %v348, 2
      %v479 = vsel %vm415, %v477, %v478
      %v480 = vrot.slane %v349, 2
      %v481 = vsel %vm415, %v478, %v480
      %v482 = vld [vmem:[%s3] sm:$0x1]
      %v483 = vld [vmem:[%s2] sm:$0xf]
      %s484 = scalar_lea.vmem %s2, 4
      %v485 = vld [vmem:[%s484] sm:$0xf]
      %vm486 = vcmask 31744
      %v487 = vsel %vm486, %v377, 0
      %v489 = vsel %vm486, %v379, 0
      %v491 = vsel %vm486, %v382, 0
      %v493 = vsel %vm486, %v384, 0
      %v495 = vsel %vm486, %v387, 0
      %v497 = vsel %vm486, %v389, 0
      %v499 = vsel %vm486, %v392, 0
      %v501 = vsel %vm486, %v394, 0
      %v503 = vsel %vm486, %v397, 0
      %v505 = vsel %vm486, %v399, 0
      %v507 = vsel %vm486, %v402, 0
      %v509 = vsel %vm486, %v404, 0
      %v511 = vsel %vm486, %v407, 0
      %v513 = vsel %vm486, %v409, 0
      %v515 = vsel %vm486, %v412, 0
      %v517 = vsel %vm486, %v414, 0
      %vm519 = vcmask 1043456
      %v521 = vsel %vm519, %v485, 0
      %523 = vmatprep.subr.mxu0 0.0
      %524 = vmatpush1.msra.mxu0 0.0
      %525 = vmatprep.subr.mxu0 0.0
      %526 = vmatpush1.msra.mxu0 0.0
      %527 = vmatprep.subr.mxu0 0.0
      %528 = vmatpush1.msra.mxu0 0.0
      %529 = vmatprep.subr.mxu0 0.0
      %530 = vmatpush1.msra.mxu0 0.0
      %531 = vmatprep.subr.mxu0 0.0
      %532 = vmatpush1.msra.mxu0 0.0
      %533 = vmatprep.subr.mxu0 0.0
      %534 = vmatpush1.msra.mxu0 0.0
      %535 = vmatprep.subr.mxu0 0.0
      %536 = vmatpush1.msra.mxu0 0.0
      %537 = vmatprep.subr.mxu0 0.0
      %538 = vmatpush1.msra.mxu0 0.0
      %539 = vmatprep.subr.mxu0 0.0
      %540 = vmatpush1.msra.mxu0 0.0
      %541 = vmatprep.subr.mxu0 0.0
      %542 = vmatpush1.msra.mxu0 0.0
      %543 = vmatprep.subr.mxu0 0.0
      %544 = vmatpush1.msra.mxu0 0.0
      %545 = vmatprep.subr.mxu0 0.0
      %546 = vmatpush1.msra.mxu0 0.0
      %547 = vmatprep.subr.mxu0 0.0
      %548 = vmatpush1.msra.mxu0 0.0
      %549 = vmatprep.subr.mxu0 0.0
      %550 = vmatpush1.msra.mxu0 0.0
      %551 = vmatprep.subr.mxu0 0.0
      %552 = vmatpush1.msra.mxu0 0.0
      %553 = vmatprep.subr.mxu0 0.0
      %554 = vmatpush1.msra.mxu0 %v521
      %555 = vmatprep.subr.mxu0 0.0
      %556 = vmatpush2.msra.mxu0 0.0
      %557 = vmatprep.subr.mxu0 0.0
      %558 = vmatpush2.msra.mxu0 0.0
      %559 = vmatprep.subr.mxu0 0.0
      %560 = vmatpush2.msra.mxu0 0.0
      %561 = vmatprep.subr.mxu0 0.0
      %562 = vmatpush2.msra.mxu0 0.0
      %563 = vmatprep.subr.mxu0 0.0
      %564 = vmatpush2.msra.mxu0 0.0
      %565 = vmatprep.subr.mxu0 0.0
      %566 = vmatpush2.msra.mxu0 0.0
      %567 = vmatprep.subr.mxu0 0.0
      %568 = vmatpush2.msra.mxu0 0.0
      %569 = vmatprep.subr.mxu0 0.0
      %570 = vmatpush2.msra.mxu0 0.0
      %571 = vmatprep.subr.mxu0 0.0
      %572 = vmatpush2.msra.mxu0 0.0
      %573 = vmatprep.subr.mxu0 0.0
      %574 = vmatpush2.msra.mxu0 0.0
      %575 = vmatprep.subr.mxu0 0.0
      %576 = vmatpush2.msra.mxu0 0.0
      %577 = vmatprep.subr.mxu0 0.0
      %578 = vmatpush2.msra.mxu0 0.0
      %579 = vmatprep.subr.mxu0 0.0
      %580 = vmatpush2.msra.mxu0 0.0
      %581 = vmatprep.subr.mxu0 0.0
      %582 = vmatpush2.msra.mxu0 0.0
      %583 = vmatprep.subr.mxu0 0.0
      %584 = vmatpush2.msra.mxu0 0.0
      %585 = vmatprep.subr.mxu0 0.0
      %586 = vmatpush2.msra.mxu0 0.0
      %587 = vmatprep.mubr.f32.mxu0 0.0
      %588 = vmatmul.mubr.f32.gmra.mxu0 %v487
      %v589 = vpop.f32.mrf.mxu0
      %v590 = vadd.f32 0.0, %v589
      %v591 = vpop.f32.mrf.mxu0
      %592 = vmatprep.mubr.f32.mxu0 0.0
      %593 = vmatmul.mubr.f32.gmra.mxu0 %v489
      %v594 = vpop.f32.mrf.mxu0
      %v595 = vadd.f32 0.0, %v594
      %v596 = vpop.f32.mrf.mxu0
      %597 = vmatprep.mubr.f32.mxu0 0.0
      %598 = vmatmul.mubr.f32.gmra.mxu0 %v491
      %v599 = vpop.f32.mrf.mxu0
      %v600 = vadd.f32 0.0, %v599
      %v601 = vpop.f32.mrf.mxu0
      %602 = vmatprep.mubr.f32.mxu0 0.0
      %603 = vmatmul.mubr.f32.gmra.mxu0 %v493
      %v604 = vpop.f32.mrf.mxu0
      %v605 = vadd.f32 0.0, %v604
      %v606 = vpop.f32.mrf.mxu0
      %607 = vmatprep.mubr.f32.mxu0 0.0
      %608 = vmatmul.mubr.f32.gmra.mxu0 %v495
      %v609 = vpop.f32.mrf.mxu0
      %v610 = vadd.f32 0.0, %v609
      %v611 = vpop.f32.mrf.mxu0
      %612 = vmatprep.mubr.f32.mxu0 0.0
      %613 = vmatmul.mubr.f32.gmra.mxu0 %v497
      %v614 = vpop.f32.mrf.mxu0
      %v615 = vadd.f32 0.0, %v614
      %v616 = vpop.f32.mrf.mxu0
      %617 = vmatprep.mubr.f32.mxu0 0.0
      %618 = vmatmul.mubr.f32.gmra.mxu0 %v499
      %v619 = vpop.f32.mrf.mxu0
      %v620 = vadd.f32 0.0, %v619
      %v621 = vpop.f32.mrf.mxu0
      %622 = vmatprep.mubr.f32.mxu0 0.0
      %623 = vmatmul.mubr.f32.gmra.mxu0 %v501
      %v624 = vpop.f32.mrf.mxu0
      %v625 = vadd.f32 0.0, %v624
      %v626 = vpop.f32.mrf.mxu0
      %627 = vmatprep.mubr.f32.mxu0 0.0
      %628 = vmatmul.mubr.f32.gmra.mxu0 %v503
      %v629 = vpop.f32.mrf.mxu0
      %v630 = vadd.f32 0.0, %v629
      %v631 = vpop.f32.mrf.mxu0
      %632 = vmatprep.mubr.f32.mxu0 0.0
      %633 = vmatmul.mubr.f32.gmra.mxu0 %v505
      %v634 = vpop.f32.mrf.mxu0
      %v635 = vadd.f32 0.0, %v634
      %v636 = vpop.f32.mrf.mxu0
      %637 = vmatprep.mubr.f32.mxu0 0.0
      %638 = vmatmul.mubr.f32.gmra.mxu0 %v507
      %v639 = vpop.f32.mrf.mxu0
      %v640 = vadd.f32 0.0, %v639
      %v641 = vpop.f32.mrf.mxu0
      %642 = vmatprep.mubr.f32.mxu0 0.0
      %643 = vmatmul.mubr.f32.gmra.mxu0 %v509
      %v644 = vpop.f32.mrf.mxu0
      %v645 = vadd.f32 0.0, %v644
      %v646 = vpop.f32.mrf.mxu0
      %647 = vmatprep.mubr.f32.mxu0 0.0
      %648 = vmatmul.mubr.f32.gmra.mxu0 %v511
      %v649 = vpop.f32.mrf.mxu0
      %v650 = vadd.f32 0.0, %v649
      %v651 = vpop.f32.mrf.mxu0
      %652 = vmatprep.mubr.f32.mxu0 0.0
      %653 = vmatmul.mubr.f32.gmra.mxu0 %v513
      %v654 = vpop.f32.mrf.mxu0
      %v655 = vadd.f32 0.0, %v654
      %v656 = vpop.f32.mrf.mxu0
      %657 = vmatprep.mubr.f32.mxu0 0.0
      %658 = vmatmul.mubr.f32.gmra.mxu0 %v515
      %v659 = vpop.f32.mrf.mxu0
      %v660 = vadd.f32 0.0, %v659
      %v661 = vpop.f32.mrf.mxu0
      %662 = vmatprep.mubr.f32.mxu0 0.0
      %663 = vmatmul.mubr.f32.gmra.mxu0 %v517
      %v664 = vpop.f32.mrf.mxu0
      %v665 = vadd.f32 0.0, %v664
      %v666 = vpop.f32.mrf.mxu0
      %667 = vdwg.mxu0
      %v668 = vsel %vm486, %v320, 0
      %v670 = vsel %vm486, %v321, 0
      %v672 = vsel %vm486, %v323, 0
      %v674 = vsel %vm486, %v324, 0
      %v676 = vsel %vm486, %v326, 0
      %v678 = vsel %vm486, %v327, 0
      %v680 = vsel %vm486, %v329, 0
      %v682 = vsel %vm486, %v330, 0
      %v684 = vsel %vm486, %v332, 0
      %v686 = vsel %vm486, %v333, 0
      %v688 = vsel %vm486, %v335, 0
      %v690 = vsel %vm486, %v336, 0
      %v692 = vsel %vm486, %v338, 0
      %v694 = vsel %vm486, %v339, 0
      %v696 = vsel %vm486, %v341, 0
      %v698 = vsel %vm486, %v342, 0
      %v701 = vsel %vm519, %v483, 0
      %703 = vmatprep.subr.mxu0 0.0
      %704 = vmatpush1.msra.mxu0 0.0
      %705 = vmatprep.subr.mxu0 0.0
      %706 = vmatpush1.msra.mxu0 0.0
      %707 = vmatprep.subr.mxu0 0.0
      %708 = vmatpush1.msra.mxu0 0.0
      %709 = vmatprep.subr.mxu0 0.0
      %710 = vmatpush1.msra.mxu0 0.0
      %711 = vmatprep.subr.mxu0 0.0
      %712 = vmatpush1.msra.mxu0 0.0
      %713 = vmatprep.subr.mxu0 0.0
      %714 = vmatpush1.msra.mxu0 0.0
      %715 = vmatprep.subr.mxu0 0.0
      %716 = vmatpush1.msra.mxu0 0.0
      %717 = vmatprep.subr.mxu0 0.0
      %718 = vmatpush1.msra.mxu0 0.0
      %719 = vmatprep.subr.mxu0 0.0
      %720 = vmatpush1.msra.mxu0 0.0
      %721 = vmatprep.subr.mxu0 0.0
      %722 = vmatpush1.msra.mxu0 0.0
      %723 = vmatprep.subr.mxu0 0.0
      %724 = vmatpush1.msra.mxu0 0.0
      %725 = vmatprep.subr.mxu0 0.0
      %726 = vmatpush1.msra.mxu0 0.0
      %727 = vmatprep.subr.mxu0 0.0
      %728 = vmatpush1.msra.mxu0 0.0
      %729 = vmatprep.subr.mxu0 0.0
      %730 = vmatpush1.msra.mxu0 0.0
      %731 = vmatprep.subr.mxu0 0.0
      %732 = vmatpush1.msra.mxu0 0.0
      %733 = vmatprep.subr.mxu0 0.0
      %734 = vmatpush1.msra.mxu0 %v701
      %735 = vmatprep.subr.mxu0 0.0
      %736 = vmatpush2.msra.mxu0 0.0
      %737 = vmatprep.subr.mxu0 0.0
      %738 = vmatpush2.msra.mxu0 0.0
      %739 = vmatprep.subr.mxu0 0.0
      %740 = vmatpush2.msra.mxu0 0.0
      %741 = vmatprep.subr.mxu0 0.0
      %742 = vmatpush2.msra.mxu0 0.0
      %743 = vmatprep.subr.mxu0 0.0
      %744 = vmatpush2.msra.mxu0 0.0
      %745 = vmatprep.subr.mxu0 0.0
      %746 = vmatpush2.msra.mxu0 0.0
      %747 = vmatprep.subr.mxu0 0.0
      %748 = vmatpush2.msra.mxu0 0.0
      %749 = vmatprep.subr.mxu0 0.0
      %750 = vmatpush2.msra.mxu0 0.0
      %751 = vmatprep.subr.mxu0 0.0
      %752 = vmatpush2.msra.mxu0 0.0
      %753 = vmatprep.subr.mxu0 0.0
      %754 = vmatpush2.msra.mxu0 0.0
      %755 = vmatprep.subr.mxu0 0.0
      %756 = vmatpush2.msra.mxu0 0.0
      %757 = vmatprep.subr.mxu0 0.0
      %758 = vmatpush2.msra.mxu0 0.0
      %759 = vmatprep.subr.mxu0 0.0
      %760 = vmatpush2.msra.mxu0 0.0
      %761 = vmatprep.subr.mxu0 0.0
      %762 = vmatpush2.msra.mxu0 0.0
      %763 = vmatprep.subr.mxu0 0.0
      %764 = vmatpush2.msra.mxu0 0.0
      %765 = vmatprep.subr.mxu0 0.0
      %766 = vmatpush2.msra.mxu0 0.0
      %767 = vmatprep.mubr.f32.mxu0 0.0
      %768 = vmatmul.mubr.f32.gmra.mxu0 %v668
      %v769 = vpop.f32.mrf.mxu0
      %v770 = vadd.f32 %v590, %v769
      %v771 = vpop.f32.mrf.mxu0
      %772 = vmatprep.mubr.f32.mxu0 0.0
      %773 = vmatmul.mubr.f32.gmra.mxu0 %v670
      %v774 = vpop.f32.mrf.mxu0
      %v775 = vadd.f32 %v595, %v774
      %v776 = vpop.f32.mrf.mxu0
      %777 = vmatprep.mubr.f32.mxu0 0.0
      %778 = vmatmul.mubr.f32.gmra.mxu0 %v672
      %v779 = vpop.f32.mrf.mxu0
      %v780 = vadd.f32 %v600, %v779
      %v781 = vpop.f32.mrf.mxu0
      %782 = vmatprep.mubr.f32.mxu0 0.0
      %783 = vmatmul.mubr.f32.gmra.mxu0 %v674
      %v784 = vpop.f32.mrf.mxu0
      %v785 = vadd.f32 %v605, %v784
      %v786 = vpop.f32.mrf.mxu0
      %787 = vmatprep.mubr.f32.mxu0 0.0
      %788 = vmatmul.mubr.f32.gmra.mxu0 %v676
      %v789 = vpop.f32.mrf.mxu0
      %v790 = vadd.f32 %v610, %v789
      %v791 = vpop.f32.mrf.mxu0
      %792 = vmatprep.mubr.f32.mxu0 0.0
      %793 = vmatmul.mubr.f32.gmra.mxu0 %v678
      %v794 = vpop.f32.mrf.mxu0
      %v795 = vadd.f32 %v615, %v794
      %v796 = vpop.f32.mrf.mxu0
      %797 = vmatprep.mubr.f32.mxu0 0.0
      %798 = vmatmul.mubr.f32.gmra.mxu0 %v680
      %v799 = vpop.f32.mrf.mxu0
      %v800 = vadd.f32 %v620, %v799
      %v801 = vpop.f32.mrf.mxu0
      %802 = vmatprep.mubr.f32.mxu0 0.0
      %803 = vmatmul.mubr.f32.gmra.mxu0 %v682
      %v804 = vpop.f32.mrf.mxu0
      %v805 = vadd.f32 %v625, %v804
      %v806 = vpop.f32.mrf.mxu0
      %807 = vmatprep.mubr.f32.mxu0 0.0
      %808 = vmatmul.mubr.f32.gmra.mxu0 %v684
      %v809 = vpop.f32.mrf.mxu0
      %v810 = vadd.f32 %v630, %v809
      %v811 = vpop.f32.mrf.mxu0
      %812 = vmatprep.mubr.f32.mxu0 0.0
      %813 = vmatmul.mubr.f32.gmra.mxu0 %v686
      %v814 = vpop.f32.mrf.mxu0
      %v815 = vadd.f32 %v635, %v814
      %v816 = vpop.f32.mrf.mxu0
      %817 = vmatprep.mubr.f32.mxu0 0.0
      %818 = vmatmul.mubr.f32.gmra.mxu0 %v688
      %v819 = vpop.f32.mrf.mxu0
      %v820 = vadd.f32 %v640, %v819
      %v821 = vpop.f32.mrf.mxu0
      %822 = vmatprep.mubr.f32.mxu0 0.0
      %823 = vmatmul.mubr.f32.gmra.mxu0 %v690
      %v824 = vpop.f32.mrf.mxu0
      %v825 = vadd.f32 %v645, %v824
      %v826 = vpop.f32.mrf.mxu0
      %827 = vmatprep.mubr.f32.mxu0 0.0
      %828 = vmatmul.mubr.f32.gmra.mxu0 %v692
      %v829 = vpop.f32.mrf.mxu0
      %v830 = vadd.f32 %v650, %v829
      %v831 = vpop.f32.mrf.mxu0
      %832 = vmatprep.mubr.f32.mxu0 0.0
      %833 = vmatmul.mubr.f32.gmra.mxu0 %v694
      %v834 = vpop.f32.mrf.mxu0
      %v835 = vadd.f32 %v655, %v834
      %v836 = vpop.f32.mrf.mxu0
      %837 = vmatprep.mubr.f32.mxu0 0.0
      %838 = vmatmul.mubr.f32.gmra.mxu0 %v696
      %v839 = vpop.f32.mrf.mxu0
      %v840 = vadd.f32 %v660, %v839
      %v841 = vpop.f32.mrf.mxu0
      %842 = vmatprep.mubr.f32.mxu0 0.0
      %843 = vmatmul.mubr.f32.gmra.mxu0 %v698
      %v844 = vpop.f32.mrf.mxu0
      %v845 = vadd.f32 %v665, %v844
      %v846 = vpop.f32.mrf.mxu0
      %847 = vdwg.mxu0
      %s848 = scalar_lea.vmem %s2, 8
      %v849 = vld [vmem:[%s848] sm:$0xf]
      %v850 = vsel %vm486, %v344, 0
      %v852 = vsel %vm486, %v345, 0
      %v855 = vsel %vm519, %v849, 0
      %857 = vmatprep.subr.mxu0 0.0
      %858 = vmatpush1.msra.mxu0 0.0
      %859 = vmatprep.subr.mxu0 0.0
      %860 = vmatpush1.msra.mxu0 0.0
      %861 = vmatprep.subr.mxu0 0.0
      %862 = vmatpush1.msra.mxu0 0.0
      %863 = vmatprep.subr.mxu0 0.0
      %864 = vmatpush1.msra.mxu0 0.0
      %865 = vmatprep.subr.mxu0 0.0
      %866 = vmatpush1.msra.mxu0 0.0
      %867 = vmatprep.subr.mxu0 0.0
      %868 = vmatpush1.msra.mxu0 0.0
      %869 = vmatprep.subr.mxu0 0.0
      %870 = vmatpush1.msra.mxu0 0.0
      %871 = vmatprep.subr.mxu0 0.0
      %872 = vmatpush1.msra.mxu0 0.0
      %873 = vmatprep.subr.mxu0 0.0
      %874 = vmatpush1.msra.mxu0 0.0
      %875 = vmatprep.subr.mxu0 0.0
      %876 = vmatpush1.msra.mxu0 0.0
      %877 = vmatprep.subr.mxu0 0.0
      %878 = vmatpush1.msra.mxu0 0.0
      %879 = vmatprep.subr.mxu0 0.0
      %880 = vmatpush1.msra.mxu0 0.0
      %881 = vmatprep.subr.mxu0 0.0
      %882 = vmatpush1.msra.mxu0 0.0
      %883 = vmatprep.subr.mxu0 0.0
      %884 = vmatpush1.msra.mxu0 0.0
      %885 = vmatprep.subr.mxu0 0.0
      %886 = vmatpush1.msra.mxu0 0.0
      %887 = vmatprep.subr.mxu0 0.0
      %888 = vmatpush1.msra.mxu0 %v855
      %889 = vmatprep.subr.mxu0 0.0
      %890 = vmatpush2.msra.mxu0 0.0
      %891 = vmatprep.subr.mxu0 0.0
      %892 = vmatpush2.msra.mxu0 0.0
      %893 = vmatprep.subr.mxu0 0.0
      %894 = vmatpush2.msra.mxu0 0.0
      %895 = vmatprep.subr.mxu0 0.0
      %896 = vmatpush2.msra.mxu0 0.0
      %897 = vmatprep.subr.mxu0 0.0
      %898 = vmatpush2.msra.mxu0 0.0
      %899 = vmatprep.subr.mxu0 0.0
      %900 = vmatpush2.msra.mxu0 0.0
      %901 = vmatprep.subr.mxu0 0.0
      %902 = vmatpush2.msra.mxu0 0.0
      %903 = vmatprep.subr.mxu0 0.0
      %904 = vmatpush2.msra.mxu0 0.0
      %905 = vmatprep.subr.mxu0 0.0
      %906 = vmatpush2.msra.mxu0 0.0
      %907 = vmatprep.subr.mxu0 0.0
      %908 = vmatpush2.msra.mxu0 0.0
      %909 = vmatprep.subr.mxu0 0.0
      %910 = vmatpush2.msra.mxu0 0.0
      %911 = vmatprep.subr.mxu0 0.0
      %912 = vmatpush2.msra.mxu0 0.0
      %913 = vmatprep.subr.mxu0 0.0
      %914 = vmatpush2.msra.mxu0 0.0
      %915 = vmatprep.subr.mxu0 0.0
      %916 = vmatpush2.msra.mxu0 0.0
      %917 = vmatprep.subr.mxu0 0.0
      %918 = vmatpush2.msra.mxu0 0.0
      %919 = vmatprep.subr.mxu0 0.0
      %920 = vmatpush2.msra.mxu0 0.0
      %921 = vmatprep.mubr.f32.mxu0 0.0
      %922 = vmatmul.mubr.f32.gmra.mxu0 %v672
      %v923 = vpop.f32.mrf.mxu0
      %v924 = vadd.f32 0.0, %v923
      %v925 = vpop.f32.mrf.mxu0
      %926 = vmatprep.mubr.f32.mxu0 0.0
      %927 = vmatmul.mubr.f32.gmra.mxu0 %v674
      %v928 = vpop.f32.mrf.mxu0
      %v929 = vadd.f32 0.0, %v928
      %v930 = vpop.f32.mrf.mxu0
      %931 = vmatprep.mubr.f32.mxu0 0.0
      %932 = vmatmul.mubr.f32.gmra.mxu0 %v676
      %v933 = vpop.f32.mrf.mxu0
      %v934 = vadd.f32 0.0, %v933
      %v935 = vpop.f32.mrf.mxu0
      %936 = vmatprep.mubr.f32.mxu0 0.0
      %937 = vmatmul.mubr.f32.gmra.mxu0 %v678
      %v938 = vpop.f32.mrf.mxu0
      %v939 = vadd.f32 0.0, %v938
      %v940 = vpop.f32.mrf.mxu0
      %941 = vmatprep.mubr.f32.mxu0 0.0
      %942 = vmatmul.mubr.f32.gmra.mxu0 %v680
      %v943 = vpop.f32.mrf.mxu0
      %v944 = vadd.f32 0.0, %v943
      %v945 = vpop.f32.mrf.mxu0
      %946 = vmatprep.mubr.f32.mxu0 0.0
      %947 = vmatmul.mubr.f32.gmra.mxu0 %v682
      %v948 = vpop.f32.mrf.mxu0
      %v949 = vadd.f32 0.0, %v948
      %v950 = vpop.f32.mrf.mxu0
      %951 = vmatprep.mubr.f32.mxu0 0.0
      %952 = vmatmul.mubr.f32.gmra.mxu0 %v684
      %v953 = vpop.f32.mrf.mxu0
      %v954 = vadd.f32 0.0, %v953
      %v955 = vpop.f32.mrf.mxu0
      %956 = vmatprep.mubr.f32.mxu0 0.0
      %957 = vmatmul.mubr.f32.gmra.mxu0 %v686
      %v958 = vpop.f32.mrf.mxu0
      %v959 = vadd.f32 0.0, %v958
      %v960 = vpop.f32.mrf.mxu0
      %961 = vmatprep.mubr.f32.mxu0 0.0
      %962 = vmatmul.mubr.f32.gmra.mxu0 %v688
      %v963 = vpop.f32.mrf.mxu0
      %v964 = vadd.f32 0.0, %v963
      %v965 = vpop.f32.mrf.mxu0
      %966 = vmatprep.mubr.f32.mxu0 0.0
      %967 = vmatmul.mubr.f32.gmra.mxu0 %v690
      %v968 = vpop.f32.mrf.mxu0
      %v969 = vadd.f32 0.0, %v968
      %v970 = vpop.f32.mrf.mxu0
      %971 = vmatprep.mubr.f32.mxu0 0.0
      %972 = vmatmul.mubr.f32.gmra.mxu0 %v692
      %v973 = vpop.f32.mrf.mxu0
      %v974 = vadd.f32 0.0, %v973
      %v975 = vpop.f32.mrf.mxu0
      %976 = vmatprep.mubr.f32.mxu0 0.0
      %977 = vmatmul.mubr.f32.gmra.mxu0 %v694
      %v978 = vpop.f32.mrf.mxu0
      %v979 = vadd.f32 0.0, %v978
      %v980 = vpop.f32.mrf.mxu0
      %981 = vmatprep.mubr.f32.mxu0 0.0
      %982 = vmatmul.mubr.f32.gmra.mxu0 %v696
      %v983 = vpop.f32.mrf.mxu0
      %v984 = vadd.f32 0.0, %v983
      %v985 = vpop.f32.mrf.mxu0
      %986 = vmatprep.mubr.f32.mxu0 0.0
      %987 = vmatmul.mubr.f32.gmra.mxu0 %v698
      %v988 = vpop.f32.mrf.mxu0
      %v989 = vadd.f32 0.0, %v988
      %v990 = vpop.f32.mrf.mxu0
      %991 = vmatprep.mubr.f32.mxu0 0.0
      %992 = vmatmul.mubr.f32.gmra.mxu0 %v850
      %v993 = vpop.f32.mrf.mxu0
      %v994 = vadd.f32 0.0, %v993
      %v995 = vpop.f32.mrf.mxu0
      %996 = vmatprep.mubr.f32.mxu0 0.0
      %997 = vmatmul.mubr.f32.gmra.mxu0 %v852
      %v998 = vpop.f32.mrf.mxu0
      %v999 = vadd.f32 0.0, %v998
      %v1000 = vpop.f32.mrf.mxu0
      %1001 = vdwg.mxu0
      %v1002 = vadd.f32 %v770, %v924
      %v1003 = vadd.f32 %v775, %v929
      %v1004 = vadd.f32 %v780, %v934
      %v1005 = vadd.f32 %v785, %v939
      %v1006 = vadd.f32 %v790, %v944
      %v1007 = vadd.f32 %v795, %v949
      %v1008 = vadd.f32 %v800, %v954
      %v1009 = vadd.f32 %v805, %v959
      %v1010 = vadd.f32 %v810, %v964
      %v1011 = vadd.f32 %v815, %v969
      %v1012 = vadd.f32 %v820, %v974
      %v1013 = vadd.f32 %v825, %v979
      %v1014 = vadd.f32 %v830, %v984
      %v1015 = vadd.f32 %v835, %v989
      %v1016 = vadd.f32 %v840, %v994
      %v1017 = vadd.f32 %v845, %v999
      %s1018 = scalar_lea.vmem %s2, 12
      %v1019 = vld [vmem:[%s1018] sm:$0xf]
      %v1020 = vsel %vm486, %v461, 0
      %v1022 = vsel %vm486, %v463, 0
      %v1025 = vsel %vm519, %v1019, 0
      %1027 = vmatprep.subr.mxu0 0.0
      %1028 = vmatpush1.msra.mxu0 0.0
      %1029 = vmatprep.subr.mxu0 0.0
      %1030 = vmatpush1.msra.mxu0 0.0
      %1031 = vmatprep.subr.mxu0 0.0
      %1032 = vmatpush1.msra.mxu0 0.0
      %1033 = vmatprep.subr.mxu0 0.0
      %1034 = vmatpush1.msra.mxu0 0.0
      %1035 = vmatprep.subr.mxu0 0.0
      %1036 = vmatpush1.msra.mxu0 0.0
      %1037 = vmatprep.subr.mxu0 0.0
      %1038 = vmatpush1.msra.mxu0 0.0
      %1039 = vmatprep.subr.mxu0 0.0
      %1040 = vmatpush1.msra.mxu0 0.0
      %1041 = vmatprep.subr.mxu0 0.0
      %1042 = vmatpush1.msra.mxu0 0.0
      %1043 = vmatprep.subr.mxu0 0.0
      %1044 = vmatpush1.msra.mxu0 0.0
      %1045 = vmatprep.subr.mxu0 0.0
      %1046 = vmatpush1.msra.mxu0 0.0
      %1047 = vmatprep.subr.mxu0 0.0
      %1048 = vmatpush1.msra.mxu0 0.0
      %1049 = vmatprep.subr.mxu0 0.0
      %1050 = vmatpush1.msra.mxu0 0.0
      %1051 = vmatprep.subr.mxu0 0.0
      %1052 = vmatpush1.msra.mxu0 0.0
      %1053 = vmatprep.subr.mxu0 0.0
      %1054 = vmatpush1.msra.mxu0 0.0
      %1055 = vmatprep.subr.mxu0 0.0
      %1056 = vmatpush1.msra.mxu0 0.0
      %1057 = vmatprep.subr.mxu0 0.0
      %1058 = vmatpush1.msra.mxu0 %v1025
      %1059 = vmatprep.subr.mxu0 0.0
      %1060 = vmatpush2.msra.mxu0 0.0
      %1061 = vmatprep.subr.mxu0 0.0
      %1062 = vmatpush2.msra.mxu0 0.0
      %1063 = vmatprep.subr.mxu0 0.0
      %1064 = vmatpush2.msra.mxu0 0.0
      %1065 = vmatprep.subr.mxu0 0.0
      %1066 = vmatpush2.msra.mxu0 0.0
      %1067 = vmatprep.subr.mxu0 0.0
      %1068 = vmatpush2.msra.mxu0 0.0
      %1069 = vmatprep.subr.mxu0 0.0
      %1070 = vmatpush2.msra.mxu0 0.0
      %1071 = vmatprep.subr.mxu0 0.0
      %1072 = vmatpush2.msra.mxu0 0.0
      %1073 = vmatprep.subr.mxu0 0.0
      %1074 = vmatpush2.msra.mxu0 0.0
      %1075 = vmatprep.subr.mxu0 0.0
      %1076 = vmatpush2.msra.mxu0 0.0
      %1077 = vmatprep.subr.mxu0 0.0
      %1078 = vmatpush2.msra.mxu0 0.0
      %1079 = vmatprep.subr.mxu0 0.0
      %1080 = vmatpush2.msra.mxu0 0.0
      %1081 = vmatprep.subr.mxu0 0.0
      %1082 = vmatpush2.msra.mxu0 0.0
      %1083 = vmatprep.subr.mxu0 0.0
      %1084 = vmatpush2.msra.mxu0 0.0
      %1085 = vmatprep.subr.mxu0 0.0
      %1086 = vmatpush2.msra.mxu0 0.0
      %1087 = vmatprep.subr.mxu0 0.0
      %1088 = vmatpush2.msra.mxu0 0.0
      %1089 = vmatprep.subr.mxu0 0.0
      %1090 = vmatpush2.msra.mxu0 0.0
      %1091 = vmatprep.mubr.f32.mxu0 0.0
      %1092 = vmatmul.mubr.f32.gmra.mxu0 %v491
      %v1093 = vpop.f32.mrf.mxu0
      %v1094 = vadd.f32 0.0, %v1093
      %v1095 = vpop.f32.mrf.mxu0
      %1096 = vmatprep.mubr.f32.mxu0 0.0
      %1097 = vmatmul.mubr.f32.gmra.mxu0 %v493
      %v1098 = vpop.f32.mrf.mxu0
      %v1099 = vadd.f32 0.0, %v1098
      %v1100 = vpop.f32.mrf.mxu0
      %1101 = vmatprep.mubr.f32.mxu0 0.0
      %1102 = vmatmul.mubr.f32.gmra.mxu0 %v495
      %v1103 = vpop.f32.mrf.mxu0
      %v1104 = vadd.f32 0.0, %v1103
      %v1105 = vpop.f32.mrf.mxu0
      %1106 = vmatprep.mubr.f32.mxu0 0.0
      %1107 = vmatmul.mubr.f32.gmra.mxu0 %v497
      %v1108 = vpop.f32.mrf.mxu0
      %v1109 = vadd.f32 0.0, %v1108
      %v1110 = vpop.f32.mrf.mxu0
      %1111 = vmatprep.mubr.f32.mxu0 0.0
      %1112 = vmatmul.mubr.f32.gmra.mxu0 %v499
      %v1113 = vpop.f32.mrf.mxu0
      %v1114 = vadd.f32 0.0, %v1113
      %v1115 = vpop.f32.mrf.mxu0
      %1116 = vmatprep.mubr.f32.mxu0 0.0
      %1117 = vmatmul.mubr.f32.gmra.mxu0 %v501
      %v1118 = vpop.f32.mrf.mxu0
      %v1119 = vadd.f32 0.0, %v1118
      %v1120 = vpop.f32.mrf.mxu0
      %1121 = vmatprep.mubr.f32.mxu0 0.0
      %1122 = vmatmul.mubr.f32.gmra.mxu0 %v503
      %v1123 = vpop.f32.mrf.mxu0
      %v1124 = vadd.f32 0.0, %v1123
      %v1125 = vpop.f32.mrf.mxu0
      %1126 = vmatprep.mubr.f32.mxu0 0.0
      %1127 = vmatmul.mubr.f32.gmra.mxu0 %v505
      %v1128 = vpop.f32.mrf.mxu0
      %v1129 = vadd.f32 0.0, %v1128
      %v1130 = vpop.f32.mrf.mxu0
      %1131 = vmatprep.mubr.f32.mxu0 0.0
      %1132 = vmatmul.mubr.f32.gmra.mxu0 %v507
      %v1133 = vpop.f32.mrf.mxu0
      %v1134 = vadd.f32 0.0, %v1133
      %v1135 = vpop.f32.mrf.mxu0
      %1136 = vmatprep.mubr.f32.mxu0 0.0
      %1137 = vmatmul.mubr.f32.gmra.mxu0 %v509
      %v1138 = vpop.f32.mrf.mxu0
      %v1139 = vadd.f32 0.0, %v1138
      %v1140 = vpop.f32.mrf.mxu0
      %1141 = vmatprep.mubr.f32.mxu0 0.0
      %1142 = vmatmul.mubr.f32.gmra.mxu0 %v511
      %v1143 = vpop.f32.mrf.mxu0
      %v1144 = vadd.f32 0.0, %v1143
      %v1145 = vpop.f32.mrf.mxu0
      %1146 = vmatprep.mubr.f32.mxu0 0.0
      %1147 = vmatmul.mubr.f32.gmra.mxu0 %v513
      %v1148 = vpop.f32.mrf.mxu0
      %v1149 = vadd.f32 0.0, %v1148
      %v1150 = vpop.f32.mrf.mxu0
      %1151 = vmatprep.mubr.f32.mxu0 0.0
      %1152 = vmatmul.mubr.f32.gmra.mxu0 %v515
      %v1153 = vpop.f32.mrf.mxu0
      %v1154 = vadd.f32 0.0, %v1153
      %v1155 = vpop.f32.mrf.mxu0
      %1156 = vmatprep.mubr.f32.mxu0 0.0
      %1157 = vmatmul.mubr.f32.gmra.mxu0 %v517
      %v1158 = vpop.f32.mrf.mxu0
      %v1159 = vadd.f32 0.0, %v1158
      %v1160 = vpop.f32.mrf.mxu0
      %1161 = vmatprep.mubr.f32.mxu0 0.0
      %1162 = vmatmul.mubr.f32.gmra.mxu0 %v1020
      %v1163 = vpop.f32.mrf.mxu0
      %v1164 = vadd.f32 0.0, %v1163
      %v1165 = vpop.f32.mrf.mxu0
      %1166 = vmatprep.mubr.f32.mxu0 0.0
      %1167 = vmatmul.mubr.f32.gmra.mxu0 %v1022
      %v1168 = vpop.f32.mrf.mxu0
      %v1169 = vadd.f32 0.0, %v1168
      %v1170 = vpop.f32.mrf.mxu0
      %1171 = vdwg.mxu0
      %v1172 = vadd.f32 %v1002, %v1094
      %v1173 = vadd.f32 %v1003, %v1099
      %v1174 = vadd.f32 %v1004, %v1104
      %v1175 = vadd.f32 %v1005, %v1109
      %v1176 = vadd.f32 %v1006, %v1114
      %v1177 = vadd.f32 %v1007, %v1119
      %v1178 = vadd.f32 %v1008, %v1124
      %v1179 = vadd.f32 %v1009, %v1129
      %v1180 = vadd.f32 %v1010, %v1134
      %v1181 = vadd.f32 %v1011, %v1139
      %v1182 = vadd.f32 %v1012, %v1144
      %v1183 = vadd.f32 %v1013, %v1149
      %v1184 = vadd.f32 %v1014, %v1154
      %v1185 = vadd.f32 %v1015, %v1159
      %v1186 = vadd.f32 %v1016, %v1164
      %v1187 = vadd.f32 %v1017, %v1169
      %v1189 = vlaneseq
      %v1190 = vshrl.u32 %v1189, 7
      %v1191 = vsub.s32 0, %v1190
      %v1192 = vrot.slane %v482, %v1191
      %v1194 = vadd.f32 %v1172, %v1192
      %v1195 = vadd.f32 %v1173, %v1192
      %v1196 = vadd.f32 %v1174, %v1192
      %v1197 = vadd.f32 %v1175, %v1192
      %v1198 = vadd.f32 %v1176, %v1192
      %v1199 = vadd.f32 %v1177, %v1192
      %v1200 = vadd.f32 %v1178, %v1192
      %v1201 = vadd.f32 %v1179, %v1192
      %v1202 = vadd.f32 %v1180, %v1192
      %v1203 = vadd.f32 %v1181, %v1192
      %v1204 = vadd.f32 %v1182, %v1192
      %v1205 = vadd.f32 %v1183, %v1192
      %v1206 = vadd.f32 %v1184, %v1192
      %v1207 = vadd.f32 %v1185, %v1192
      %v1208 = vadd.f32 %v1186, %v1192
      %v1209 = vadd.f32 %v1187, %v1192
      %1210 = vst.msk [vmem:[%s318] sm:$0xff] %vm486, %v1194
      %1211 = vst.msk [vmem:[%s318 + $0x8] sm:$0xff] %vm486, %v1195
      %1212 = vst.msk [vmem:[%s318 + $0x20] sm:$0xff] %vm486, %v1196
      %1213 = vst.msk [vmem:[%s318 + $0x28] sm:$0xff] %vm486, %v1197
      %1214 = vst.msk [vmem:[%s318 + $0x40] sm:$0xff] %vm486, %v1198
      %1215 = vst.msk [vmem:[%s318 + $0x48] sm:$0xff] %vm486, %v1199
      %1216 = vst.msk [vmem:[%s318 + $0x60] sm:$0xff] %vm486, %v1200
      %1217 = vst.msk [vmem:[%s318 + $0x68] sm:$0xff] %vm486, %v1201
      %1218 = vst.msk [vmem:[%s318 + $0x80] sm:$0xff] %vm486, %v1202
      %1219 = vst.msk [vmem:[%s318 + $0x88] sm:$0xff] %vm486, %v1203
      %1220 = vst.msk [vmem:[%s318 + $0xa0] sm:$0xff] %vm486, %v1204
      %1221 = vst.msk [vmem:[%s318 + $0xa8] sm:$0xff] %vm486, %v1205
      %1222 = vst.msk [vmem:[%s318 + $0xc0] sm:$0xff] %vm486, %v1206
      %1223 = vst.msk [vmem:[%s318 + $0xc8] sm:$0xff] %vm486, %v1207
      %1224 = vst.msk [vmem:[%s318 + $0xe0] sm:$0xff] %vm486, %v1208
      %1225 = vst.msk [vmem:[%s318 + $0xe8] sm:$0xff] %vm486, %v1209
      %s1226 = scalar_lea.vmem %s2, 16
      %v1227 = vld [vmem:[%s1226] sm:$0xf]
      %s1228 = scalar_lea.vmem %s2, 20
      %v1229 = vld [vmem:[%s1228] sm:$0xf]
      %v1230 = vsel %vm486, %v418, 0
      %v1232 = vsel %vm486, %v420, 0
      %v1234 = vsel %vm486, %v423, 0
      %v1236 = vsel %vm486, %v425, 0
      %v1238 = vsel %vm486, %v428, 0
      %v1240 = vsel %vm486, %v430, 0
      %v1242 = vsel %vm486, %v433, 0
      %v1244 = vsel %vm486, %v435, 0
      %v1246 = vsel %vm486, %v438, 0
      %v1248 = vsel %vm486, %v440, 0
      %v1250 = vsel %vm486, %v443, 0
      %v1252 = vsel %vm486, %v445, 0
      %v1254 = vsel %vm486, %v448, 0
      %v1256 = vsel %vm486, %v450, 0
      %v1258 = vsel %vm486, %v453, 0
      %v1260 = vsel %vm486, %v455, 0
      %v1263 = vsel %vm519, %v1229, 0
      %1265 = vmatprep.subr.mxu0 0.0
      %1266 = vmatpush1.msra.mxu0 0.0
      %1267 = vmatprep.subr.mxu0 0.0
      %1268 = vmatpush1.msra.mxu0 0.0
      %1269 = vmatprep.subr.mxu0 0.0
      %1270 = vmatpush1.msra.mxu0 0.0
      %1271 = vmatprep.subr.mxu0 0.0
      %1272 = vmatpush1.msra.mxu0 0.0
      %1273 = vmatprep.subr.mxu0 0.0
      %1274 = vmatpush1.msra.mxu0 0.0
      %1275 = vmatprep.subr.mxu0 0.0
      %1276 = vmatpush1.msra.mxu0 0.0
      %1277 = vmatprep.subr.mxu0 0.0
      %1278 = vmatpush1.msra.mxu0 0.0
      %1279 = vmatprep.subr.mxu0 0.0
      %1280 = vmatpush1.msra.mxu0 0.0
      %1281 = vmatprep.subr.mxu0 0.0
      %1282 = vmatpush1.msra.mxu0 0.0
      %1283 = vmatprep.subr.mxu0 0.0
      %1284 = vmatpush1.msra.mxu0 0.0
      %1285 = vmatprep.subr.mxu0 0.0
      %1286 = vmatpush1.msra.mxu0 0.0
      %1287 = vmatprep.subr.mxu0 0.0
      %1288 = vmatpush1.msra.mxu0 0.0
      %1289 = vmatprep.subr.mxu0 0.0
      %1290 = vmatpush1.msra.mxu0 0.0
      %1291 = vmatprep.subr.mxu0 0.0
      %1292 = vmatpush1.msra.mxu0 0.0
      %1293 = vmatprep.subr.mxu0 0.0
      %1294 = vmatpush1.msra.mxu0 0.0
      %1295 = vmatprep.subr.mxu0 0.0
      %1296 = vmatpush1.msra.mxu0 %v1263
      %1297 = vmatprep.subr.mxu0 0.0
      %1298 = vmatpush2.msra.mxu0 0.0
      %1299 = vmatprep.subr.mxu0 0.0
      %1300 = vmatpush2.msra.mxu0 0.0
      %1301 = vmatprep.subr.mxu0 0.0
      %1302 = vmatpush2.msra.mxu0 0.0
      %1303 = vmatprep.subr.mxu0 0.0
      %1304 = vmatpush2.msra.mxu0 0.0
      %1305 = vmatprep.subr.mxu0 0.0
      %1306 = vmatpush2.msra.mxu0 0.0
      %1307 = vmatprep.subr.mxu0 0.0
      %1308 = vmatpush2.msra.mxu0 0.0
      %1309 = vmatprep.subr.mxu0 0.0
      %1310 = vmatpush2.msra.mxu0 0.0
      %1311 = vmatprep.subr.mxu0 0.0
      %1312 = vmatpush2.msra.mxu0 0.0
      %1313 = vmatprep.subr.mxu0 0.0
      %1314 = vmatpush2.msra.mxu0 0.0
      %1315 = vmatprep.subr.mxu0 0.0
      %1316 = vmatpush2.msra.mxu0 0.0
      %1317 = vmatprep.subr.mxu0 0.0
      %1318 = vmatpush2.msra.mxu0 0.0
      %1319 = vmatprep.subr.mxu0 0.0
      %1320 = vmatpush2.msra.mxu0 0.0
      %1321 = vmatprep.subr.mxu0 0.0
      %1322 = vmatpush2.msra.mxu0 0.0
      %1323 = vmatprep.subr.mxu0 0.0
      %1324 = vmatpush2.msra.mxu0 0.0
      %1325 = vmatprep.subr.mxu0 0.0
      %1326 = vmatpush2.msra.mxu0 0.0
      %1327 = vmatprep.subr.mxu0 0.0
      %1328 = vmatpush2.msra.mxu0 0.0
      %1329 = vmatprep.mubr.f32.mxu0 0.0
      %1330 = vmatmul.mubr.f32.gmra.mxu0 %v1230
      %v1331 = vpop.f32.mrf.mxu0
      %v1332 = vadd.f32 0.0, %v1331
      %v1333 = vpop.f32.mrf.mxu0
      %1334 = vmatprep.mubr.f32.mxu0 0.0
      %1335 = vmatmul.mubr.f32.gmra.mxu0 %v1232
      %v1336 = vpop.f32.mrf.mxu0
      %v1337 = vadd.f32 0.0, %v1336
      %v1338 = vpop.f32.mrf.mxu0
      %1339 = vmatprep.mubr.f32.mxu0 0.0
      %1340 = vmatmul.mubr.f32.gmra.mxu0 %v1234
      %v1341 = vpop.f32.mrf.mxu0
      %v1342 = vadd.f32 0.0, %v1341
      %v1343 = vpop.f32.mrf.mxu0
      %1344 = vmatprep.mubr.f32.mxu0 0.0
      %1345 = vmatmul.mubr.f32.gmra.mxu0 %v1236
      %v1346 = vpop.f32.mrf.mxu0
      %v1347 = vadd.f32 0.0, %v1346
      %v1348 = vpop.f32.mrf.mxu0
      %1349 = vmatprep.mubr.f32.mxu0 0.0
      %1350 = vmatmul.mubr.f32.gmra.mxu0 %v1238
      %v1351 = vpop.f32.mrf.mxu0
      %v1352 = vadd.f32 0.0, %v1351
      %v1353 = vpop.f32.mrf.mxu0
      %1354 = vmatprep.mubr.f32.mxu0 0.0
      %1355 = vmatmul.mubr.f32.gmra.mxu0 %v1240
      %v1356 = vpop.f32.mrf.mxu0
      %v1357 = vadd.f32 0.0, %v1356
      %v1358 = vpop.f32.mrf.mxu0
      %1359 = vmatprep.mubr.f32.mxu0 0.0
      %1360 = vmatmul.mubr.f32.gmra.mxu0 %v1242
      %v1361 = vpop.f32.mrf.mxu0
      %v1362 = vadd.f32 0.0, %v1361
      %v1363 = vpop.f32.mrf.mxu0
      %1364 = vmatprep.mubr.f32.mxu0 0.0
      %1365 = vmatmul.mubr.f32.gmra.mxu0 %v1244
      %v1366 = vpop.f32.mrf.mxu0
      %v1367 = vadd.f32 0.0, %v1366
      %v1368 = vpop.f32.mrf.mxu0
      %1369 = vmatprep.mubr.f32.mxu0 0.0
      %1370 = vmatmul.mubr.f32.gmra.mxu0 %v1246
      %v1371 = vpop.f32.mrf.mxu0
      %v1372 = vadd.f32 0.0, %v1371
      %v1373 = vpop.f32.mrf.mxu0
      %1374 = vmatprep.mubr.f32.mxu0 0.0
      %1375 = vmatmul.mubr.f32.gmra.mxu0 %v1248
      %v1376 = vpop.f32.mrf.mxu0
      %v1377 = vadd.f32 0.0, %v1376
      %v1378 = vpop.f32.mrf.mxu0
      %1379 = vmatprep.mubr.f32.mxu0 0.0
      %1380 = vmatmul.mubr.f32.gmra.mxu0 %v1250
      %v1381 = vpop.f32.mrf.mxu0
      %v1382 = vadd.f32 0.0, %v1381
      %v1383 = vpop.f32.mrf.mxu0
      %1384 = vmatprep.mubr.f32.mxu0 0.0
      %1385 = vmatmul.mubr.f32.gmra.mxu0 %v1252
      %v1386 = vpop.f32.mrf.mxu0
      %v1387 = vadd.f32 0.0, %v1386
      %v1388 = vpop.f32.mrf.mxu0
      %1389 = vmatprep.mubr.f32.mxu0 0.0
      %1390 = vmatmul.mubr.f32.gmra.mxu0 %v1254
      %v1391 = vpop.f32.mrf.mxu0
      %v1392 = vadd.f32 0.0, %v1391
      %v1393 = vpop.f32.mrf.mxu0
      %1394 = vmatprep.mubr.f32.mxu0 0.0
      %1395 = vmatmul.mubr.f32.gmra.mxu0 %v1256
      %v1396 = vpop.f32.mrf.mxu0
      %v1397 = vadd.f32 0.0, %v1396
      %v1398 = vpop.f32.mrf.mxu0
      %1399 = vmatprep.mubr.f32.mxu0 0.0
      %1400 = vmatmul.mubr.f32.gmra.mxu0 %v1258
      %v1401 = vpop.f32.mrf.mxu0
      %v1402 = vadd.f32 0.0, %v1401
      %v1403 = vpop.f32.mrf.mxu0
      %1404 = vmatprep.mubr.f32.mxu0 0.0
      %1405 = vmatmul.mubr.f32.gmra.mxu0 %v1260
      %v1406 = vpop.f32.mrf.mxu0
      %v1407 = vadd.f32 0.0, %v1406
      %v1408 = vpop.f32.mrf.mxu0
      %1409 = vdwg.mxu0
      %v1411 = vsel %vm519, %v1227, 0
      %1413 = vmatprep.subr.mxu0 0.0
      %1414 = vmatpush1.msra.mxu0 0.0
      %1415 = vmatprep.subr.mxu0 0.0
      %1416 = vmatpush1.msra.mxu0 0.0
      %1417 = vmatprep.subr.mxu0 0.0
      %1418 = vmatpush1.msra.mxu0 0.0
      %1419 = vmatprep.subr.mxu0 0.0
      %1420 = vmatpush1.msra.mxu0 0.0
      %1421 = vmatprep.subr.mxu0 0.0
      %1422 = vmatpush1.msra.mxu0 0.0
      %1423 = vmatprep.subr.mxu0 0.0
      %1424 = vmatpush1.msra.mxu0 0.0
      %1425 = vmatprep.subr.mxu0 0.0
      %1426 = vmatpush1.msra.mxu0 0.0
      %1427 = vmatprep.subr.mxu0 0.0
      %1428 = vmatpush1.msra.mxu0 0.0
      %1429 = vmatprep.subr.mxu0 0.0
      %1430 = vmatpush1.msra.mxu0 0.0
      %1431 = vmatprep.subr.mxu0 0.0
      %1432 = vmatpush1.msra.mxu0 0.0
      %1433 = vmatprep.subr.mxu0 0.0
      %1434 = vmatpush1.msra.mxu0 0.0
      %1435 = vmatprep.subr.mxu0 0.0
      %1436 = vmatpush1.msra.mxu0 0.0
      %1437 = vmatprep.subr.mxu0 0.0
      %1438 = vmatpush1.msra.mxu0 0.0
      %1439 = vmatprep.subr.mxu0 0.0
      %1440 = vmatpush1.msra.mxu0 0.0
      %1441 = vmatprep.subr.mxu0 0.0
      %1442 = vmatpush1.msra.mxu0 0.0
      %1443 = vmatprep.subr.mxu0 0.0
      %1444 = vmatpush1.msra.mxu0 %v1411
      %1445 = vmatprep.subr.mxu0 0.0
      %1446 = vmatpush2.msra.mxu0 0.0
      %1447 = vmatprep.subr.mxu0 0.0
      %1448 = vmatpush2.msra.mxu0 0.0
      %1449 = vmatprep.subr.mxu0 0.0
      %1450 = vmatpush2.msra.mxu0 0.0
      %1451 = vmatprep.subr.mxu0 0.0
      %1452 = vmatpush2.msra.mxu0 0.0
      %1453 = vmatprep.subr.mxu0 0.0
      %1454 = vmatpush2.msra.mxu0 0.0
      %1455 = vmatprep.subr.mxu0 0.0
      %1456 = vmatpush2.msra.mxu0 0.0
      %1457 = vmatprep.subr.mxu0 0.0
      %1458 = vmatpush2.msra.mxu0 0.0
      %1459 = vmatprep.subr.mxu0 0.0
      %1460 = vmatpush2.msra.mxu0 0.0
      %1461 = vmatprep.subr.mxu0 0.0
      %1462 = vmatpush2.msra.mxu0 0.0
      %1463 = vmatprep.subr.mxu0 0.0
      %1464 = vmatpush2.msra.mxu0 0.0
      %1465 = vmatprep.subr.mxu0 0.0
      %1466 = vmatpush2.msra.mxu0 0.0
      %1467 = vmatprep.subr.mxu0 0.0
      %1468 = vmatpush2.msra.mxu0 0.0
      %1469 = vmatprep.subr.mxu0 0.0
      %1470 = vmatpush2.msra.mxu0 0.0
      %1471 = vmatprep.subr.mxu0 0.0
      %1472 = vmatpush2.msra.mxu0 0.0
      %1473 = vmatprep.subr.mxu0 0.0
      %1474 = vmatpush2.msra.mxu0 0.0
      %1475 = vmatprep.subr.mxu0 0.0
      %1476 = vmatpush2.msra.mxu0 0.0
      %1477 = vmatprep.mubr.f32.mxu0 0.0
      %1478 = vmatmul.mubr.f32.gmra.mxu0 %v487
      %v1479 = vpop.f32.mrf.mxu0
      %v1480 = vadd.f32 %v1332, %v1479
      %v1481 = vpop.f32.mrf.mxu0
      %1482 = vmatprep.mubr.f32.mxu0 0.0
      %1483 = vmatmul.mubr.f32.gmra.mxu0 %v489
      %v1484 = vpop.f32.mrf.mxu0
      %v1485 = vadd.f32 %v1337, %v1484
      %v1486 = vpop.f32.mrf.mxu0
      %1487 = vmatprep.mubr.f32.mxu0 0.0
      %1488 = vmatmul.mubr.f32.gmra.mxu0 %v491
      %v1489 = vpop.f32.mrf.mxu0
      %v1490 = vadd.f32 %v1342, %v1489
      %v1491 = vpop.f32.mrf.mxu0
      %1492 = vmatprep.mubr.f32.mxu0 0.0
      %1493 = vmatmul.mubr.f32.gmra.mxu0 %v493
      %v1494 = vpop.f32.mrf.mxu0
      %v1495 = vadd.f32 %v1347, %v1494
      %v1496 = vpop.f32.mrf.mxu0
      %1497 = vmatprep.mubr.f32.mxu0 0.0
      %1498 = vmatmul.mubr.f32.gmra.mxu0 %v495
      %v1499 = vpop.f32.mrf.mxu0
      %v1500 = vadd.f32 %v1352, %v1499
      %v1501 = vpop.f32.mrf.mxu0
      %1502 = vmatprep.mubr.f32.mxu0 0.0
      %1503 = vmatmul.mubr.f32.gmra.mxu0 %v497
      %v1504 = vpop.f32.mrf.mxu0
      %v1505 = vadd.f32 %v1357, %v1504
      %v1506 = vpop.f32.mrf.mxu0
      %1507 = vmatprep.mubr.f32.mxu0 0.0
      %1508 = vmatmul.mubr.f32.gmra.mxu0 %v499
      %v1509 = vpop.f32.mrf.mxu0
      %v1510 = vadd.f32 %v1362, %v1509
      %v1511 = vpop.f32.mrf.mxu0
      %1512 = vmatprep.mubr.f32.mxu0 0.0
      %1513 = vmatmul.mubr.f32.gmra.mxu0 %v501
      %v1514 = vpop.f32.mrf.mxu0
      %v1515 = vadd.f32 %v1367, %v1514
      %v1516 = vpop.f32.mrf.mxu0
      %1517 = vmatprep.mubr.f32.mxu0 0.0
      %1518 = vmatmul.mubr.f32.gmra.mxu0 %v503
      %v1519 = vpop.f32.mrf.mxu0
      %v1520 = vadd.f32 %v1372, %v1519
      %v1521 = vpop.f32.mrf.mxu0
      %1522 = vmatprep.mubr.f32.mxu0 0.0
      %1523 = vmatmul.mubr.f32.gmra.mxu0 %v505
      %v1524 = vpop.f32.mrf.mxu0
      %v1525 = vadd.f32 %v1377, %v1524
      %v1526 = vpop.f32.mrf.mxu0
      %1527 = vmatprep.mubr.f32.mxu0 0.0
      %1528 = vmatmul.mubr.f32.gmra.mxu0 %v507
      %v1529 = vpop.f32.mrf.mxu0
      %v1530 = vadd.f32 %v1382, %v1529
      %v1531 = vpop.f32.mrf.mxu0
      %1532 = vmatprep.mubr.f32.mxu0 0.0
      %1533 = vmatmul.mubr.f32.gmra.mxu0 %v509
      %v1534 = vpop.f32.mrf.mxu0
      %v1535 = vadd.f32 %v1387, %v1534
      %v1536 = vpop.f32.mrf.mxu0
      %1537 = vmatprep.mubr.f32.mxu0 0.0
      %1538 = vmatmul.mubr.f32.gmra.mxu0 %v511
      %v1539 = vpop.f32.mrf.mxu0
      %v1540 = vadd.f32 %v1392, %v1539
      %v1541 = vpop.f32.mrf.mxu0
      %1542 = vmatprep.mubr.f32.mxu0 0.0
      %1543 = vmatmul.mubr.f32.gmra.mxu0 %v513
      %v1544 = vpop.f32.mrf.mxu0
      %v1545 = vadd.f32 %v1397, %v1544
      %v1546 = vpop.f32.mrf.mxu0
      %1547 = vmatprep.mubr.f32.mxu0 0.0
      %1548 = vmatmul.mubr.f32.gmra.mxu0 %v515
      %v1549 = vpop.f32.mrf.mxu0
      %v1550 = vadd.f32 %v1402, %v1549
      %v1551 = vpop.f32.mrf.mxu0
      %1552 = vmatprep.mubr.f32.mxu0 0.0
      %1553 = vmatmul.mubr.f32.gmra.mxu0 %v517
      %v1554 = vpop.f32.mrf.mxu0
      %v1555 = vadd.f32 %v1407, %v1554
      %v1556 = vpop.f32.mrf.mxu0
      %1557 = vdwg.mxu0
      %s1558 = scalar_lea.vmem %s2, 24
      %v1559 = vld [vmem:[%s1558] sm:$0xf]
      %v1561 = vsel %vm519, %v1559, 0
      %1563 = vmatprep.subr.mxu0 0.0
      %1564 = vmatpush1.msra.mxu0 0.0
      %1565 = vmatprep.subr.mxu0 0.0
      %1566 = vmatpush1.msra.mxu0 0.0
      %1567 = vmatprep.subr.mxu0 0.0
      %1568 = vmatpush1.msra.mxu0 0.0
      %1569 = vmatprep.subr.mxu0 0.0
      %1570 = vmatpush1.msra.mxu0 0.0
      %1571 = vmatprep.subr.mxu0 0.0
      %1572 = vmatpush1.msra.mxu0 0.0
      %1573 = vmatprep.subr.mxu0 0.0
      %1574 = vmatpush1.msra.mxu0 0.0
      %1575 = vmatprep.subr.mxu0 0.0
      %1576 = vmatpush1.msra.mxu0 0.0
      %1577 = vmatprep.subr.mxu0 0.0
      %1578 = vmatpush1.msra.mxu0 0.0
      %1579 = vmatprep.subr.mxu0 0.0
      %1580 = vmatpush1.msra.mxu0 0.0
      %1581 = vmatprep.subr.mxu0 0.0
      %1582 = vmatpush1.msra.mxu0 0.0
      %1583 = vmatprep.subr.mxu0 0.0
      %1584 = vmatpush1.msra.mxu0 0.0
      %1585 = vmatprep.subr.mxu0 0.0
      %1586 = vmatpush1.msra.mxu0 0.0
      %1587 = vmatprep.subr.mxu0 0.0
      %1588 = vmatpush1.msra.mxu0 0.0
      %1589 = vmatprep.subr.mxu0 0.0
      %1590 = vmatpush1.msra.mxu0 0.0
      %1591 = vmatprep.subr.mxu0 0.0
      %1592 = vmatpush1.msra.mxu0 0.0
      %1593 = vmatprep.subr.mxu0 0.0
      %1594 = vmatpush1.msra.mxu0 %v1561
      %1595 = vmatprep.subr.mxu0 0.0
      %1596 = vmatpush2.msra.mxu0 0.0
      %1597 = vmatprep.subr.mxu0 0.0
      %1598 = vmatpush2.msra.mxu0 0.0
      %1599 = vmatprep.subr.mxu0 0.0
      %1600 = vmatpush2.msra.mxu0 0.0
      %1601 = vmatprep.subr.mxu0 0.0
      %1602 = vmatpush2.msra.mxu0 0.0
      %1603 = vmatprep.subr.mxu0 0.0
      %1604 = vmatpush2.msra.mxu0 0.0
      %1605 = vmatprep.subr.mxu0 0.0
      %1606 = vmatpush2.msra.mxu0 0.0
      %1607 = vmatprep.subr.mxu0 0.0
      %1608 = vmatpush2.msra.mxu0 0.0
      %1609 = vmatprep.subr.mxu0 0.0
      %1610 = vmatpush2.msra.mxu0 0.0
      %1611 = vmatprep.subr.mxu0 0.0
      %1612 = vmatpush2.msra.mxu0 0.0
      %1613 = vmatprep.subr.mxu0 0.0
      %1614 = vmatpush2.msra.mxu0 0.0
      %1615 = vmatprep.subr.mxu0 0.0
      %1616 = vmatpush2.msra.mxu0 0.0
      %1617 = vmatprep.subr.mxu0 0.0
      %1618 = vmatpush2.msra.mxu0 0.0
      %1619 = vmatprep.subr.mxu0 0.0
      %1620 = vmatpush2.msra.mxu0 0.0
      %1621 = vmatprep.subr.mxu0 0.0
      %1622 = vmatpush2.msra.mxu0 0.0
      %1623 = vmatprep.subr.mxu0 0.0
      %1624 = vmatpush2.msra.mxu0 0.0
      %1625 = vmatprep.subr.mxu0 0.0
      %1626 = vmatpush2.msra.mxu0 0.0
      %1627 = vmatprep.mubr.f32.mxu0 0.0
      %1628 = vmatmul.mubr.f32.gmra.mxu0 %v491
      %v1629 = vpop.f32.mrf.mxu0
      %v1630 = vadd.f32 0.0, %v1629
      %v1631 = vpop.f32.mrf.mxu0
      %1632 = vmatprep.mubr.f32.mxu0 0.0
      %1633 = vmatmul.mubr.f32.gmra.mxu0 %v493
      %v1634 = vpop.f32.mrf.mxu0
      %v1635 = vadd.f32 0.0, %v1634
      %v1636 = vpop.f32.mrf.mxu0
      %1637 = vmatprep.mubr.f32.mxu0 0.0
      %1638 = vmatmul.mubr.f32.gmra.mxu0 %v495
      %v1639 = vpop.f32.mrf.mxu0
      %v1640 = vadd.f32 0.0, %v1639
      %v1641 = vpop.f32.mrf.mxu0
      %1642 = vmatprep.mubr.f32.mxu0 0.0
      %1643 = vmatmul.mubr.f32.gmra.mxu0 %v497
      %v1644 = vpop.f32.mrf.mxu0
      %v1645 = vadd.f32 0.0, %v1644
      %v1646 = vpop.f32.mrf.mxu0
      %1647 = vmatprep.mubr.f32.mxu0 0.0
      %1648 = vmatmul.mubr.f32.gmra.mxu0 %v499
      %v1649 = vpop.f32.mrf.mxu0
      %v1650 = vadd.f32 0.0, %v1649
      %v1651 = vpop.f32.mrf.mxu0
      %1652 = vmatprep.mubr.f32.mxu0 0.0
      %1653 = vmatmul.mubr.f32.gmra.mxu0 %v501
      %v1654 = vpop.f32.mrf.mxu0
      %v1655 = vadd.f32 0.0, %v1654
      %v1656 = vpop.f32.mrf.mxu0
      %1657 = vmatprep.mubr.f32.mxu0 0.0
      %1658 = vmatmul.mubr.f32.gmra.mxu0 %v503
      %v1659 = vpop.f32.mrf.mxu0
      %v1660 = vadd.f32 0.0, %v1659
      %v1661 = vpop.f32.mrf.mxu0
      %1662 = vmatprep.mubr.f32.mxu0 0.0
      %1663 = vmatmul.mubr.f32.gmra.mxu0 %v505
      %v1664 = vpop.f32.mrf.mxu0
      %v1665 = vadd.f32 0.0, %v1664
      %v1666 = vpop.f32.mrf.mxu0
      %1667 = vmatprep.mubr.f32.mxu0 0.0
      %1668 = vmatmul.mubr.f32.gmra.mxu0 %v507
      %v1669 = vpop.f32.mrf.mxu0
      %v1670 = vadd.f32 0.0, %v1669
      %v1671 = vpop.f32.mrf.mxu0
      %1672 = vmatprep.mubr.f32.mxu0 0.0
      %1673 = vmatmul.mubr.f32.gmra.mxu0 %v509
      %v1674 = vpop.f32.mrf.mxu0
      %v1675 = vadd.f32 0.0, %v1674
      %v1676 = vpop.f32.mrf.mxu0
      %1677 = vmatprep.mubr.f32.mxu0 0.0
      %1678 = vmatmul.mubr.f32.gmra.mxu0 %v511
      %v1679 = vpop.f32.mrf.mxu0
      %v1680 = vadd.f32 0.0, %v1679
      %v1681 = vpop.f32.mrf.mxu0
      %1682 = vmatprep.mubr.f32.mxu0 0.0
      %1683 = vmatmul.mubr.f32.gmra.mxu0 %v513
      %v1684 = vpop.f32.mrf.mxu0
      %v1685 = vadd.f32 0.0, %v1684
      %v1686 = vpop.f32.mrf.mxu0
      %1687 = vmatprep.mubr.f32.mxu0 0.0
      %1688 = vmatmul.mubr.f32.gmra.mxu0 %v515
      %v1689 = vpop.f32.mrf.mxu0
      %v1690 = vadd.f32 0.0, %v1689
      %v1691 = vpop.f32.mrf.mxu0
      %1692 = vmatprep.mubr.f32.mxu0 0.0
      %1693 = vmatmul.mubr.f32.gmra.mxu0 %v517
      %v1694 = vpop.f32.mrf.mxu0
      %v1695 = vadd.f32 0.0, %v1694
      %v1696 = vpop.f32.mrf.mxu0
      %1697 = vmatprep.mubr.f32.mxu0 0.0
      %1698 = vmatmul.mubr.f32.gmra.mxu0 %v1020
      %v1699 = vpop.f32.mrf.mxu0
      %v1700 = vadd.f32 0.0, %v1699
      %v1701 = vpop.f32.mrf.mxu0
      %1702 = vmatprep.mubr.f32.mxu0 0.0
      %1703 = vmatmul.mubr.f32.gmra.mxu0 %v1022
      %v1704 = vpop.f32.mrf.mxu0
      %v1705 = vadd.f32 0.0, %v1704
      %v1706 = vpop.f32.mrf.mxu0
      %1707 = vdwg.mxu0
      %v1708 = vadd.f32 %v1480, %v1630
      %v1709 = vadd.f32 %v1485, %v1635
      %v1710 = vadd.f32 %v1490, %v1640
      %v1711 = vadd.f32 %v1495, %v1645
      %v1712 = vadd.f32 %v1500, %v1650
      %v1713 = vadd.f32 %v1505, %v1655
      %v1714 = vadd.f32 %v1510, %v1660
      %v1715 = vadd.f32 %v1515, %v1665
      %v1716 = vadd.f32 %v1520, %v1670
      %v1717 = vadd.f32 %v1525, %v1675
      %v1718 = vadd.f32 %v1530, %v1680
      %v1719 = vadd.f32 %v1535, %v1685
      %v1720 = vadd.f32 %v1540, %v1690
      %v1721 = vadd.f32 %v1545, %v1695
      %v1722 = vadd.f32 %v1550, %v1700
      %v1723 = vadd.f32 %v1555, %v1705
      %s1724 = scalar_lea.vmem %s2, 28
      %v1725 = vld [vmem:[%s1724] sm:$0xf]
      %v1726 = vsel %vm486, %v466, 0
      %v1728 = vsel %vm486, %v468, 0
      %v1731 = vsel %vm519, %v1725, 0
      %1733 = vmatprep.subr.mxu0 0.0
      %1734 = vmatpush1.msra.mxu0 0.0
      %1735 = vmatprep.subr.mxu0 0.0
      %1736 = vmatpush1.msra.mxu0 0.0
      %1737 = vmatprep.subr.mxu0 0.0
      %1738 = vmatpush1.msra.mxu0 0.0
      %1739 = vmatprep.subr.mxu0 0.0
      %1740 = vmatpush1.msra.mxu0 0.0
      %1741 = vmatprep.subr.mxu0 0.0
      %1742 = vmatpush1.msra.mxu0 0.0
      %1743 = vmatprep.subr.mxu0 0.0
      %1744 = vmatpush1.msra.mxu0 0.0
      %1745 = vmatprep.subr.mxu0 0.0
      %1746 = vmatpush1.msra.mxu0 0.0
      %1747 = vmatprep.subr.mxu0 0.0
      %1748 = vmatpush1.msra.mxu0 0.0
      %1749 = vmatprep.subr.mxu0 0.0
      %1750 = vmatpush1.msra.mxu0 0.0
      %1751 = vmatprep.subr.mxu0 0.0
      %1752 = vmatpush1.msra.mxu0 0.0
      %1753 = vmatprep.subr.mxu0 0.0
      %1754 = vmatpush1.msra.mxu0 0.0
      %1755 = vmatprep.subr.mxu0 0.0
      %1756 = vmatpush1.msra.mxu0 0.0
      %1757 = vmatprep.subr.mxu0 0.0
      %1758 = vmatpush1.msra.mxu0 0.0
      %1759 = vmatprep.subr.mxu0 0.0
      %1760 = vmatpush1.msra.mxu0 0.0
      %1761 = vmatprep.subr.mxu0 0.0
      %1762 = vmatpush1.msra.mxu0 0.0
      %1763 = vmatprep.subr.mxu0 0.0
      %1764 = vmatpush1.msra.mxu0 %v1731
      %1765 = vmatprep.subr.mxu0 0.0
      %1766 = vmatpush2.msra.mxu0 0.0
      %1767 = vmatprep.subr.mxu0 0.0
      %1768 = vmatpush2.msra.mxu0 0.0
      %1769 = vmatprep.subr.mxu0 0.0
      %1770 = vmatpush2.msra.mxu0 0.0
      %1771 = vmatprep.subr.mxu0 0.0
      %1772 = vmatpush2.msra.mxu0 0.0
      %1773 = vmatprep.subr.mxu0 0.0
      %1774 = vmatpush2.msra.mxu0 0.0
      %1775 = vmatprep.subr.mxu0 0.0
      %1776 = vmatpush2.msra.mxu0 0.0
      %1777 = vmatprep.subr.mxu0 0.0
      %1778 = vmatpush2.msra.mxu0 0.0
      %1779 = vmatprep.subr.mxu0 0.0
      %1780 = vmatpush2.msra.mxu0 0.0
      %1781 = vmatprep.subr.mxu0 0.0
      %1782 = vmatpush2.msra.mxu0 0.0
      %1783 = vmatprep.subr.mxu0 0.0
      %1784 = vmatpush2.msra.mxu0 0.0
      %1785 = vmatprep.subr.mxu0 0.0
      %1786 = vmatpush2.msra.mxu0 0.0
      %1787 = vmatprep.subr.mxu0 0.0
      %1788 = vmatpush2.msra.mxu0 0.0
      %1789 = vmatprep.subr.mxu0 0.0
      %1790 = vmatpush2.msra.mxu0 0.0
      %1791 = vmatprep.subr.mxu0 0.0
      %1792 = vmatpush2.msra.mxu0 0.0
      %1793 = vmatprep.subr.mxu0 0.0
      %1794 = vmatpush2.msra.mxu0 0.0
      %1795 = vmatprep.subr.mxu0 0.0
      %1796 = vmatpush2.msra.mxu0 0.0
      %1797 = vmatprep.mubr.f32.mxu0 0.0
      %1798 = vmatmul.mubr.f32.gmra.mxu0 %v1234
      %v1799 = vpop.f32.mrf.mxu0
      %v1800 = vadd.f32 0.0, %v1799
      %v1801 = vpop.f32.mrf.mxu0
      %1802 = vmatprep.mubr.f32.mxu0 0.0
      %1803 = vmatmul.mubr.f32.gmra.mxu0 %v1236
      %v1804 = vpop.f32.mrf.mxu0
      %v1805 = vadd.f32 0.0, %v1804
      %v1806 = vpop.f32.mrf.mxu0
      %1807 = vmatprep.mubr.f32.mxu0 0.0
      %1808 = vmatmul.mubr.f32.gmra.mxu0 %v1238
      %v1809 = vpop.f32.mrf.mxu0
      %v1810 = vadd.f32 0.0, %v1809
      %v1811 = vpop.f32.mrf.mxu0
      %1812 = vmatprep.mubr.f32.mxu0 0.0
      %1813 = vmatmul.mubr.f32.gmra.mxu0 %v1240
      %v1814 = vpop.f32.mrf.mxu0
      %v1815 = vadd.f32 0.0, %v1814
      %v1816 = vpop.f32.mrf.mxu0
      %1817 = vmatprep.mubr.f32.mxu0 0.0
      %1818 = vmatmul.mubr.f32.gmra.mxu0 %v1242
      %v1819 = vpop.f32.mrf.mxu0
      %v1820 = vadd.f32 0.0, %v1819
      %v1821 = vpop.f32.mrf.mxu0
      %1822 = vmatprep.mubr.f32.mxu0 0.0
      %1823 = vmatmul.mubr.f32.gmra.mxu0 %v1244
      %v1824 = vpop.f32.mrf.mxu0
      %v1825 = vadd.f32 0.0, %v1824
      %v1826 = vpop.f32.mrf.mxu0
      %1827 = vmatprep.mubr.f32.mxu0 0.0
      %1828 = vmatmul.mubr.f32.gmra.mxu0 %v1246
      %v1829 = vpop.f32.mrf.mxu0
      %v1830 = vadd.f32 0.0, %v1829
      %v1831 = vpop.f32.mrf.mxu0
      %1832 = vmatprep.mubr.f32.mxu0 0.0
      %1833 = vmatmul.mubr.f32.gmra.mxu0 %v1248
      %v1834 = vpop.f32.mrf.mxu0
      %v1835 = vadd.f32 0.0, %v1834
      %v1836 = vpop.f32.mrf.mxu0
      %1837 = vmatprep.mubr.f32.mxu0 0.0
      %1838 = vmatmul.mubr.f32.gmra.mxu0 %v1250
      %v1839 = vpop.f32.mrf.mxu0
      %v1840 = vadd.f32 0.0, %v1839
      %v1841 = vpop.f32.mrf.mxu0
      %1842 = vmatprep.mubr.f32.mxu0 0.0
      %1843 = vmatmul.mubr.f32.gmra.mxu0 %v1252
      %v1844 = vpop.f32.mrf.mxu0
      %v1845 = vadd.f32 0.0, %v1844
      %v1846 = vpop.f32.mrf.mxu0
      %1847 = vmatprep.mubr.f32.mxu0 0.0
      %1848 = vmatmul.mubr.f32.gmra.mxu0 %v1254
      %v1849 = vpop.f32.mrf.mxu0
      %v1850 = vadd.f32 0.0, %v1849
      %v1851 = vpop.f32.mrf.mxu0
      %1852 = vmatprep.mubr.f32.mxu0 0.0
      %1853 = vmatmul.mubr.f32.gmra.mxu0 %v1256
      %v1854 = vpop.f32.mrf.mxu0
      %v1855 = vadd.f32 0.0, %v1854
      %v1856 = vpop.f32.mrf.mxu0
      %1857 = vmatprep.mubr.f32.mxu0 0.0
      %1858 = vmatmul.mubr.f32.gmra.mxu0 %v1258
      %v1859 = vpop.f32.mrf.mxu0
      %v1860 = vadd.f32 0.0, %v1859
      %v1861 = vpop.f32.mrf.mxu0
      %1862 = vmatprep.mubr.f32.mxu0 0.0
      %1863 = vmatmul.mubr.f32.gmra.mxu0 %v1260
      %v1864 = vpop.f32.mrf.mxu0
      %v1865 = vadd.f32 0.0, %v1864
      %v1866 = vpop.f32.mrf.mxu0
      %1867 = vmatprep.mubr.f32.mxu0 0.0
      %1868 = vmatmul.mubr.f32.gmra.mxu0 %v1726
      %v1869 = vpop.f32.mrf.mxu0
      %v1870 = vadd.f32 0.0, %v1869
      %v1871 = vpop.f32.mrf.mxu0
      %1872 = vmatprep.mubr.f32.mxu0 0.0
      %1873 = vmatmul.mubr.f32.gmra.mxu0 %v1728
      %v1874 = vpop.f32.mrf.mxu0
      %v1875 = vadd.f32 0.0, %v1874
      %v1876 = vpop.f32.mrf.mxu0
      %1877 = vdwg.mxu0
      %v1878 = vadd.f32 %v1708, %v1800
      %v1879 = vadd.f32 %v1709, %v1805
      %v1880 = vadd.f32 %v1710, %v1810
      %v1881 = vadd.f32 %v1711, %v1815
      %v1882 = vadd.f32 %v1712, %v1820
      %v1883 = vadd.f32 %v1713, %v1825
      %v1884 = vadd.f32 %v1714, %v1830
      %v1885 = vadd.f32 %v1715, %v1835
      %v1886 = vadd.f32 %v1716, %v1840
      %v1887 = vadd.f32 %v1717, %v1845
      %v1888 = vadd.f32 %v1718, %v1850
      %v1889 = vadd.f32 %v1719, %v1855
      %v1890 = vadd.f32 %v1720, %v1860
      %v1891 = vadd.f32 %v1721, %v1865
      %v1892 = vadd.f32 %v1722, %v1870
      %v1893 = vadd.f32 %v1723, %v1875
      %v1894 = vadd.f32 %v1878, %v1192
      %v1895 = vadd.f32 %v1879, %v1192
      %v1896 = vadd.f32 %v1880, %v1192
      %v1897 = vadd.f32 %v1881, %v1192
      %v1898 = vadd.f32 %v1882, %v1192
      %v1899 = vadd.f32 %v1883, %v1192
      %v1900 = vadd.f32 %v1884, %v1192
      %v1901 = vadd.f32 %v1885, %v1192
      %v1902 = vadd.f32 %v1886, %v1192
      %v1903 = vadd.f32 %v1887, %v1192
      %v1904 = vadd.f32 %v1888, %v1192
      %v1905 = vadd.f32 %v1889, %v1192
      %v1906 = vadd.f32 %v1890, %v1192
      %v1907 = vadd.f32 %v1891, %v1192
      %v1908 = vadd.f32 %v1892, %v1192
      %v1909 = vadd.f32 %v1893, %v1192
      %1926 = vrot.lane.b32.xlu0 %v1894, 4
      %v1927 = vpop.permute.xlu0 %1926
      %1928 = vrot.lane.b32.xlu0 %v1895, 4
      %v1929 = vpop.permute.xlu0 %1928
      %1930 = vrot.lane.b32.xlu0 %v1896, 4
      %v1931 = vpop.permute.xlu0 %1930
      %1932 = vrot.lane.b32.xlu0 %v1897, 4
      %v1933 = vpop.permute.xlu0 %1932
      %1934 = vrot.lane.b32.xlu0 %v1898, 4
      %v1935 = vpop.permute.xlu0 %1934
      %1936 = vrot.lane.b32.xlu0 %v1899, 4
      %v1937 = vpop.permute.xlu0 %1936
      %1938 = vrot.lane.b32.xlu0 %v1900, 4
      %v1939 = vpop.permute.xlu0 %1938
      %1940 = vrot.lane.b32.xlu0 %v1901, 4
      %v1941 = vpop.permute.xlu0 %1940
      %1942 = vrot.lane.b32.xlu0 %v1902, 4
      %v1943 = vpop.permute.xlu0 %1942
      %1944 = vrot.lane.b32.xlu0 %v1903, 4
      %v1945 = vpop.permute.xlu0 %1944
      %1946 = vrot.lane.b32.xlu0 %v1904, 4
      %v1947 = vpop.permute.xlu0 %1946
      %1948 = vrot.lane.b32.xlu0 %v1905, 4
      %v1949 = vpop.permute.xlu0 %1948
      %1950 = vrot.lane.b32.xlu0 %v1906, 4
      %v1951 = vpop.permute.xlu0 %1950
      %1952 = vrot.lane.b32.xlu0 %v1907, 4
      %v1953 = vpop.permute.xlu0 %1952
      %1954 = vrot.lane.b32.xlu0 %v1908, 4
      %v1955 = vpop.permute.xlu0 %1954
      %1956 = vrot.lane.b32.xlu0 %v1909, 4
      %v1957 = vpop.permute.xlu0 %1956
      %vm1974 = vcmask 64544
      %1975 = vst.msk [vmem:[%s318] sm:$0xff] %vm1974, %v1927
      %1976 = vst.msk [vmem:[%s318 + $0x8] sm:$0xff] %vm1974, %v1929
      %1977 = vst.msk [vmem:[%s318 + $0x20] sm:$0xff] %vm1974, %v1931
      %1978 = vst.msk [vmem:[%s318 + $0x28] sm:$0xff] %vm1974, %v1933
      %1979 = vst.msk [vmem:[%s318 + $0x40] sm:$0xff] %vm1974, %v1935
      %1980 = vst.msk [vmem:[%s318 + $0x48] sm:$0xff] %vm1974, %v1937
      %1981 = vst.msk [vmem:[%s318 + $0x60] sm:$0xff] %vm1974, %v1939
      %1982 = vst.msk [vmem:[%s318 + $0x68] sm:$0xff] %vm1974, %v1941
      %1983 = vst.msk [vmem:[%s318 + $0x80] sm:$0xff] %vm1974, %v1943
      %1984 = vst.msk [vmem:[%s318 + $0x88] sm:$0xff] %vm1974, %v1945
      %1985 = vst.msk [vmem:[%s318 + $0xa0] sm:$0xff] %vm1974, %v1947
      %1986 = vst.msk [vmem:[%s318 + $0xa8] sm:$0xff] %vm1974, %v1949
      %1987 = vst.msk [vmem:[%s318 + $0xc0] sm:$0xff] %vm1974, %v1951
      %1988 = vst.msk [vmem:[%s318 + $0xc8] sm:$0xff] %vm1974, %v1953
      %1989 = vst.msk [vmem:[%s318 + $0xe0] sm:$0xff] %vm1974, %v1955
      %1990 = vst.msk [vmem:[%s318 + $0xe8] sm:$0xff] %vm1974, %v1957
      %s1991 = scalar_lea.vmem %s2, 32
      %v1992 = vld [vmem:[%s1991] sm:$0xf]
      %s1993 = scalar_lea.vmem %s2, 36
      %v1994 = vld [vmem:[%s1993] sm:$0xf]
      %v1996 = vsel %vm519, %v1994, 0
      %1998 = vmatprep.subr.mxu0 0.0
      %1999 = vmatpush1.msra.mxu0 0.0
      %2000 = vmatprep.subr.mxu0 0.0
      %2001 = vmatpush1.msra.mxu0 0.0
      %2002 = vmatprep.subr.mxu0 0.0
      %2003 = vmatpush1.msra.mxu0 0.0
      %2004 = vmatprep.subr.mxu0 0.0
      %2005 = vmatpush1.msra.mxu0 0.0
      %2006 = vmatprep.subr.mxu0 0.0
      %2007 = vmatpush1.msra.mxu0 0.0
      %2008 = vmatprep.subr.mxu0 0.0
      %2009 = vmatpush1.msra.mxu0 0.0
      %2010 = vmatprep.subr.mxu0 0.0
      %2011 = vmatpush1.msra.mxu0 0.0
      %2012 = vmatprep.subr.mxu0 0.0
      %2013 = vmatpush1.msra.mxu0 0.0
      %2014 = vmatprep.subr.mxu0 0.0
      %2015 = vmatpush1.msra.mxu0 0.0
      %2016 = vmatprep.subr.mxu0 0.0
      %2017 = vmatpush1.msra.mxu0 0.0
      %2018 = vmatprep.subr.mxu0 0.0
      %2019 = vmatpush1.msra.mxu0 0.0
      %2020 = vmatprep.subr.mxu0 0.0
      %2021 = vmatpush1.msra.mxu0 0.0
      %2022 = vmatprep.subr.mxu0 0.0
      %2023 = vmatpush1.msra.mxu0 0.0
      %2024 = vmatprep.subr.mxu0 0.0
      %2025 = vmatpush1.msra.mxu0 0.0
      %2026 = vmatprep.subr.mxu0 0.0
      %2027 = vmatpush1.msra.mxu0 0.0
      %2028 = vmatprep.subr.mxu0 0.0
      %2029 = vmatpush1.msra.mxu0 %v1996
      %2030 = vmatprep.subr.mxu0 0.0
      %2031 = vmatpush2.msra.mxu0 0.0
      %2032 = vmatprep.subr.mxu0 0.0
      %2033 = vmatpush2.msra.mxu0 0.0
      %2034 = vmatprep.subr.mxu0 0.0
      %2035 = vmatpush2.msra.mxu0 0.0
      %2036 = vmatprep.subr.mxu0 0.0
      %2037 = vmatpush2.msra.mxu0 0.0
      %2038 = vmatprep.subr.mxu0 0.0
      %2039 = vmatpush2.msra.mxu0 0.0
      %2040 = vmatprep.subr.mxu0 0.0
      %2041 = vmatpush2.msra.mxu0 0.0
      %2042 = vmatprep.subr.mxu0 0.0
      %2043 = vmatpush2.msra.mxu0 0.0
      %2044 = vmatprep.subr.mxu0 0.0
      %2045 = vmatpush2.msra.mxu0 0.0
      %2046 = vmatprep.subr.mxu0 0.0
      %2047 = vmatpush2.msra.mxu0 0.0
      %2048 = vmatprep.subr.mxu0 0.0
      %2049 = vmatpush2.msra.mxu0 0.0
      %2050 = vmatprep.subr.mxu0 0.0
      %2051 = vmatpush2.msra.mxu0 0.0
      %2052 = vmatprep.subr.mxu0 0.0
      %2053 = vmatpush2.msra.mxu0 0.0
      %2054 = vmatprep.subr.mxu0 0.0
      %2055 = vmatpush2.msra.mxu0 0.0
      %2056 = vmatprep.subr.mxu0 0.0
      %2057 = vmatpush2.msra.mxu0 0.0
      %2058 = vmatprep.subr.mxu0 0.0
      %2059 = vmatpush2.msra.mxu0 0.0
      %2060 = vmatprep.subr.mxu0 0.0
      %2061 = vmatpush2.msra.mxu0 0.0
      %2062 = vmatprep.mubr.f32.mxu0 0.0
      %2063 = vmatmul.mubr.f32.gmra.mxu0 %v491
      %v2064 = vpop.f32.mrf.mxu0
      %v2065 = vadd.f32 0.0, %v2064
      %v2066 = vpop.f32.mrf.mxu0
      %2067 = vmatprep.mubr.f32.mxu0 0.0
      %2068 = vmatmul.mubr.f32.gmra.mxu0 %v493
      %v2069 = vpop.f32.mrf.mxu0
      %v2070 = vadd.f32 0.0, %v2069
      %v2071 = vpop.f32.mrf.mxu0
      %2072 = vmatprep.mubr.f32.mxu0 0.0
      %2073 = vmatmul.mubr.f32.gmra.mxu0 %v495
      %v2074 = vpop.f32.mrf.mxu0
      %v2075 = vadd.f32 0.0, %v2074
      %v2076 = vpop.f32.mrf.mxu0
      %2077 = vmatprep.mubr.f32.mxu0 0.0
      %2078 = vmatmul.mubr.f32.gmra.mxu0 %v497
      %v2079 = vpop.f32.mrf.mxu0
      %v2080 = vadd.f32 0.0, %v2079
      %v2081 = vpop.f32.mrf.mxu0
      %2082 = vmatprep.mubr.f32.mxu0 0.0
      %2083 = vmatmul.mubr.f32.gmra.mxu0 %v499
      %v2084 = vpop.f32.mrf.mxu0
      %v2085 = vadd.f32 0.0, %v2084
      %v2086 = vpop.f32.mrf.mxu0
      %2087 = vmatprep.mubr.f32.mxu0 0.0
      %2088 = vmatmul.mubr.f32.gmra.mxu0 %v501
      %v2089 = vpop.f32.mrf.mxu0
      %v2090 = vadd.f32 0.0, %v2089
      %v2091 = vpop.f32.mrf.mxu0
      %2092 = vmatprep.mubr.f32.mxu0 0.0
      %2093 = vmatmul.mubr.f32.gmra.mxu0 %v503
      %v2094 = vpop.f32.mrf.mxu0
      %v2095 = vadd.f32 0.0, %v2094
      %v2096 = vpop.f32.mrf.mxu0
      %2097 = vmatprep.mubr.f32.mxu0 0.0
      %2098 = vmatmul.mubr.f32.gmra.mxu0 %v505
      %v2099 = vpop.f32.mrf.mxu0
      %v2100 = vadd.f32 0.0, %v2099
      %v2101 = vpop.f32.mrf.mxu0
      %2102 = vmatprep.mubr.f32.mxu0 0.0
      %2103 = vmatmul.mubr.f32.gmra.mxu0 %v507
      %v2104 = vpop.f32.mrf.mxu0
      %v2105 = vadd.f32 0.0, %v2104
      %v2106 = vpop.f32.mrf.mxu0
      %2107 = vmatprep.mubr.f32.mxu0 0.0
      %2108 = vmatmul.mubr.f32.gmra.mxu0 %v509
      %v2109 = vpop.f32.mrf.mxu0
      %v2110 = vadd.f32 0.0, %v2109
      %v2111 = vpop.f32.mrf.mxu0
      %2112 = vmatprep.mubr.f32.mxu0 0.0
      %2113 = vmatmul.mubr.f32.gmra.mxu0 %v511
      %v2114 = vpop.f32.mrf.mxu0
      %v2115 = vadd.f32 0.0, %v2114
      %v2116 = vpop.f32.mrf.mxu0
      %2117 = vmatprep.mubr.f32.mxu0 0.0
      %2118 = vmatmul.mubr.f32.gmra.mxu0 %v513
      %v2119 = vpop.f32.mrf.mxu0
      %v2120 = vadd.f32 0.0, %v2119
      %v2121 = vpop.f32.mrf.mxu0
      %2122 = vmatprep.mubr.f32.mxu0 0.0
      %2123 = vmatmul.mubr.f32.gmra.mxu0 %v515
      %v2124 = vpop.f32.mrf.mxu0
      %v2125 = vadd.f32 0.0, %v2124
      %v2126 = vpop.f32.mrf.mxu0
      %2127 = vmatprep.mubr.f32.mxu0 0.0
      %2128 = vmatmul.mubr.f32.gmra.mxu0 %v517
      %v2129 = vpop.f32.mrf.mxu0
      %v2130 = vadd.f32 0.0, %v2129
      %v2131 = vpop.f32.mrf.mxu0
      %2132 = vmatprep.mubr.f32.mxu0 0.0
      %2133 = vmatmul.mubr.f32.gmra.mxu0 %v1020
      %v2134 = vpop.f32.mrf.mxu0
      %v2135 = vadd.f32 0.0, %v2134
      %v2136 = vpop.f32.mrf.mxu0
      %2137 = vmatprep.mubr.f32.mxu0 0.0
      %2138 = vmatmul.mubr.f32.gmra.mxu0 %v1022
      %v2139 = vpop.f32.mrf.mxu0
      %v2140 = vadd.f32 0.0, %v2139
      %v2141 = vpop.f32.mrf.mxu0
      %2142 = vdwg.mxu0
      %v2144 = vsel %vm519, %v1992, 0
      %2146 = vmatprep.subr.mxu0 0.0
      %2147 = vmatpush1.msra.mxu0 0.0
      %2148 = vmatprep.subr.mxu0 0.0
      %2149 = vmatpush1.msra.mxu0 0.0
      %2150 = vmatprep.subr.mxu0 0.0
      %2151 = vmatpush1.msra.mxu0 0.0
      %2152 = vmatprep.subr.mxu0 0.0
      %2153 = vmatpush1.msra.mxu0 0.0
      %2154 = vmatprep.subr.mxu0 0.0
      %2155 = vmatpush1.msra.mxu0 0.0
      %2156 = vmatprep.subr.mxu0 0.0
      %2157 = vmatpush1.msra.mxu0 0.0
      %2158 = vmatprep.subr.mxu0 0.0
      %2159 = vmatpush1.msra.mxu0 0.0
      %2160 = vmatprep.subr.mxu0 0.0
      %2161 = vmatpush1.msra.mxu0 0.0
      %2162 = vmatprep.subr.mxu0 0.0
      %2163 = vmatpush1.msra.mxu0 0.0
      %2164 = vmatprep.subr.mxu0 0.0
      %2165 = vmatpush1.msra.mxu0 0.0
      %2166 = vmatprep.subr.mxu0 0.0
      %2167 = vmatpush1.msra.mxu0 0.0
      %2168 = vmatprep.subr.mxu0 0.0
      %2169 = vmatpush1.msra.mxu0 0.0
      %2170 = vmatprep.subr.mxu0 0.0
      %2171 = vmatpush1.msra.mxu0 0.0
      %2172 = vmatprep.subr.mxu0 0.0
      %2173 = vmatpush1.msra.mxu0 0.0
      %2174 = vmatprep.subr.mxu0 0.0
      %2175 = vmatpush1.msra.mxu0 0.0
      %2176 = vmatprep.subr.mxu0 0.0
      %2177 = vmatpush1.msra.mxu0 %v2144
      %2178 = vmatprep.subr.mxu0 0.0
      %2179 = vmatpush2.msra.mxu0 0.0
      %2180 = vmatprep.subr.mxu0 0.0
      %2181 = vmatpush2.msra.mxu0 0.0
      %2182 = vmatprep.subr.mxu0 0.0
      %2183 = vmatpush2.msra.mxu0 0.0
      %2184 = vmatprep.subr.mxu0 0.0
      %2185 = vmatpush2.msra.mxu0 0.0
      %2186 = vmatprep.subr.mxu0 0.0
      %2187 = vmatpush2.msra.mxu0 0.0
      %2188 = vmatprep.subr.mxu0 0.0
      %2189 = vmatpush2.msra.mxu0 0.0
      %2190 = vmatprep.subr.mxu0 0.0
      %2191 = vmatpush2.msra.mxu0 0.0
      %2192 = vmatprep.subr.mxu0 0.0
      %2193 = vmatpush2.msra.mxu0 0.0
      %2194 = vmatprep.subr.mxu0 0.0
      %2195 = vmatpush2.msra.mxu0 0.0
      %2196 = vmatprep.subr.mxu0 0.0
      %2197 = vmatpush2.msra.mxu0 0.0
      %2198 = vmatprep.subr.mxu0 0.0
      %2199 = vmatpush2.msra.mxu0 0.0
      %2200 = vmatprep.subr.mxu0 0.0
      %2201 = vmatpush2.msra.mxu0 0.0
      %2202 = vmatprep.subr.mxu0 0.0
      %2203 = vmatpush2.msra.mxu0 0.0
      %2204 = vmatprep.subr.mxu0 0.0
      %2205 = vmatpush2.msra.mxu0 0.0
      %2206 = vmatprep.subr.mxu0 0.0
      %2207 = vmatpush2.msra.mxu0 0.0
      %2208 = vmatprep.subr.mxu0 0.0
      %2209 = vmatpush2.msra.mxu0 0.0
      %2210 = vmatprep.mubr.f32.mxu0 0.0
      %2211 = vmatmul.mubr.f32.gmra.mxu0 %v672
      %v2212 = vpop.f32.mrf.mxu0
      %v2213 = vadd.f32 %v2065, %v2212
      %v2214 = vpop.f32.mrf.mxu0
      %2215 = vmatprep.mubr.f32.mxu0 0.0
      %2216 = vmatmul.mubr.f32.gmra.mxu0 %v674
      %v2217 = vpop.f32.mrf.mxu0
      %v2218 = vadd.f32 %v2070, %v2217
      %v2219 = vpop.f32.mrf.mxu0
      %2220 = vmatprep.mubr.f32.mxu0 0.0
      %2221 = vmatmul.mubr.f32.gmra.mxu0 %v676
      %v2222 = vpop.f32.mrf.mxu0
      %v2223 = vadd.f32 %v2075, %v2222
      %v2224 = vpop.f32.mrf.mxu0
      %2225 = vmatprep.mubr.f32.mxu0 0.0
      %2226 = vmatmul.mubr.f32.gmra.mxu0 %v678
      %v2227 = vpop.f32.mrf.mxu0
      %v2228 = vadd.f32 %v2080, %v2227
      %v2229 = vpop.f32.mrf.mxu0
      %2230 = vmatprep.mubr.f32.mxu0 0.0
      %2231 = vmatmul.mubr.f32.gmra.mxu0 %v680
      %v2232 = vpop.f32.mrf.mxu0
      %v2233 = vadd.f32 %v2085, %v2232
      %v2234 = vpop.f32.mrf.mxu0
      %2235 = vmatprep.mubr.f32.mxu0 0.0
      %2236 = vmatmul.mubr.f32.gmra.mxu0 %v682
      %v2237 = vpop.f32.mrf.mxu0
      %v2238 = vadd.f32 %v2090, %v2237
      %v2239 = vpop.f32.mrf.mxu0
      %2240 = vmatprep.mubr.f32.mxu0 0.0
      %2241 = vmatmul.mubr.f32.gmra.mxu0 %v684
      %v2242 = vpop.f32.mrf.mxu0
      %v2243 = vadd.f32 %v2095, %v2242
      %v2244 = vpop.f32.mrf.mxu0
      %2245 = vmatprep.mubr.f32.mxu0 0.0
      %2246 = vmatmul.mubr.f32.gmra.mxu0 %v686
      %v2247 = vpop.f32.mrf.mxu0
      %v2248 = vadd.f32 %v2100, %v2247
      %v2249 = vpop.f32.mrf.mxu0
      %2250 = vmatprep.mubr.f32.mxu0 0.0
      %2251 = vmatmul.mubr.f32.gmra.mxu0 %v688
      %v2252 = vpop.f32.mrf.mxu0
      %v2253 = vadd.f32 %v2105, %v2252
      %v2254 = vpop.f32.mrf.mxu0
      %2255 = vmatprep.mubr.f32.mxu0 0.0
      %2256 = vmatmul.mubr.f32.gmra.mxu0 %v690
      %v2257 = vpop.f32.mrf.mxu0
      %v2258 = vadd.f32 %v2110, %v2257
      %v2259 = vpop.f32.mrf.mxu0
      %2260 = vmatprep.mubr.f32.mxu0 0.0
      %2261 = vmatmul.mubr.f32.gmra.mxu0 %v692
      %v2262 = vpop.f32.mrf.mxu0
      %v2263 = vadd.f32 %v2115, %v2262
      %v2264 = vpop.f32.mrf.mxu0
      %2265 = vmatprep.mubr.f32.mxu0 0.0
      %2266 = vmatmul.mubr.f32.gmra.mxu0 %v694
      %v2267 = vpop.f32.mrf.mxu0
      %v2268 = vadd.f32 %v2120, %v2267
      %v2269 = vpop.f32.mrf.mxu0
      %2270 = vmatprep.mubr.f32.mxu0 0.0
      %2271 = vmatmul.mubr.f32.gmra.mxu0 %v696
      %v2272 = vpop.f32.mrf.mxu0
      %v2273 = vadd.f32 %v2125, %v2272
      %v2274 = vpop.f32.mrf.mxu0
      %2275 = vmatprep.mubr.f32.mxu0 0.0
      %2276 = vmatmul.mubr.f32.gmra.mxu0 %v698
      %v2277 = vpop.f32.mrf.mxu0
      %v2278 = vadd.f32 %v2130, %v2277
      %v2279 = vpop.f32.mrf.mxu0
      %2280 = vmatprep.mubr.f32.mxu0 0.0
      %2281 = vmatmul.mubr.f32.gmra.mxu0 %v850
      %v2282 = vpop.f32.mrf.mxu0
      %v2283 = vadd.f32 %v2135, %v2282
      %v2284 = vpop.f32.mrf.mxu0
      %2285 = vmatprep.mubr.f32.mxu0 0.0
      %2286 = vmatmul.mubr.f32.gmra.mxu0 %v852
      %v2287 = vpop.f32.mrf.mxu0
      %v2288 = vadd.f32 %v2140, %v2287
      %v2289 = vpop.f32.mrf.mxu0
      %2290 = vdwg.mxu0
      %s2291 = scalar_lea.vmem %s2, 40
      %v2292 = vld [vmem:[%s2291] sm:$0xf]
      %v2293 = vsel %vm486, %v347, 0
      %v2295 = vsel %vm486, %v348, 0
      %v2298 = vsel %vm519, %v2292, 0
      %2300 = vmatprep.subr.mxu0 0.0
      %2301 = vmatpush1.msra.mxu0 0.0
      %2302 = vmatprep.subr.mxu0 0.0
      %2303 = vmatpush1.msra.mxu0 0.0
      %2304 = vmatprep.subr.mxu0 0.0
      %2305 = vmatpush1.msra.mxu0 0.0
      %2306 = vmatprep.subr.mxu0 0.0
      %2307 = vmatpush1.msra.mxu0 0.0
      %2308 = vmatprep.subr.mxu0 0.0
      %2309 = vmatpush1.msra.mxu0 0.0
      %2310 = vmatprep.subr.mxu0 0.0
      %2311 = vmatpush1.msra.mxu0 0.0
      %2312 = vmatprep.subr.mxu0 0.0
      %2313 = vmatpush1.msra.mxu0 0.0
      %2314 = vmatprep.subr.mxu0 0.0
      %2315 = vmatpush1.msra.mxu0 0.0
      %2316 = vmatprep.subr.mxu0 0.0
      %2317 = vmatpush1.msra.mxu0 0.0
      %2318 = vmatprep.subr.mxu0 0.0
      %2319 = vmatpush1.msra.mxu0 0.0
      %2320 = vmatprep.subr.mxu0 0.0
      %2321 = vmatpush1.msra.mxu0 0.0
      %2322 = vmatprep.subr.mxu0 0.0
      %2323 = vmatpush1.msra.mxu0 0.0
      %2324 = vmatprep.subr.mxu0 0.0
      %2325 = vmatpush1.msra.mxu0 0.0
      %2326 = vmatprep.subr.mxu0 0.0
      %2327 = vmatpush1.msra.mxu0 0.0
      %2328 = vmatprep.subr.mxu0 0.0
      %2329 = vmatpush1.msra.mxu0 0.0
      %2330 = vmatprep.subr.mxu0 0.0
      %2331 = vmatpush1.msra.mxu0 %v2298
      %2332 = vmatprep.subr.mxu0 0.0
      %2333 = vmatpush2.msra.mxu0 0.0
      %2334 = vmatprep.subr.mxu0 0.0
      %2335 = vmatpush2.msra.mxu0 0.0
      %2336 = vmatprep.subr.mxu0 0.0
      %2337 = vmatpush2.msra.mxu0 0.0
      %2338 = vmatprep.subr.mxu0 0.0
      %2339 = vmatpush2.msra.mxu0 0.0
      %2340 = vmatprep.subr.mxu0 0.0
      %2341 = vmatpush2.msra.mxu0 0.0
      %2342 = vmatprep.subr.mxu0 0.0
      %2343 = vmatpush2.msra.mxu0 0.0
      %2344 = vmatprep.subr.mxu0 0.0
      %2345 = vmatpush2.msra.mxu0 0.0
      %2346 = vmatprep.subr.mxu0 0.0
      %2347 = vmatpush2.msra.mxu0 0.0
      %2348 = vmatprep.subr.mxu0 0.0
      %2349 = vmatpush2.msra.mxu0 0.0
      %2350 = vmatprep.subr.mxu0 0.0
      %2351 = vmatpush2.msra.mxu0 0.0
      %2352 = vmatprep.subr.mxu0 0.0
      %2353 = vmatpush2.msra.mxu0 0.0
      %2354 = vmatprep.subr.mxu0 0.0
      %2355 = vmatpush2.msra.mxu0 0.0
      %2356 = vmatprep.subr.mxu0 0.0
      %2357 = vmatpush2.msra.mxu0 0.0
      %2358 = vmatprep.subr.mxu0 0.0
      %2359 = vmatpush2.msra.mxu0 0.0
      %2360 = vmatprep.subr.mxu0 0.0
      %2361 = vmatpush2.msra.mxu0 0.0
      %2362 = vmatprep.subr.mxu0 0.0
      %2363 = vmatpush2.msra.mxu0 0.0
      %2364 = vmatprep.mubr.f32.mxu0 0.0
      %2365 = vmatmul.mubr.f32.gmra.mxu0 %v676
      %v2366 = vpop.f32.mrf.mxu0
      %v2367 = vadd.f32 0.0, %v2366
      %v2368 = vpop.f32.mrf.mxu0
      %2369 = vmatprep.mubr.f32.mxu0 0.0
      %2370 = vmatmul.mubr.f32.gmra.mxu0 %v678
      %v2371 = vpop.f32.mrf.mxu0
      %v2372 = vadd.f32 0.0, %v2371
      %v2373 = vpop.f32.mrf.mxu0
      %2374 = vmatprep.mubr.f32.mxu0 0.0
      %2375 = vmatmul.mubr.f32.gmra.mxu0 %v680
      %v2376 = vpop.f32.mrf.mxu0
      %v2377 = vadd.f32 0.0, %v2376
      %v2378 = vpop.f32.mrf.mxu0
      %2379 = vmatprep.mubr.f32.mxu0 0.0
      %2380 = vmatmul.mubr.f32.gmra.mxu0 %v682
      %v2381 = vpop.f32.mrf.mxu0
      %v2382 = vadd.f32 0.0, %v2381
      %v2383 = vpop.f32.mrf.mxu0
      %2384 = vmatprep.mubr.f32.mxu0 0.0
      %2385 = vmatmul.mubr.f32.gmra.mxu0 %v684
      %v2386 = vpop.f32.mrf.mxu0
      %v2387 = vadd.f32 0.0, %v2386
      %v2388 = vpop.f32.mrf.mxu0
      %2389 = vmatprep.mubr.f32.mxu0 0.0
      %2390 = vmatmul.mubr.f32.gmra.mxu0 %v686
      %v2391 = vpop.f32.mrf.mxu0
      %v2392 = vadd.f32 0.0, %v2391
      %v2393 = vpop.f32.mrf.mxu0
      %2394 = vmatprep.mubr.f32.mxu0 0.0
      %2395 = vmatmul.mubr.f32.gmra.mxu0 %v688
      %v2396 = vpop.f32.mrf.mxu0
      %v2397 = vadd.f32 0.0, %v2396
      %v2398 = vpop.f32.mrf.mxu0
      %2399 = vmatprep.mubr.f32.mxu0 0.0
      %2400 = vmatmul.mubr.f32.gmra.mxu0 %v690
      %v2401 = vpop.f32.mrf.mxu0
      %v2402 = vadd.f32 0.0, %v2401
      %v2403 = vpop.f32.mrf.mxu0
      %2404 = vmatprep.mubr.f32.mxu0 0.0
      %2405 = vmatmul.mubr.f32.gmra.mxu0 %v692
      %v2406 = vpop.f32.mrf.mxu0
      %v2407 = vadd.f32 0.0, %v2406
      %v2408 = vpop.f32.mrf.mxu0
      %2409 = vmatprep.mubr.f32.mxu0 0.0
      %2410 = vmatmul.mubr.f32.gmra.mxu0 %v694
      %v2411 = vpop.f32.mrf.mxu0
      %v2412 = vadd.f32 0.0, %v2411
      %v2413 = vpop.f32.mrf.mxu0
      %2414 = vmatprep.mubr.f32.mxu0 0.0
      %2415 = vmatmul.mubr.f32.gmra.mxu0 %v696
      %v2416 = vpop.f32.mrf.mxu0
      %v2417 = vadd.f32 0.0, %v2416
      %v2418 = vpop.f32.mrf.mxu0
      %2419 = vmatprep.mubr.f32.mxu0 0.0
      %2420 = vmatmul.mubr.f32.gmra.mxu0 %v698
      %v2421 = vpop.f32.mrf.mxu0
      %v2422 = vadd.f32 0.0, %v2421
      %v2423 = vpop.f32.mrf.mxu0
      %2424 = vmatprep.mubr.f32.mxu0 0.0
      %2425 = vmatmul.mubr.f32.gmra.mxu0 %v850
      %v2426 = vpop.f32.mrf.mxu0
      %v2427 = vadd.f32 0.0, %v2426
      %v2428 = vpop.f32.mrf.mxu0
      %2429 = vmatprep.mubr.f32.mxu0 0.0
      %2430 = vmatmul.mubr.f32.gmra.mxu0 %v852
      %v2431 = vpop.f32.mrf.mxu0
      %v2432 = vadd.f32 0.0, %v2431
      %v2433 = vpop.f32.mrf.mxu0
      %2434 = vmatprep.mubr.f32.mxu0 0.0
      %2435 = vmatmul.mubr.f32.gmra.mxu0 %v2293
      %v2436 = vpop.f32.mrf.mxu0
      %v2437 = vadd.f32 0.0, %v2436
      %v2438 = vpop.f32.mrf.mxu0
      %2439 = vmatprep.mubr.f32.mxu0 0.0
      %2440 = vmatmul.mubr.f32.gmra.mxu0 %v2295
      %v2441 = vpop.f32.mrf.mxu0
      %v2442 = vadd.f32 0.0, %v2441
      %v2443 = vpop.f32.mrf.mxu0
      %2444 = vdwg.mxu0
      %v2445 = vadd.f32 %v2213, %v2367
      %v2446 = vadd.f32 %v2218, %v2372
      %v2447 = vadd.f32 %v2223, %v2377
      %v2448 = vadd.f32 %v2228, %v2382
      %v2449 = vadd.f32 %v2233, %v2387
      %v2450 = vadd.f32 %v2238, %v2392
      %v2451 = vadd.f32 %v2243, %v2397
      %v2452 = vadd.f32 %v2248, %v2402
      %v2453 = vadd.f32 %v2253, %v2407
      %v2454 = vadd.f32 %v2258, %v2412
      %v2455 = vadd.f32 %v2263, %v2417
      %v2456 = vadd.f32 %v2268, %v2422
      %v2457 = vadd.f32 %v2273, %v2427
      %v2458 = vadd.f32 %v2278, %v2432
      %v2459 = vadd.f32 %v2283, %v2437
      %v2460 = vadd.f32 %v2288, %v2442
      %s2461 = scalar_lea.vmem %s2, 44
      %v2462 = vld [vmem:[%s2461] sm:$0xf]
      %v2463 = vsel %vm486, %v474, 0
      %v2465 = vsel %vm486, %v476, 0
      %v2468 = vsel %vm519, %v2462, 0
      %2470 = vmatprep.subr.mxu0 0.0
      %2471 = vmatpush1.msra.mxu0 0.0
      %2472 = vmatprep.subr.mxu0 0.0
      %2473 = vmatpush1.msra.mxu0 0.0
      %2474 = vmatprep.subr.mxu0 0.0
      %2475 = vmatpush1.msra.mxu0 0.0
      %2476 = vmatprep.subr.mxu0 0.0
      %2477 = vmatpush1.msra.mxu0 0.0
      %2478 = vmatprep.subr.mxu0 0.0
      %2479 = vmatpush1.msra.mxu0 0.0
      %2480 = vmatprep.subr.mxu0 0.0
      %2481 = vmatpush1.msra.mxu0 0.0
      %2482 = vmatprep.subr.mxu0 0.0
      %2483 = vmatpush1.msra.mxu0 0.0
      %2484 = vmatprep.subr.mxu0 0.0
      %2485 = vmatpush1.msra.mxu0 0.0
      %2486 = vmatprep.subr.mxu0 0.0
      %2487 = vmatpush1.msra.mxu0 0.0
      %2488 = vmatprep.subr.mxu0 0.0
      %2489 = vmatpush1.msra.mxu0 0.0
      %2490 = vmatprep.subr.mxu0 0.0
      %2491 = vmatpush1.msra.mxu0 0.0
      %2492 = vmatprep.subr.mxu0 0.0
      %2493 = vmatpush1.msra.mxu0 0.0
      %2494 = vmatprep.subr.mxu0 0.0
      %2495 = vmatpush1.msra.mxu0 0.0
      %2496 = vmatprep.subr.mxu0 0.0
      %2497 = vmatpush1.msra.mxu0 0.0
      %2498 = vmatprep.subr.mxu0 0.0
      %2499 = vmatpush1.msra.mxu0 0.0
      %2500 = vmatprep.subr.mxu0 0.0
      %2501 = vmatpush1.msra.mxu0 %v2468
      %2502 = vmatprep.subr.mxu0 0.0
      %2503 = vmatpush2.msra.mxu0 0.0
      %2504 = vmatprep.subr.mxu0 0.0
      %2505 = vmatpush2.msra.mxu0 0.0
      %2506 = vmatprep.subr.mxu0 0.0
      %2507 = vmatpush2.msra.mxu0 0.0
      %2508 = vmatprep.subr.mxu0 0.0
      %2509 = vmatpush2.msra.mxu0 0.0
      %2510 = vmatprep.subr.mxu0 0.0
      %2511 = vmatpush2.msra.mxu0 0.0
      %2512 = vmatprep.subr.mxu0 0.0
      %2513 = vmatpush2.msra.mxu0 0.0
      %2514 = vmatprep.subr.mxu0 0.0
      %2515 = vmatpush2.msra.mxu0 0.0
      %2516 = vmatprep.subr.mxu0 0.0
      %2517 = vmatpush2.msra.mxu0 0.0
      %2518 = vmatprep.subr.mxu0 0.0
      %2519 = vmatpush2.msra.mxu0 0.0
      %2520 = vmatprep.subr.mxu0 0.0
      %2521 = vmatpush2.msra.mxu0 0.0
      %2522 = vmatprep.subr.mxu0 0.0
      %2523 = vmatpush2.msra.mxu0 0.0
      %2524 = vmatprep.subr.mxu0 0.0
      %2525 = vmatpush2.msra.mxu0 0.0
      %2526 = vmatprep.subr.mxu0 0.0
      %2527 = vmatpush2.msra.mxu0 0.0
      %2528 = vmatprep.subr.mxu0 0.0
      %2529 = vmatpush2.msra.mxu0 0.0
      %2530 = vmatprep.subr.mxu0 0.0
      %2531 = vmatpush2.msra.mxu0 0.0
      %2532 = vmatprep.subr.mxu0 0.0
      %2533 = vmatpush2.msra.mxu0 0.0
      %2534 = vmatprep.mubr.f32.mxu0 0.0
      %2535 = vmatmul.mubr.f32.gmra.mxu0 %v495
      %v2536 = vpop.f32.mrf.mxu0
      %v2537 = vadd.f32 0.0, %v2536
      %v2538 = vpop.f32.mrf.mxu0
      %2539 = vmatprep.mubr.f32.mxu0 0.0
      %2540 = vmatmul.mubr.f32.gmra.mxu0 %v497
      %v2541 = vpop.f32.mrf.mxu0
      %v2542 = vadd.f32 0.0, %v2541
      %v2543 = vpop.f32.mrf.mxu0
      %2544 = vmatprep.mubr.f32.mxu0 0.0
      %2545 = vmatmul.mubr.f32.gmra.mxu0 %v499
      %v2546 = vpop.f32.mrf.mxu0
      %v2547 = vadd.f32 0.0, %v2546
      %v2548 = vpop.f32.mrf.mxu0
      %2549 = vmatprep.mubr.f32.mxu0 0.0
      %2550 = vmatmul.mubr.f32.gmra.mxu0 %v501
      %v2551 = vpop.f32.mrf.mxu0
      %v2552 = vadd.f32 0.0, %v2551
      %v2553 = vpop.f32.mrf.mxu0
      %2554 = vmatprep.mubr.f32.mxu0 0.0
      %2555 = vmatmul.mubr.f32.gmra.mxu0 %v503
      %v2556 = vpop.f32.mrf.mxu0
      %v2557 = vadd.f32 0.0, %v2556
      %v2558 = vpop.f32.mrf.mxu0
      %2559 = vmatprep.mubr.f32.mxu0 0.0
      %2560 = vmatmul.mubr.f32.gmra.mxu0 %v505
      %v2561 = vpop.f32.mrf.mxu0
      %v2562 = vadd.f32 0.0, %v2561
      %v2563 = vpop.f32.mrf.mxu0
      %2564 = vmatprep.mubr.f32.mxu0 0.0
      %2565 = vmatmul.mubr.f32.gmra.mxu0 %v507
      %v2566 = vpop.f32.mrf.mxu0
      %v2567 = vadd.f32 0.0, %v2566
      %v2568 = vpop.f32.mrf.mxu0
      %2569 = vmatprep.mubr.f32.mxu0 0.0
      %2570 = vmatmul.mubr.f32.gmra.mxu0 %v509
      %v2571 = vpop.f32.mrf.mxu0
      %v2572 = vadd.f32 0.0, %v2571
      %v2573 = vpop.f32.mrf.mxu0
      %2574 = vmatprep.mubr.f32.mxu0 0.0
      %2575 = vmatmul.mubr.f32.gmra.mxu0 %v511
      %v2576 = vpop.f32.mrf.mxu0
      %v2577 = vadd.f32 0.0, %v2576
      %v2578 = vpop.f32.mrf.mxu0
      %2579 = vmatprep.mubr.f32.mxu0 0.0
      %2580 = vmatmul.mubr.f32.gmra.mxu0 %v513
      %v2581 = vpop.f32.mrf.mxu0
      %v2582 = vadd.f32 0.0, %v2581
      %v2583 = vpop.f32.mrf.mxu0
      %2584 = vmatprep.mubr.f32.mxu0 0.0
      %2585 = vmatmul.mubr.f32.gmra.mxu0 %v515
      %v2586 = vpop.f32.mrf.mxu0
      %v2587 = vadd.f32 0.0, %v2586
      %v2588 = vpop.f32.mrf.mxu0
      %2589 = vmatprep.mubr.f32.mxu0 0.0
      %2590 = vmatmul.mubr.f32.gmra.mxu0 %v517
      %v2591 = vpop.f32.mrf.mxu0
      %v2592 = vadd.f32 0.0, %v2591
      %v2593 = vpop.f32.mrf.mxu0
      %2594 = vmatprep.mubr.f32.mxu0 0.0
      %2595 = vmatmul.mubr.f32.gmra.mxu0 %v1020
      %v2596 = vpop.f32.mrf.mxu0
      %v2597 = vadd.f32 0.0, %v2596
      %v2598 = vpop.f32.mrf.mxu0
      %2599 = vmatprep.mubr.f32.mxu0 0.0
      %2600 = vmatmul.mubr.f32.gmra.mxu0 %v1022
      %v2601 = vpop.f32.mrf.mxu0
      %v2602 = vadd.f32 0.0, %v2601
      %v2603 = vpop.f32.mrf.mxu0
      %2604 = vmatprep.mubr.f32.mxu0 0.0
      %2605 = vmatmul.mubr.f32.gmra.mxu0 %v2463
      %v2606 = vpop.f32.mrf.mxu0
      %v2607 = vadd.f32 0.0, %v2606
      %v2608 = vpop.f32.mrf.mxu0
      %2609 = vmatprep.mubr.f32.mxu0 0.0
      %2610 = vmatmul.mubr.f32.gmra.mxu0 %v2465
      %v2611 = vpop.f32.mrf.mxu0
      %v2612 = vadd.f32 0.0, %v2611
      %v2613 = vpop.f32.mrf.mxu0
      %2614 = vdwg.mxu0
      %v2615 = vadd.f32 %v2445, %v2537
      %v2616 = vadd.f32 %v2446, %v2542
      %v2617 = vadd.f32 %v2447, %v2547
      %v2618 = vadd.f32 %v2448, %v2552
      %v2619 = vadd.f32 %v2449, %v2557
      %v2620 = vadd.f32 %v2450, %v2562
      %v2621 = vadd.f32 %v2451, %v2567
      %v2622 = vadd.f32 %v2452, %v2572
      %v2623 = vadd.f32 %v2453, %v2577
      %v2624 = vadd.f32 %v2454, %v2582
      %v2625 = vadd.f32 %v2455, %v2587
      %v2626 = vadd.f32 %v2456, %v2592
      %v2627 = vadd.f32 %v2457, %v2597
      %v2628 = vadd.f32 %v2458, %v2602
      %v2629 = vadd.f32 %v2459, %v2607
      %v2630 = vadd.f32 %v2460, %v2612
      %v2631 = vadd.f32 %v2615, %v1192
      %v2632 = vadd.f32 %v2616, %v1192
      %v2633 = vadd.f32 %v2617, %v1192
      %v2634 = vadd.f32 %v2618, %v1192
      %v2635 = vadd.f32 %v2619, %v1192
      %v2636 = vadd.f32 %v2620, %v1192
      %v2637 = vadd.f32 %v2621, %v1192
      %v2638 = vadd.f32 %v2622, %v1192
      %v2639 = vadd.f32 %v2623, %v1192
      %v2640 = vadd.f32 %v2624, %v1192
      %v2641 = vadd.f32 %v2625, %v1192
      %v2642 = vadd.f32 %v2626, %v1192
      %v2643 = vadd.f32 %v2627, %v1192
      %v2644 = vadd.f32 %v2628, %v1192
      %v2645 = vadd.f32 %v2629, %v1192
      %v2646 = vadd.f32 %v2630, %v1192
      %s2647 = scalar_lea.vmem %s318, 16
      %2648 = vst.msk [vmem:[%s2647] sm:$0xff] %vm486, %v2631
      %2649 = vst.msk [vmem:[%s2647 + $0x8] sm:$0xff] %vm486, %v2632
      %2650 = vst.msk [vmem:[%s2647 + $0x20] sm:$0xff] %vm486, %v2633
      %2651 = vst.msk [vmem:[%s2647 + $0x28] sm:$0xff] %vm486, %v2634
      %2652 = vst.msk [vmem:[%s2647 + $0x40] sm:$0xff] %vm486, %v2635
      %2653 = vst.msk [vmem:[%s2647 + $0x48] sm:$0xff] %vm486, %v2636
      %2654 = vst.msk [vmem:[%s2647 + $0x60] sm:$0xff] %vm486, %v2637
      %2655 = vst.msk [vmem:[%s2647 + $0x68] sm:$0xff] %vm486, %v2638
      %2656 = vst.msk [vmem:[%s2647 + $0x80] sm:$0xff] %vm486, %v2639
      %2657 = vst.msk [vmem:[%s2647 + $0x88] sm:$0xff] %vm486, %v2640
      %2658 = vst.msk [vmem:[%s2647 + $0xa0] sm:$0xff] %vm486, %v2641
      %2659 = vst.msk [vmem:[%s2647 + $0xa8] sm:$0xff] %vm486, %v2642
      %2660 = vst.msk [vmem:[%s2647 + $0xc0] sm:$0xff] %vm486, %v2643
      %2661 = vst.msk [vmem:[%s2647 + $0xc8] sm:$0xff] %vm486, %v2644
      %2662 = vst.msk [vmem:[%s2647 + $0xe0] sm:$0xff] %vm486, %v2645
      %2663 = vst.msk [vmem:[%s2647 + $0xe8] sm:$0xff] %vm486, %v2646
      %s2664 = scalar_lea.vmem %s2, 48
      %v2665 = vld [vmem:[%s2664] sm:$0xf]
      %s2666 = scalar_lea.vmem %s2, 52
      %v2667 = vld [vmem:[%s2666] sm:$0xf]
      %v2669 = vsel %vm519, %v2667, 0
      %2671 = vmatprep.subr.mxu0 0.0
      %2672 = vmatpush1.msra.mxu0 0.0
      %2673 = vmatprep.subr.mxu0 0.0
      %2674 = vmatpush1.msra.mxu0 0.0
      %2675 = vmatprep.subr.mxu0 0.0
      %2676 = vmatpush1.msra.mxu0 0.0
      %2677 = vmatprep.subr.mxu0 0.0
      %2678 = vmatpush1.msra.mxu0 0.0
      %2679 = vmatprep.subr.mxu0 0.0
      %2680 = vmatpush1.msra.mxu0 0.0
      %2681 = vmatprep.subr.mxu0 0.0
      %2682 = vmatpush1.msra.mxu0 0.0
      %2683 = vmatprep.subr.mxu0 0.0
      %2684 = vmatpush1.msra.mxu0 0.0
      %2685 = vmatprep.subr.mxu0 0.0
      %2686 = vmatpush1.msra.mxu0 0.0
      %2687 = vmatprep.subr.mxu0 0.0
      %2688 = vmatpush1.msra.mxu0 0.0
      %2689 = vmatprep.subr.mxu0 0.0
      %2690 = vmatpush1.msra.mxu0 0.0
      %2691 = vmatprep.subr.mxu0 0.0
      %2692 = vmatpush1.msra.mxu0 0.0
      %2693 = vmatprep.subr.mxu0 0.0
      %2694 = vmatpush1.msra.mxu0 0.0
      %2695 = vmatprep.subr.mxu0 0.0
      %2696 = vmatpush1.msra.mxu0 0.0
      %2697 = vmatprep.subr.mxu0 0.0
      %2698 = vmatpush1.msra.mxu0 0.0
      %2699 = vmatprep.subr.mxu0 0.0
      %2700 = vmatpush1.msra.mxu0 0.0
      %2701 = vmatprep.subr.mxu0 0.0
      %2702 = vmatpush1.msra.mxu0 %v2669
      %2703 = vmatprep.subr.mxu0 0.0
      %2704 = vmatpush2.msra.mxu0 0.0
      %2705 = vmatprep.subr.mxu0 0.0
      %2706 = vmatpush2.msra.mxu0 0.0
      %2707 = vmatprep.subr.mxu0 0.0
      %2708 = vmatpush2.msra.mxu0 0.0
      %2709 = vmatprep.subr.mxu0 0.0
      %2710 = vmatpush2.msra.mxu0 0.0
      %2711 = vmatprep.subr.mxu0 0.0
      %2712 = vmatpush2.msra.mxu0 0.0
      %2713 = vmatprep.subr.mxu0 0.0
      %2714 = vmatpush2.msra.mxu0 0.0
      %2715 = vmatprep.subr.mxu0 0.0
      %2716 = vmatpush2.msra.mxu0 0.0
      %2717 = vmatprep.subr.mxu0 0.0
      %2718 = vmatpush2.msra.mxu0 0.0
      %2719 = vmatprep.subr.mxu0 0.0
      %2720 = vmatpush2.msra.mxu0 0.0
      %2721 = vmatprep.subr.mxu0 0.0
      %2722 = vmatpush2.msra.mxu0 0.0
      %2723 = vmatprep.subr.mxu0 0.0
      %2724 = vmatpush2.msra.mxu0 0.0
      %2725 = vmatprep.subr.mxu0 0.0
      %2726 = vmatpush2.msra.mxu0 0.0
      %2727 = vmatprep.subr.mxu0 0.0
      %2728 = vmatpush2.msra.mxu0 0.0
      %2729 = vmatprep.subr.mxu0 0.0
      %2730 = vmatpush2.msra.mxu0 0.0
      %2731 = vmatprep.subr.mxu0 0.0
      %2732 = vmatpush2.msra.mxu0 0.0
      %2733 = vmatprep.subr.mxu0 0.0
      %2734 = vmatpush2.msra.mxu0 0.0
      %2735 = vmatprep.mubr.f32.mxu0 0.0
      %2736 = vmatmul.mubr.f32.gmra.mxu0 %v1234
      %v2737 = vpop.f32.mrf.mxu0
      %v2738 = vadd.f32 0.0, %v2737
      %v2739 = vpop.f32.mrf.mxu0
      %2740 = vmatprep.mubr.f32.mxu0 0.0
      %2741 = vmatmul.mubr.f32.gmra.mxu0 %v1236
      %v2742 = vpop.f32.mrf.mxu0
      %v2743 = vadd.f32 0.0, %v2742
      %v2744 = vpop.f32.mrf.mxu0
      %2745 = vmatprep.mubr.f32.mxu0 0.0
      %2746 = vmatmul.mubr.f32.gmra.mxu0 %v1238
      %v2747 = vpop.f32.mrf.mxu0
      %v2748 = vadd.f32 0.0, %v2747
      %v2749 = vpop.f32.mrf.mxu0
      %2750 = vmatprep.mubr.f32.mxu0 0.0
      %2751 = vmatmul.mubr.f32.gmra.mxu0 %v1240
      %v2752 = vpop.f32.mrf.mxu0
      %v2753 = vadd.f32 0.0, %v2752
      %v2754 = vpop.f32.mrf.mxu0
      %2755 = vmatprep.mubr.f32.mxu0 0.0
      %2756 = vmatmul.mubr.f32.gmra.mxu0 %v1242
      %v2757 = vpop.f32.mrf.mxu0
      %v2758 = vadd.f32 0.0, %v2757
      %v2759 = vpop.f32.mrf.mxu0
      %2760 = vmatprep.mubr.f32.mxu0 0.0
      %2761 = vmatmul.mubr.f32.gmra.mxu0 %v1244
      %v2762 = vpop.f32.mrf.mxu0
      %v2763 = vadd.f32 0.0, %v2762
      %v2764 = vpop.f32.mrf.mxu0
      %2765 = vmatprep.mubr.f32.mxu0 0.0
      %2766 = vmatmul.mubr.f32.gmra.mxu0 %v1246
      %v2767 = vpop.f32.mrf.mxu0
      %v2768 = vadd.f32 0.0, %v2767
      %v2769 = vpop.f32.mrf.mxu0
      %2770 = vmatprep.mubr.f32.mxu0 0.0
      %2771 = vmatmul.mubr.f32.gmra.mxu0 %v1248
      %v2772 = vpop.f32.mrf.mxu0
      %v2773 = vadd.f32 0.0, %v2772
      %v2774 = vpop.f32.mrf.mxu0
      %2775 = vmatprep.mubr.f32.mxu0 0.0
      %2776 = vmatmul.mubr.f32.gmra.mxu0 %v1250
      %v2777 = vpop.f32.mrf.mxu0
      %v2778 = vadd.f32 0.0, %v2777
      %v2779 = vpop.f32.mrf.mxu0
      %2780 = vmatprep.mubr.f32.mxu0 0.0
      %2781 = vmatmul.mubr.f32.gmra.mxu0 %v1252
      %v2782 = vpop.f32.mrf.mxu0
      %v2783 = vadd.f32 0.0, %v2782
      %v2784 = vpop.f32.mrf.mxu0
      %2785 = vmatprep.mubr.f32.mxu0 0.0
      %2786 = vmatmul.mubr.f32.gmra.mxu0 %v1254
      %v2787 = vpop.f32.mrf.mxu0
      %v2788 = vadd.f32 0.0, %v2787
      %v2789 = vpop.f32.mrf.mxu0
      %2790 = vmatprep.mubr.f32.mxu0 0.0
      %2791 = vmatmul.mubr.f32.gmra.mxu0 %v1256
      %v2792 = vpop.f32.mrf.mxu0
      %v2793 = vadd.f32 0.0, %v2792
      %v2794 = vpop.f32.mrf.mxu0
      %2795 = vmatprep.mubr.f32.mxu0 0.0
      %2796 = vmatmul.mubr.f32.gmra.mxu0 %v1258
      %v2797 = vpop.f32.mrf.mxu0
      %v2798 = vadd.f32 0.0, %v2797
      %v2799 = vpop.f32.mrf.mxu0
      %2800 = vmatprep.mubr.f32.mxu0 0.0
      %2801 = vmatmul.mubr.f32.gmra.mxu0 %v1260
      %v2802 = vpop.f32.mrf.mxu0
      %v2803 = vadd.f32 0.0, %v2802
      %v2804 = vpop.f32.mrf.mxu0
      %2805 = vmatprep.mubr.f32.mxu0 0.0
      %2806 = vmatmul.mubr.f32.gmra.mxu0 %v1726
      %v2807 = vpop.f32.mrf.mxu0
      %v2808 = vadd.f32 0.0, %v2807
      %v2809 = vpop.f32.mrf.mxu0
      %2810 = vmatprep.mubr.f32.mxu0 0.0
      %2811 = vmatmul.mubr.f32.gmra.mxu0 %v1728
      %v2812 = vpop.f32.mrf.mxu0
      %v2813 = vadd.f32 0.0, %v2812
      %v2814 = vpop.f32.mrf.mxu0
      %2815 = vdwg.mxu0
      %v2817 = vsel %vm519, %v2665, 0
      %2819 = vmatprep.subr.mxu0 0.0
      %2820 = vmatpush1.msra.mxu0 0.0
      %2821 = vmatprep.subr.mxu0 0.0
      %2822 = vmatpush1.msra.mxu0 0.0
      %2823 = vmatprep.subr.mxu0 0.0
      %2824 = vmatpush1.msra.mxu0 0.0
      %2825 = vmatprep.subr.mxu0 0.0
      %2826 = vmatpush1.msra.mxu0 0.0
      %2827 = vmatprep.subr.mxu0 0.0
      %2828 = vmatpush1.msra.mxu0 0.0
      %2829 = vmatprep.subr.mxu0 0.0
      %2830 = vmatpush1.msra.mxu0 0.0
      %2831 = vmatprep.subr.mxu0 0.0
      %2832 = vmatpush1.msra.mxu0 0.0
      %2833 = vmatprep.subr.mxu0 0.0
      %2834 = vmatpush1.msra.mxu0 0.0
      %2835 = vmatprep.subr.mxu0 0.0
      %2836 = vmatpush1.msra.mxu0 0.0
      %2837 = vmatprep.subr.mxu0 0.0
      %2838 = vmatpush1.msra.mxu0 0.0
      %2839 = vmatprep.subr.mxu0 0.0
      %2840 = vmatpush1.msra.mxu0 0.0
      %2841 = vmatprep.subr.mxu0 0.0
      %2842 = vmatpush1.msra.mxu0 0.0
      %2843 = vmatprep.subr.mxu0 0.0
      %2844 = vmatpush1.msra.mxu0 0.0
      %2845 = vmatprep.subr.mxu0 0.0
      %2846 = vmatpush1.msra.mxu0 0.0
      %2847 = vmatprep.subr.mxu0 0.0
      %2848 = vmatpush1.msra.mxu0 0.0
      %2849 = vmatprep.subr.mxu0 0.0
      %2850 = vmatpush1.msra.mxu0 %v2817
      %2851 = vmatprep.subr.mxu0 0.0
      %2852 = vmatpush2.msra.mxu0 0.0
      %2853 = vmatprep.subr.mxu0 0.0
      %2854 = vmatpush2.msra.mxu0 0.0
      %2855 = vmatprep.subr.mxu0 0.0
      %2856 = vmatpush2.msra.mxu0 0.0
      %2857 = vmatprep.subr.mxu0 0.0
      %2858 = vmatpush2.msra.mxu0 0.0
      %2859 = vmatprep.subr.mxu0 0.0
      %2860 = vmatpush2.msra.mxu0 0.0
      %2861 = vmatprep.subr.mxu0 0.0
      %2862 = vmatpush2.msra.mxu0 0.0
      %2863 = vmatprep.subr.mxu0 0.0
      %2864 = vmatpush2.msra.mxu0 0.0
      %2865 = vmatprep.subr.mxu0 0.0
      %2866 = vmatpush2.msra.mxu0 0.0
      %2867 = vmatprep.subr.mxu0 0.0
      %2868 = vmatpush2.msra.mxu0 0.0
      %2869 = vmatprep.subr.mxu0 0.0
      %2870 = vmatpush2.msra.mxu0 0.0
      %2871 = vmatprep.subr.mxu0 0.0
      %2872 = vmatpush2.msra.mxu0 0.0
      %2873 = vmatprep.subr.mxu0 0.0
      %2874 = vmatpush2.msra.mxu0 0.0
      %2875 = vmatprep.subr.mxu0 0.0
      %2876 = vmatpush2.msra.mxu0 0.0
      %2877 = vmatprep.subr.mxu0 0.0
      %2878 = vmatpush2.msra.mxu0 0.0
      %2879 = vmatprep.subr.mxu0 0.0
      %2880 = vmatpush2.msra.mxu0 0.0
      %2881 = vmatprep.subr.mxu0 0.0
      %2882 = vmatpush2.msra.mxu0 0.0
      %2883 = vmatprep.mubr.f32.mxu0 0.0
      %2884 = vmatmul.mubr.f32.gmra.mxu0 %v491
      %v2885 = vpop.f32.mrf.mxu0
      %v2886 = vadd.f32 %v2738, %v2885
      %v2887 = vpop.f32.mrf.mxu0
      %2888 = vmatprep.mubr.f32.mxu0 0.0
      %2889 = vmatmul.mubr.f32.gmra.mxu0 %v493
      %v2890 = vpop.f32.mrf.mxu0
      %v2891 = vadd.f32 %v2743, %v2890
      %v2892 = vpop.f32.mrf.mxu0
      %2893 = vmatprep.mubr.f32.mxu0 0.0
      %2894 = vmatmul.mubr.f32.gmra.mxu0 %v495
      %v2895 = vpop.f32.mrf.mxu0
      %v2896 = vadd.f32 %v2748, %v2895
      %v2897 = vpop.f32.mrf.mxu0
      %2898 = vmatprep.mubr.f32.mxu0 0.0
      %2899 = vmatmul.mubr.f32.gmra.mxu0 %v497
      %v2900 = vpop.f32.mrf.mxu0
      %v2901 = vadd.f32 %v2753, %v2900
      %v2902 = vpop.f32.mrf.mxu0
      %2903 = vmatprep.mubr.f32.mxu0 0.0
      %2904 = vmatmul.mubr.f32.gmra.mxu0 %v499
      %v2905 = vpop.f32.mrf.mxu0
      %v2906 = vadd.f32 %v2758, %v2905
      %v2907 = vpop.f32.mrf.mxu0
      %2908 = vmatprep.mubr.f32.mxu0 0.0
      %2909 = vmatmul.mubr.f32.gmra.mxu0 %v501
      %v2910 = vpop.f32.mrf.mxu0
      %v2911 = vadd.f32 %v2763, %v2910
      %v2912 = vpop.f32.mrf.mxu0
      %2913 = vmatprep.mubr.f32.mxu0 0.0
      %2914 = vmatmul.mubr.f32.gmra.mxu0 %v503
      %v2915 = vpop.f32.mrf.mxu0
      %v2916 = vadd.f32 %v2768, %v2915
      %v2917 = vpop.f32.mrf.mxu0
      %2918 = vmatprep.mubr.f32.mxu0 0.0
      %2919 = vmatmul.mubr.f32.gmra.mxu0 %v505
      %v2920 = vpop.f32.mrf.mxu0
      %v2921 = vadd.f32 %v2773, %v2920
      %v2922 = vpop.f32.mrf.mxu0
      %2923 = vmatprep.mubr.f32.mxu0 0.0
      %2924 = vmatmul.mubr.f32.gmra.mxu0 %v507
      %v2925 = vpop.f32.mrf.mxu0
      %v2926 = vadd.f32 %v2778, %v2925
      %v2927 = vpop.f32.mrf.mxu0
      %2928 = vmatprep.mubr.f32.mxu0 0.0
      %2929 = vmatmul.mubr.f32.gmra.mxu0 %v509
      %v2930 = vpop.f32.mrf.mxu0
      %v2931 = vadd.f32 %v2783, %v2930
      %v2932 = vpop.f32.mrf.mxu0
      %2933 = vmatprep.mubr.f32.mxu0 0.0
      %2934 = vmatmul.mubr.f32.gmra.mxu0 %v511
      %v2935 = vpop.f32.mrf.mxu0
      %v2936 = vadd.f32 %v2788, %v2935
      %v2937 = vpop.f32.mrf.mxu0
      %2938 = vmatprep.mubr.f32.mxu0 0.0
      %2939 = vmatmul.mubr.f32.gmra.mxu0 %v513
      %v2940 = vpop.f32.mrf.mxu0
      %v2941 = vadd.f32 %v2793, %v2940
      %v2942 = vpop.f32.mrf.mxu0
      %2943 = vmatprep.mubr.f32.mxu0 0.0
      %2944 = vmatmul.mubr.f32.gmra.mxu0 %v515
      %v2945 = vpop.f32.mrf.mxu0
      %v2946 = vadd.f32 %v2798, %v2945
      %v2947 = vpop.f32.mrf.mxu0
      %2948 = vmatprep.mubr.f32.mxu0 0.0
      %2949 = vmatmul.mubr.f32.gmra.mxu0 %v517
      %v2950 = vpop.f32.mrf.mxu0
      %v2951 = vadd.f32 %v2803, %v2950
      %v2952 = vpop.f32.mrf.mxu0
      %2953 = vmatprep.mubr.f32.mxu0 0.0
      %2954 = vmatmul.mubr.f32.gmra.mxu0 %v1020
      %v2955 = vpop.f32.mrf.mxu0
      %v2956 = vadd.f32 %v2808, %v2955
      %v2957 = vpop.f32.mrf.mxu0
      %2958 = vmatprep.mubr.f32.mxu0 0.0
      %2959 = vmatmul.mubr.f32.gmra.mxu0 %v1022
      %v2960 = vpop.f32.mrf.mxu0
      %v2961 = vadd.f32 %v2813, %v2960
      %v2962 = vpop.f32.mrf.mxu0
      %2963 = vdwg.mxu0
      %s2964 = scalar_lea.vmem %s2, 56
      %v2965 = vld [vmem:[%s2964] sm:$0xf]
      %v2967 = vsel %vm519, %v2965, 0
      %2969 = vmatprep.subr.mxu0 0.0
      %2970 = vmatpush1.msra.mxu0 0.0
      %2971 = vmatprep.subr.mxu0 0.0
      %2972 = vmatpush1.msra.mxu0 0.0
      %2973 = vmatprep.subr.mxu0 0.0
      %2974 = vmatpush1.msra.mxu0 0.0
      %2975 = vmatprep.subr.mxu0 0.0
      %2976 = vmatpush1.msra.mxu0 0.0
      %2977 = vmatprep.subr.mxu0 0.0
      %2978 = vmatpush1.msra.mxu0 0.0
      %2979 = vmatprep.subr.mxu0 0.0
      %2980 = vmatpush1.msra.mxu0 0.0
      %2981 = vmatprep.subr.mxu0 0.0
      %2982 = vmatpush1.msra.mxu0 0.0
      %2983 = vmatprep.subr.mxu0 0.0
      %2984 = vmatpush1.msra.mxu0 0.0
      %2985 = vmatprep.subr.mxu0 0.0
      %2986 = vmatpush1.msra.mxu0 0.0
      %2987 = vmatprep.subr.mxu0 0.0
      %2988 = vmatpush1.msra.mxu0 0.0
      %2989 = vmatprep.subr.mxu0 0.0
      %2990 = vmatpush1.msra.mxu0 0.0
      %2991 = vmatprep.subr.mxu0 0.0
      %2992 = vmatpush1.msra.mxu0 0.0
      %2993 = vmatprep.subr.mxu0 0.0
      %2994 = vmatpush1.msra.mxu0 0.0
      %2995 = vmatprep.subr.mxu0 0.0
      %2996 = vmatpush1.msra.mxu0 0.0
      %2997 = vmatprep.subr.mxu0 0.0
      %2998 = vmatpush1.msra.mxu0 0.0
      %2999 = vmatprep.subr.mxu0 0.0
      %3000 = vmatpush1.msra.mxu0 %v2967
      %3001 = vmatprep.subr.mxu0 0.0
      %3002 = vmatpush2.msra.mxu0 0.0
      %3003 = vmatprep.subr.mxu0 0.0
      %3004 = vmatpush2.msra.mxu0 0.0
      %3005 = vmatprep.subr.mxu0 0.0
      %3006 = vmatpush2.msra.mxu0 0.0
      %3007 = vmatprep.subr.mxu0 0.0
      %3008 = vmatpush2.msra.mxu0 0.0
      %3009 = vmatprep.subr.mxu0 0.0
      %3010 = vmatpush2.msra.mxu0 0.0
      %3011 = vmatprep.subr.mxu0 0.0
      %3012 = vmatpush2.msra.mxu0 0.0
      %3013 = vmatprep.subr.mxu0 0.0
      %3014 = vmatpush2.msra.mxu0 0.0
      %3015 = vmatprep.subr.mxu0 0.0
      %3016 = vmatpush2.msra.mxu0 0.0
      %3017 = vmatprep.subr.mxu0 0.0
      %3018 = vmatpush2.msra.mxu0 0.0
      %3019 = vmatprep.subr.mxu0 0.0
      %3020 = vmatpush2.msra.mxu0 0.0
      %3021 = vmatprep.subr.mxu0 0.0
      %3022 = vmatpush2.msra.mxu0 0.0
      %3023 = vmatprep.subr.mxu0 0.0
      %3024 = vmatpush2.msra.mxu0 0.0
      %3025 = vmatprep.subr.mxu0 0.0
      %3026 = vmatpush2.msra.mxu0 0.0
      %3027 = vmatprep.subr.mxu0 0.0
      %3028 = vmatpush2.msra.mxu0 0.0
      %3029 = vmatprep.subr.mxu0 0.0
      %3030 = vmatpush2.msra.mxu0 0.0
      %3031 = vmatprep.subr.mxu0 0.0
      %3032 = vmatpush2.msra.mxu0 0.0
      %3033 = vmatprep.mubr.f32.mxu0 0.0
      %3034 = vmatmul.mubr.f32.gmra.mxu0 %v495
      %v3035 = vpop.f32.mrf.mxu0
      %v3036 = vadd.f32 0.0, %v3035
      %v3037 = vpop.f32.mrf.mxu0
      %3038 = vmatprep.mubr.f32.mxu0 0.0
      %3039 = vmatmul.mubr.f32.gmra.mxu0 %v497
      %v3040 = vpop.f32.mrf.mxu0
      %v3041 = vadd.f32 0.0, %v3040
      %v3042 = vpop.f32.mrf.mxu0
      %3043 = vmatprep.mubr.f32.mxu0 0.0
      %3044 = vmatmul.mubr.f32.gmra.mxu0 %v499
      %v3045 = vpop.f32.mrf.mxu0
      %v3046 = vadd.f32 0.0, %v3045
      %v3047 = vpop.f32.mrf.mxu0
      %3048 = vmatprep.mubr.f32.mxu0 0.0
      %3049 = vmatmul.mubr.f32.gmra.mxu0 %v501
      %v3050 = vpop.f32.mrf.mxu0
      %v3051 = vadd.f32 0.0, %v3050
      %v3052 = vpop.f32.mrf.mxu0
      %3053 = vmatprep.mubr.f32.mxu0 0.0
      %3054 = vmatmul.mubr.f32.gmra.mxu0 %v503
      %v3055 = vpop.f32.mrf.mxu0
      %v3056 = vadd.f32 0.0, %v3055
      %v3057 = vpop.f32.mrf.mxu0
      %3058 = vmatprep.mubr.f32.mxu0 0.0
      %3059 = vmatmul.mubr.f32.gmra.mxu0 %v505
      %v3060 = vpop.f32.mrf.mxu0
      %v3061 = vadd.f32 0.0, %v3060
      %v3062 = vpop.f32.mrf.mxu0
      %3063 = vmatprep.mubr.f32.mxu0 0.0
      %3064 = vmatmul.mubr.f32.gmra.mxu0 %v507
      %v3065 = vpop.f32.mrf.mxu0
      %v3066 = vadd.f32 0.0, %v3065
      %v3067 = vpop.f32.mrf.mxu0
      %3068 = vmatprep.mubr.f32.mxu0 0.0
      %3069 = vmatmul.mubr.f32.gmra.mxu0 %v509
      %v3070 = vpop.f32.mrf.mxu0
      %v3071 = vadd.f32 0.0, %v3070
      %v3072 = vpop.f32.mrf.mxu0
      %3073 = vmatprep.mubr.f32.mxu0 0.0
      %3074 = vmatmul.mubr.f32.gmra.mxu0 %v511
      %v3075 = vpop.f32.mrf.mxu0
      %v3076 = vadd.f32 0.0, %v3075
      %v3077 = vpop.f32.mrf.mxu0
      %3078 = vmatprep.mubr.f32.mxu0 0.0
      %3079 = vmatmul.mubr.f32.gmra.mxu0 %v513
      %v3080 = vpop.f32.mrf.mxu0
      %v3081 = vadd.f32 0.0, %v3080
      %v3082 = vpop.f32.mrf.mxu0
      %3083 = vmatprep.mubr.f32.mxu0 0.0
      %3084 = vmatmul.mubr.f32.gmra.mxu0 %v515
      %v3085 = vpop.f32.mrf.mxu0
      %v3086 = vadd.f32 0.0, %v3085
      %v3087 = vpop.f32.mrf.mxu0
      %3088 = vmatprep.mubr.f32.mxu0 0.0
      %3089 = vmatmul.mubr.f32.gmra.mxu0 %v517
      %v3090 = vpop.f32.mrf.mxu0
      %v3091 = vadd.f32 0.0, %v3090
      %v3092 = vpop.f32.mrf.mxu0
      %3093 = vmatprep.mubr.f32.mxu0 0.0
      %3094 = vmatmul.mubr.f32.gmra.mxu0 %v1020
      %v3095 = vpop.f32.mrf.mxu0
      %v3096 = vadd.f32 0.0, %v3095
      %v3097 = vpop.f32.mrf.mxu0
      %3098 = vmatprep.mubr.f32.mxu0 0.0
      %3099 = vmatmul.mubr.f32.gmra.mxu0 %v1022
      %v3100 = vpop.f32.mrf.mxu0
      %v3101 = vadd.f32 0.0, %v3100
      %v3102 = vpop.f32.mrf.mxu0
      %3103 = vmatprep.mubr.f32.mxu0 0.0
      %3104 = vmatmul.mubr.f32.gmra.mxu0 %v2463
      %v3105 = vpop.f32.mrf.mxu0
      %v3106 = vadd.f32 0.0, %v3105
      %v3107 = vpop.f32.mrf.mxu0
      %3108 = vmatprep.mubr.f32.mxu0 0.0
      %3109 = vmatmul.mubr.f32.gmra.mxu0 %v2465
      %v3110 = vpop.f32.mrf.mxu0
      %v3111 = vadd.f32 0.0, %v3110
      %v3112 = vpop.f32.mrf.mxu0
      %3113 = vdwg.mxu0
      %v3114 = vadd.f32 %v2886, %v3036
      %v3115 = vadd.f32 %v2891, %v3041
      %v3116 = vadd.f32 %v2896, %v3046
      %v3117 = vadd.f32 %v2901, %v3051
      %v3118 = vadd.f32 %v2906, %v3056
      %v3119 = vadd.f32 %v2911, %v3061
      %v3120 = vadd.f32 %v2916, %v3066
      %v3121 = vadd.f32 %v2921, %v3071
      %v3122 = vadd.f32 %v2926, %v3076
      %v3123 = vadd.f32 %v2931, %v3081
      %v3124 = vadd.f32 %v2936, %v3086
      %v3125 = vadd.f32 %v2941, %v3091
      %v3126 = vadd.f32 %v2946, %v3096
      %v3127 = vadd.f32 %v2951, %v3101
      %v3128 = vadd.f32 %v2956, %v3106
      %v3129 = vadd.f32 %v2961, %v3111
      %s3130 = scalar_lea.vmem %s2, 60
      %v3131 = vld [vmem:[%s3130] sm:$0xf]
      %v3132 = vsel %vm486, %v479, 0
      %v3134 = vsel %vm486, %v481, 0
      %v3137 = vsel %vm519, %v3131, 0
      %3139 = vmatprep.subr.mxu0 0.0
      %3140 = vmatpush1.msra.mxu0 0.0
      %3141 = vmatprep.subr.mxu0 0.0
      %3142 = vmatpush1.msra.mxu0 0.0
      %3143 = vmatprep.subr.mxu0 0.0
      %3144 = vmatpush1.msra.mxu0 0.0
      %3145 = vmatprep.subr.mxu0 0.0
      %3146 = vmatpush1.msra.mxu0 0.0
      %3147 = vmatprep.subr.mxu0 0.0
      %3148 = vmatpush1.msra.mxu0 0.0
      %3149 = vmatprep.subr.mxu0 0.0
      %3150 = vmatpush1.msra.mxu0 0.0
      %3151 = vmatprep.subr.mxu0 0.0
      %3152 = vmatpush1.msra.mxu0 0.0
      %3153 = vmatprep.subr.mxu0 0.0
      %3154 = vmatpush1.msra.mxu0 0.0
      %3155 = vmatprep.subr.mxu0 0.0
      %3156 = vmatpush1.msra.mxu0 0.0
      %3157 = vmatprep.subr.mxu0 0.0
      %3158 = vmatpush1.msra.mxu0 0.0
      %3159 = vmatprep.subr.mxu0 0.0
      %3160 = vmatpush1.msra.mxu0 0.0
      %3161 = vmatprep.subr.mxu0 0.0
      %3162 = vmatpush1.msra.mxu0 0.0
      %3163 = vmatprep.subr.mxu0 0.0
      %3164 = vmatpush1.msra.mxu0 0.0
      %3165 = vmatprep.subr.mxu0 0.0
      %3166 = vmatpush1.msra.mxu0 0.0
      %3167 = vmatprep.subr.mxu0 0.0
      %3168 = vmatpush1.msra.mxu0 0.0
      %3169 = vmatprep.subr.mxu0 0.0
      %3170 = vmatpush1.msra.mxu0 %v3137
      %3171 = vmatprep.subr.mxu0 0.0
      %3172 = vmatpush2.msra.mxu0 0.0
      %3173 = vmatprep.subr.mxu0 0.0
      %3174 = vmatpush2.msra.mxu0 0.0
      %3175 = vmatprep.subr.mxu0 0.0
      %3176 = vmatpush2.msra.mxu0 0.0
      %3177 = vmatprep.subr.mxu0 0.0
      %3178 = vmatpush2.msra.mxu0 0.0
      %3179 = vmatprep.subr.mxu0 0.0
      %3180 = vmatpush2.msra.mxu0 0.0
      %3181 = vmatprep.subr.mxu0 0.0
      %3182 = vmatpush2.msra.mxu0 0.0
      %3183 = vmatprep.subr.mxu0 0.0
      %3184 = vmatpush2.msra.mxu0 0.0
      %3185 = vmatprep.subr.mxu0 0.0
      %3186 = vmatpush2.msra.mxu0 0.0
      %3187 = vmatprep.subr.mxu0 0.0
      %3188 = vmatpush2.msra.mxu0 0.0
      %3189 = vmatprep.subr.mxu0 0.0
      %3190 = vmatpush2.msra.mxu0 0.0
      %3191 = vmatprep.subr.mxu0 0.0
      %3192 = vmatpush2.msra.mxu0 0.0
      %3193 = vmatprep.subr.mxu0 0.0
      %3194 = vmatpush2.msra.mxu0 0.0
      %3195 = vmatprep.subr.mxu0 0.0
      %3196 = vmatpush2.msra.mxu0 0.0
      %3197 = vmatprep.subr.mxu0 0.0
      %3198 = vmatpush2.msra.mxu0 0.0
      %3199 = vmatprep.subr.mxu0 0.0
      %3200 = vmatpush2.msra.mxu0 0.0
      %3201 = vmatprep.subr.mxu0 0.0
      %3202 = vmatpush2.msra.mxu0 0.0
      %3203 = vmatprep.mubr.f32.mxu0 0.0
      %3204 = vmatmul.mubr.f32.gmra.mxu0 %v1238
      %v3205 = vpop.f32.mrf.mxu0
      %v3206 = vadd.f32 0.0, %v3205
      %v3207 = vpop.f32.mrf.mxu0
      %3208 = vmatprep.mubr.f32.mxu0 0.0
      %3209 = vmatmul.mubr.f32.gmra.mxu0 %v1240
      %v3210 = vpop.f32.mrf.mxu0
      %v3211 = vadd.f32 0.0, %v3210
      %v3212 = vpop.f32.mrf.mxu0
      %3213 = vmatprep.mubr.f32.mxu0 0.0
      %3214 = vmatmul.mubr.f32.gmra.mxu0 %v1242
      %v3215 = vpop.f32.mrf.mxu0
      %v3216 = vadd.f32 0.0, %v3215
      %v3217 = vpop.f32.mrf.mxu0
      %3218 = vmatprep.mubr.f32.mxu0 0.0
      %3219 = vmatmul.mubr.f32.gmra.mxu0 %v1244
      %v3220 = vpop.f32.mrf.mxu0
      %v3221 = vadd.f32 0.0, %v3220
      %v3222 = vpop.f32.mrf.mxu0
      %3223 = vmatprep.mubr.f32.mxu0 0.0
      %3224 = vmatmul.mubr.f32.gmra.mxu0 %v1246
      %v3225 = vpop.f32.mrf.mxu0
      %v3226 = vadd.f32 0.0, %v3225
      %v3227 = vpop.f32.mrf.mxu0
      %3228 = vmatprep.mubr.f32.mxu0 0.0
      %3229 = vmatmul.mubr.f32.gmra.mxu0 %v1248
      %v3230 = vpop.f32.mrf.mxu0
      %v3231 = vadd.f32 0.0, %v3230
      %v3232 = vpop.f32.mrf.mxu0
      %3233 = vmatprep.mubr.f32.mxu0 0.0
      %3234 = vmatmul.mubr.f32.gmra.mxu0 %v1250
      %v3235 = vpop.f32.mrf.mxu0
      %v3236 = vadd.f32 0.0, %v3235
      %v3237 = vpop.f32.mrf.mxu0
      %3238 = vmatprep.mubr.f32.mxu0 0.0
      %3239 = vmatmul.mubr.f32.gmra.mxu0 %v1252
      %v3240 = vpop.f32.mrf.mxu0
      %v3241 = vadd.f32 0.0, %v3240
      %v3242 = vpop.f32.mrf.mxu0
      %3243 = vmatprep.mubr.f32.mxu0 0.0
      %3244 = vmatmul.mubr.f32.gmra.mxu0 %v1254
      %v3245 = vpop.f32.mrf.mxu0
      %v3246 = vadd.f32 0.0, %v3245
      %v3247 = vpop.f32.mrf.mxu0
      %3248 = vmatprep.mubr.f32.mxu0 0.0
      %3249 = vmatmul.mubr.f32.gmra.mxu0 %v1256
      %v3250 = vpop.f32.mrf.mxu0
      %v3251 = vadd.f32 0.0, %v3250
      %v3252 = vpop.f32.mrf.mxu0
      %3253 = vmatprep.mubr.f32.mxu0 0.0
      %3254 = vmatmul.mubr.f32.gmra.mxu0 %v1258
      %v3255 = vpop.f32.mrf.mxu0
      %v3256 = vadd.f32 0.0, %v3255
      %v3257 = vpop.f32.mrf.mxu0
      %3258 = vmatprep.mubr.f32.mxu0 0.0
      %3259 = vmatmul.mubr.f32.gmra.mxu0 %v1260
      %v3260 = vpop.f32.mrf.mxu0
      %v3261 = vadd.f32 0.0, %v3260
      %v3262 = vpop.f32.mrf.mxu0
      %3263 = vmatprep.mubr.f32.mxu0 0.0
      %3264 = vmatmul.mubr.f32.gmra.mxu0 %v1726
      %v3265 = vpop.f32.mrf.mxu0
      %v3266 = vadd.f32 0.0, %v3265
      %v3267 = vpop.f32.mrf.mxu0
      %3268 = vmatprep.mubr.f32.mxu0 0.0
      %3269 = vmatmul.mubr.f32.gmra.mxu0 %v1728
      %v3270 = vpop.f32.mrf.mxu0
      %v3271 = vadd.f32 0.0, %v3270
      %v3272 = vpop.f32.mrf.mxu0
      %3273 = vmatprep.mubr.f32.mxu0 0.0
      %3274 = vmatmul.mubr.f32.gmra.mxu0 %v3132
      %v3275 = vpop.f32.mrf.mxu0
      %v3276 = vadd.f32 0.0, %v3275
      %v3277 = vpop.f32.mrf.mxu0
      %3278 = vmatprep.mubr.f32.mxu0 0.0
      %3279 = vmatmul.mubr.f32.gmra.mxu0 %v3134
      %v3280 = vpop.f32.mrf.mxu0
      %v3281 = vadd.f32 0.0, %v3280
      %v3282 = vpop.f32.mrf.mxu0
      %3283 = vdwg.mxu0
      %v3284 = vadd.f32 %v3114, %v3206
      %v3285 = vadd.f32 %v3115, %v3211
      %v3286 = vadd.f32 %v3116, %v3216
      %v3287 = vadd.f32 %v3117, %v3221
      %v3288 = vadd.f32 %v3118, %v3226
      %v3289 = vadd.f32 %v3119, %v3231
      %v3290 = vadd.f32 %v3120, %v3236
      %v3291 = vadd.f32 %v3121, %v3241
      %v3292 = vadd.f32 %v3122, %v3246
      %v3293 = vadd.f32 %v3123, %v3251
      %v3294 = vadd.f32 %v3124, %v3256
      %v3295 = vadd.f32 %v3125, %v3261
      %v3296 = vadd.f32 %v3126, %v3266
      %v3297 = vadd.f32 %v3127, %v3271
      %v3298 = vadd.f32 %v3128, %v3276
      %v3299 = vadd.f32 %v3129, %v3281
      %v3300 = vadd.f32 %v3284, %v1192
      %v3301 = vadd.f32 %v3285, %v1192
      %v3302 = vadd.f32 %v3286, %v1192
      %v3303 = vadd.f32 %v3287, %v1192
      %v3304 = vadd.f32 %v3288, %v1192
      %v3305 = vadd.f32 %v3289, %v1192
      %v3306 = vadd.f32 %v3290, %v1192
      %v3307 = vadd.f32 %v3291, %v1192
      %v3308 = vadd.f32 %v3292, %v1192
      %v3309 = vadd.f32 %v3293, %v1192
      %v3310 = vadd.f32 %v3294, %v1192
      %v3311 = vadd.f32 %v3295, %v1192
      %v3312 = vadd.f32 %v3296, %v1192
      %v3313 = vadd.f32 %v3297, %v1192
      %v3314 = vadd.f32 %v3298, %v1192
      %v3315 = vadd.f32 %v3299, %v1192
      %3332 = vrot.lane.b32.xlu0 %v3300, 4
      %v3333 = vpop.permute.xlu0 %3332
      %3334 = vrot.lane.b32.xlu0 %v3301, 4
      %v3335 = vpop.permute.xlu0 %3334
      %3336 = vrot.lane.b32.xlu0 %v3302, 4
      %v3337 = vpop.permute.xlu0 %3336
      %3338 = vrot.lane.b32.xlu0 %v3303, 4
      %v3339 = vpop.permute.xlu0 %3338
      %3340 = vrot.lane.b32.xlu0 %v3304, 4
      %v3341 = vpop.permute.xlu0 %3340
      %3342 = vrot.lane.b32.xlu0 %v3305, 4
      %v3343 = vpop.permute.xlu0 %3342
      %3344 = vrot.lane.b32.xlu0 %v3306, 4
      %v3345 = vpop.permute.xlu0 %3344
      %3346 = vrot.lane.b32.xlu0 %v3307, 4
      %v3347 = vpop.permute.xlu0 %3346
      %3348 = vrot.lane.b32.xlu0 %v3308, 4
      %v3349 = vpop.permute.xlu0 %3348
      %3350 = vrot.lane.b32.xlu0 %v3309, 4
      %v3351 = vpop.permute.xlu0 %3350
      %3352 = vrot.lane.b32.xlu0 %v3310, 4
      %v3353 = vpop.permute.xlu0 %3352
      %3354 = vrot.lane.b32.xlu0 %v3311, 4
      %v3355 = vpop.permute.xlu0 %3354
      %3356 = vrot.lane.b32.xlu0 %v3312, 4
      %v3357 = vpop.permute.xlu0 %3356
      %3358 = vrot.lane.b32.xlu0 %v3313, 4
      %v3359 = vpop.permute.xlu0 %3358
      %3360 = vrot.lane.b32.xlu0 %v3314, 4
      %v3361 = vpop.permute.xlu0 %3360
      %3362 = vrot.lane.b32.xlu0 %v3315, 4
      %v3363 = vpop.permute.xlu0 %3362
      %3380 = vst.msk [vmem:[%s2647] sm:$0xff] %vm1974, %v3333
      %3381 = vst.msk [vmem:[%s2647 + $0x8] sm:$0xff] %vm1974, %v3335
      %3382 = vst.msk [vmem:[%s2647 + $0x20] sm:$0xff] %vm1974, %v3337
      %3383 = vst.msk [vmem:[%s2647 + $0x28] sm:$0xff] %vm1974, %v3339
      %3384 = vst.msk [vmem:[%s2647 + $0x40] sm:$0xff] %vm1974, %v3341
      %3385 = vst.msk [vmem:[%s2647 + $0x48] sm:$0xff] %vm1974, %v3343
      %3386 = vst.msk [vmem:[%s2647 + $0x60] sm:$0xff] %vm1974, %v3345
      %3387 = vst.msk [vmem:[%s2647 + $0x68] sm:$0xff] %vm1974, %v3347
      %3388 = vst.msk [vmem:[%s2647 + $0x80] sm:$0xff] %vm1974, %v3349
      %3389 = vst.msk [vmem:[%s2647 + $0x88] sm:$0xff] %vm1974, %v3351
      %3390 = vst.msk [vmem:[%s2647 + $0xa0] sm:$0xff] %vm1974, %v3353
      %3391 = vst.msk [vmem:[%s2647 + $0xa8] sm:$0xff] %vm1974, %v3355
      %3392 = vst.msk [vmem:[%s2647 + $0xc0] sm:$0xff] %vm1974, %v3357
      %3393 = vst.msk [vmem:[%s2647 + $0xc8] sm:$0xff] %vm1974, %v3359
      %3394 = vst.msk [vmem:[%s2647 + $0xe0] sm:$0xff] %vm1974, %v3361
      %3395 = vst.msk [vmem:[%s2647 + $0xe8] sm:$0xff] %vm1974, %v3363
      %s3396 = smul.u32 8, %s20
      %p3397 = scmp.lt.s32.totalorder %s19, 1
      %s3398 = scalar_select %p3397, %s19, 1
      %p3399 = scmp.lt.s32.totalorder %s3396, 15
      %s3400 = scalar_select %p3399, %s3396, 15
      %s3401 = smul.addr %s3400, 4
      %s3402 = smul.addr %s3398, 64
      %s3403 = sadd.s32 %s3401, %s3402
      %s3404 = smul.addr %s3403, 8
      %s3405 = scalar_lea.vmem %s4, %s3404
      // Predicated region
      $region37: #{upsample_forward.1} parent=35 // pred_check
        %p3406 = pneg %p149
      $region38: #{upsample_forward.1} parent=35 // pred_check_branch
        %3408 = sbr.rel (%p3406) target = $region40
      $region39: #{upsample_forward.1} parent=35 // pred_region
        %s3409 = smul.u32 8, %s20
      $region40: #{upsample_forward.1} parent=35 // pred_fallthru
        _
    $region36: #{upsample_forward.1} parent=5 // pred_fallthru
      _
    %p3410 = scmp.le.s32.totalorder 2, %s10
    // Predicated region
    $region41: #{upsample_forward.1} parent=5 // pred_check
      %p3411 = pneg %p3410
    $region42: #{upsample_forward.1} parent=5 // pred_check_branch
      %3413 = sbr.rel (%p3411) target = $region44
    $region43: #{upsample_forward.1} parent=5 // pred_region
      %s3414 = ssub.s32 %s10, 2
      // Predicated region
      $region45: #{upsample_forward.1} parent=43 // pred_check
        %p3415 = pneg %p155
      $region46: #{upsample_forward.1} parent=43 // pred_check_branch
        %3417 = sbr.rel (%p3415) target = $region48
      $region47: #{upsample_forward.1} parent=43 // pred_region
        %s3418 = smul.u32 8, %s22
        %p3419 = scmp.lt.s32.totalorder %s21, 1
        %s3420 = scalar_select %p3419, %s21, 1
        %p3421 = scmp.lt.s32.totalorder %s3418, 15
        %s3422 = scalar_select %p3421, %s3418, 15
        %s3423 = smul.addr %s3422, 4
        %s3424 = smul.addr %s3420, 64
        %s3425 = sadd.s32 %s3423, %s3424
        %s3426 = smul.addr %s3425, 8
        %s3427 = scalar_lea.vmem %s4, %s3426
      $region48: #{upsample_forward.1} parent=43 // pred_fallthru
        _
    $region44: #{upsample_forward.1} parent=5 // pred_fallthru
      _
  $region6: #{upsample_forward.1} parent=0 // loop_footer
    %s14 = sadd.s32 1, %s10
  $region7: #{upsample_forward.1} parent=0 // loop_footer_branch
    %9 = sbr.rel target = $region3
  $region8: #{upsample_forward.1} parent=0 // loop_exit
    _

</llo_original>
